<compile_context>
chip_gen: v6e
topology: v6e:2x2x1
jax: 0.10.0
libtpu: 0.0.40
codegen_flags: <defaults>
</compile_context>

<pallas_src>
import math

import jax
import jax.numpy as jnp
from jax.experimental import pallas as pl
from jax.experimental.pallas import tpu as pltpu  # noqa: F401  (TPU backend assumed)

HIDDEN_SIZE = 32
FF_SIZE = 64
MULTI_HEAD = 4
HEAD_DIM = HIDDEN_SIZE // MULTI_HEAD
EPS = 1e-6  # openvqa LayerNorm eps

# Set to jnp.bfloat16 on v6e/v7x to cut MXU passes (~3x fewer vmatmul pushes, half the
# vreg footprint).  Default f32 keeps the output (incl. the returned attention map)
# numerically faithful to the torch reference.
MATMUL_DTYPE = jnp.float32


def _mm(a):
    """Cast a matmul operand to the MXU input dtype (no-op for f32 default)."""
    return a.astype(MATMUL_DTYPE)


# ---------------------------------------------------------------------------
# Fused SGA kernel (single program, everything VMEM-resident)
# ---------------------------------------------------------------------------
def _sga_kernel(
    x_ref, y_ref, xm_ref, ym_ref,
    wqkv1_ref, bqkv1_ref, wm1_ref, bm1_ref,
    wq2_ref, bq2_ref, wkv2_ref, bkv2_ref, wm2_ref, bm2_ref,
    ffw1_ref, ffb1_ref, ffw2_ref, ffb2_ref,
    g1_ref, b1_ref, g2_ref, b2_ref, g3_ref, b3_ref,
    out_ref, att_ref,
):
    H, nH, dh = HIDDEN_SIZE, MULTI_HEAD, HEAD_DIM
    B, Sx = xm_ref.shape
    Sy = ym_ref.shape[1]
    scale = 1.0 / math.sqrt(dh)

    x2d = x_ref[...]            # (B*Sx, H)
    y2d = y_ref[...]            # (B*Sy, H)

    def layer_norm(v, g, b):
        # torch-style: a_2 * (v - mean) / (unbiased_std + eps) + b_2
        mean = jnp.mean(v, axis=-1, keepdims=True)
        d = v - mean
        var = jnp.sum(d * d, axis=-1, keepdims=True) * (1.0 / (v.shape[-1] - 1))
        inv = pl.reciprocal(jnp.sqrt(var) + EPS, approx=True)   # EUP slot -> ~free
        return g * d * inv + b

    def mh_att(q3, k3, v3, mask, Sq, Sk, wm, bm, *, exact_softmax, return_map):
        # q3: (B, Sq, H); k3/v3: (B, Sk, H); mask: (B, Sk) with 1.0 == masked.
        # Mask bias hoisted ONCE per attention (JAX does not CSE broadcast/select).
        bias = jnp.where(mask > 0.0, jnp.float32(-1e9), jnp.float32(0.0))
        bias = jnp.broadcast_to(bias[:, None, :], (B, Sq, Sk))
        oh_parts, p_parts = [], []
        for h in range(nH):                                   # nH=4, statically unrolled
            sl = slice(h * dh, (h + 1) * dh)
            qh, kh, vh = q3[:, :, sl], k3[:, :, sl], v3[:, :, sl]
            # scores batched over B (no materialized transpose)
            s = jnp.einsum("bqd,bkd->bqk", _mm(qh), _mm(kh),
                           preferred_element_type=jnp.float32) * scale + bias
            s = s - jnp.max(s, axis=-1, keepdims=True)        # stable softmax
            e = jnp.exp(s)
            denom = jnp.sum(e, axis=-1, keepdims=True)
            if exact_softmax:
                p = e / denom                                 # map is returned -> exact
            else:
                p = e * pl.reciprocal(denom, approx=True)     # map discarded -> EUP
            if return_map:
                p_parts.append(p)
            oh_parts.append(jnp.einsum("bqk,bkd->bqd", _mm(p), _mm(vh),
                                       preferred_element_type=jnp.float32))
        # Assemble heads along the lane axis, then ONE merge matmul (+ bias).
        atted = jnp.concatenate(oh_parts, axis=-1).reshape(B * Sq, H)
        merged = jnp.dot(_mm(atted), _mm(wm),
                         preferred_element_type=jnp.float32) + bm        # (B*Sq, H)
        p_cat = jnp.concatenate(p_parts, axis=-1) if return_map else None  # (B,Sq,nH*Sk)
        return merged, p_cat

    # ---- mhatt1: self attention over x (fused QKV projection) ----
    qkv1 = jnp.dot(_mm(x2d), _mm(wqkv1_ref[...]),
                   preferred_element_type=jnp.float32) + bqkv1_ref[...]   # (B*Sx, 3H)
    q1 = qkv1[:, 0:H].reshape(B, Sx, H)
    k1 = qkv1[:, H:2 * H].reshape(B, Sx, H)
    v1 = qkv1[:, 2 * H:3 * H].reshape(B, Sx, H)
    a1, p_self = mh_att(q1, k1, v1, xm_ref[...], Sx, Sx, wm1_ref[...], bm1_ref[...],
                        exact_softmax=True, return_map=True)
    att_ref[...] = p_self                                     # one lane-dense store
    x1 = layer_norm(x2d + a1, g1_ref[...], b1_ref[...])

    # ---- mhatt2: guided attention (q from x1, k/v from y); its map is discarded ----
    q2 = (jnp.dot(_mm(x1), _mm(wq2_ref[...]),
                  preferred_element_type=jnp.float32) + bq2_ref[...]).reshape(B, Sx, H)
    kv2 = jnp.dot(_mm(y2d), _mm(wkv2_ref[...]),
                  preferred_element_type=jnp.float32) + bkv2_ref[...]     # (B*Sy, 2H)
    k2 = kv2[:, 0:H].reshape(B, Sy, H)
    v2 = kv2[:, H:2 * H].reshape(B, Sy, H)
    a2, _ = mh_att(q2, k2, v2, ym_ref[...], Sx, Sy, wm2_ref[...], bm2_ref[...],
                   exact_softmax=False, return_map=False)
    x2v = layer_norm(x1 + a2, g2_ref[...], b2_ref[...])

    # ---- FFN (relu MLP, dropout = identity) + final add/LayerNorm ----
    h1 = jnp.maximum(jnp.dot(_mm(x2v), _mm(ffw1_ref[...]),
                             preferred_element_type=jnp.float32) + ffb1_ref[...], 0.0)
    ff = jnp.dot(_mm(h1), _mm(ffw2_ref[...]),
                 preferred_element_type=jnp.float32) + ffb2_ref[...]
    out_ref[...] = layer_norm(x2v + ff, g3_ref[...], b3_ref[...])


# ---------------------------------------------------------------------------
# Wrapper
# ---------------------------------------------------------------------------
def fuse_params(params):
    """One-time weight fusion (QKV / KV concat) OUTSIDE the jitted forward."""
    m1, m2 = params["mhatt1"], params["mhatt2"]
    H = HIDDEN_SIZE
    fp = dict(
        w_qkv1=jnp.concatenate([m1["wq"], m1["wk"], m1["wv"]], axis=1),      # (H, 3H)
        b_qkv1=jnp.concatenate([m1["bq"], m1["bk"], m1["bv"]]).reshape(1, 3 * H),
        wm1=m1["wm"], bm1=m1["bm"].reshape(1, H),
        wq2=m2["wq"], bq2=m2["bq"].reshape(1, H),
        w_kv2=jnp.concatenate([m2["wk"], m2["wv"]], axis=1),                 # (H, 2H)
        b_kv2=jnp.concatenate([m2["bk"], m2["bv"]]).reshape(1, 2 * H),
        wm2=m2["wm"], bm2=m2["bm"].reshape(1, H),
        ffw1=params["ffn_w1"], ffb1=params["ffn_b1"].reshape(1, FF_SIZE),
        ffw2=params["ffn_w2"], ffb2=params["ffn_b2"].reshape(1, H),
        g1=params["norm1_g"].reshape(1, H), b1=params["norm1_b"].reshape(1, H),
        g2=params["norm2_g"].reshape(1, H), b2=params["norm2_b"].reshape(1, H),
        g3=params["norm3_g"].reshape(1, H), b3=params["norm3_b"].reshape(1, H),
    )
    return {k: jnp.asarray(v) for k, v in fp.items()}


@jax.jit
def sga_forward(fp, x, y, x_mask, y_mask):
    """SGA.forward: returns (x_out, self_attention_map)."""
    B, Sx, H = x.shape
    Sy = y.shape[1]

    # TODO(synk): at production openvqa sizes (H=512, S~100, large B) switch to a
    # (B,)-parallel grid (2 TCs on v7x) and lane-fill the softmax (Sk) axis.
    out2d, att_flat = pl.pallas_call(
        _sga_kernel,
        out_shape=(jax.ShapeDtypeStruct((B * Sx, H), jnp.float32),
                   jax.ShapeDtypeStruct((B, Sx, MULTI_HEAD * Sx), jnp.float32)),
    )(
        x.reshape(B * Sx, H), y.reshape(B * Sy, H),
        x_mask.reshape(B, Sx), y_mask.reshape(B, Sy),
        fp["w_qkv1"], fp["b_qkv1"], fp["wm1"], fp["bm1"],
        fp["wq2"], fp["bq2"], fp["w_kv2"], fp["b_kv2"], fp["wm2"], fp["bm2"],
        fp["ffw1"], fp["ffb1"], fp["ffw2"], fp["ffb2"],
        fp["g1"], fp["b1"], fp["g2"], fp["b2"], fp["g3"], fp["b3"],
    )
    # Kernel stores the map as (B, Sq, nH*Sk); reshape/transpose to torch layout here.
    self_att = att_flat.reshape(B, Sx, MULTI_HEAD, Sx).transpose(0, 2, 1, 3)
    return out2d.reshape(B, Sx, H), self_att


# ---------------------------------------------------------------------------
# Deterministic synthetic parameters (nn.Linear stored as (in, out): y = x @ W + b)
# ---------------------------------------------------------------------------
def init_params(key):
    def lin(k, din, dout):
        kw, kb = jax.random.split(k)
        w = jax.random.normal(kw, (din, dout), jnp.float32) * 0.05
        b = jax.random.normal(kb, (dout,), jnp.float32) * 0.05
        return w, b

    keys = jax.random.split(key, 10)

    def mh_params(k):
        ks = jax.random.split(k, 4)
        wv, bv = lin(ks[0], HIDDEN_SIZE, HIDDEN_SIZE)
        wk, bk = lin(ks[1], HIDDEN_SIZE, HIDDEN_SIZE)
        wq, bq = lin(ks[2], HIDDEN_SIZE, HIDDEN_SIZE)
        wm, bm = lin(ks[3], HIDDEN_SIZE, HIDDEN_SIZE)
        return dict(wv=wv, bv=bv, wk=wk, bk=bk, wq=wq, bq=bq, wm=wm, bm=bm)

    w1, b1 = lin(keys[2], HIDDEN_SIZE, FF_SIZE)
    w2, b2 = lin(keys[3], FF_SIZE, HIDDEN_SIZE)
    ones = jnp.ones((HIDDEN_SIZE,), jnp.float32)
    zeros = jnp.zeros((HIDDEN_SIZE,), jnp.float32)
    return dict(
        mhatt1=mh_params(keys[0]),
        mhatt2=mh_params(keys[1]),
        ffn_w1=w1, ffn_b1=b1, ffn_w2=w2, ffn_b2=b2,
        norm1_g=ones, norm1_b=zeros,
        norm2_g=ones, norm2_b=zeros,
        norm3_g=ones, norm3_b=zeros,
    )


if __name__ == "__main__":
    key = jax.random.PRNGKey(0)
    kx, ky, kp = jax.random.split(key, 3)

    B, Sx, Sy = 2, 8, 16
    x = jax.random.normal(kx, (B, Sx, HIDDEN_SIZE), jnp.float32)
    y = jax.random.normal(ky, (B, Sy, HIDDEN_SIZE), jnp.float32)
    # Boolean padding masks (True = masked) represented as float32 {0,1}; last two
    # positions of each sequence are padding.
    x_mask = jnp.zeros((B, 1, 1, Sx), jnp.float32).at[:, :, :, -2:].set(1.0)
    y_mask = jnp.zeros((B, 1, 1, Sy), jnp.float32).at[:, :, :, -2:].set(1.0)

    params = init_params(kp)
    fused = fuse_params(params)          # one-time weight fusion, outside the jit
    jax.block_until_ready(fused)

    out, self_att = sga_forward(fused, x, y, x_mask, y_mask)
    jax.block_until_ready((out, self_att))
    assert out.shape == (B, Sx, HIDDEN_SIZE)
    assert self_att.shape == (B, MULTI_HEAD, Sx, Sx)
    print("KERNEL_OK")
</pallas_src>

<mosaic_0001>
module attributes {stable_mosaic.version = 11 : i64} {
  func.func @_sga_kernel(%arg0: memref<16x32xf32, #tpu.memory_space<vmem>>, %arg1: memref<32x32xf32, #tpu.memory_space<vmem>>, %arg2: memref<2x8xf32, #tpu.memory_space<vmem>>, %arg3: memref<2x16xf32, #tpu.memory_space<vmem>>, %arg4: memref<32x96xf32, #tpu.memory_space<vmem>>, %arg5: memref<1x96xf32, #tpu.memory_space<vmem>>, %arg6: memref<32x32xf32, #tpu.memory_space<vmem>>, %arg7: memref<1x32xf32, #tpu.memory_space<vmem>>, %arg8: memref<32x32xf32, #tpu.memory_space<vmem>>, %arg9: memref<1x32xf32, #tpu.memory_space<vmem>>, %arg10: memref<32x64xf32, #tpu.memory_space<vmem>>, %arg11: memref<1x64xf32, #tpu.memory_space<vmem>>, %arg12: memref<32x32xf32, #tpu.memory_space<vmem>>, %arg13: memref<1x32xf32, #tpu.memory_space<vmem>>, %arg14: memref<32x64xf32, #tpu.memory_space<vmem>>, %arg15: memref<1x64xf32, #tpu.memory_space<vmem>>, %arg16: memref<64x32xf32, #tpu.memory_space<vmem>>, %arg17: memref<1x32xf32, #tpu.memory_space<vmem>>, %arg18: memref<1x32xf32, #tpu.memory_space<vmem>>, %arg19: memref<1x32xf32, #tpu.memory_space<vmem>>, %arg20: memref<1x32xf32, #tpu.memory_space<vmem>>, %arg21: memref<1x32xf32, #tpu.memory_space<vmem>>, %arg22: memref<1x32xf32, #tpu.memory_space<vmem>>, %arg23: memref<1x32xf32, #tpu.memory_space<vmem>>, %arg24: memref<16x32xf32, #tpu.memory_space<vmem>>, %arg25: memref<2x8x32xf32, #tpu.memory_space<vmem>>) attributes {dimension_semantics = [], scalar_prefetch = 0 : i64, scratch_operands = 0 : i64, tpu.core_type = #tpu.core_type<tc>} {
    %c0 = arith.constant 0 : index
    %c0_0 = arith.constant 0 : index
    %0 = vector.load %arg0[%c0, %c0_0] : memref<16x32xf32, #tpu.memory_space<vmem>>, vector<16x32xf32>
    %c0_1 = arith.constant 0 : index
    %c0_2 = arith.constant 0 : index
    %1 = vector.load %arg1[%c0_1, %c0_2] : memref<32x32xf32, #tpu.memory_space<vmem>>, vector<32x32xf32>
    %c0_3 = arith.constant 0 : index
    %c0_4 = arith.constant 0 : index
    %2 = vector.load %arg4[%c0_3, %c0_4] : memref<32x96xf32, #tpu.memory_space<vmem>>, vector<32x96xf32>
    %cst = arith.constant dense<0.000000e+00> : vector<16x96xf32>
    %3 = tpu.matmul %0, %2, %cst {dimension_numbers = #tpu.dot_dimension_numbers<[1], [0], [0], [1], [0, 0, 1, 1], [], []>} : vector<16x32xf32>, vector<32x96xf32>, vector<16x96xf32> -> vector<16x96xf32>
    %c0_5 = arith.constant 0 : index
    %c0_6 = arith.constant 0 : index
    %4 = vector.load %arg5[%c0_5, %c0_6] : memref<1x96xf32, #tpu.memory_space<vmem>>, vector<1x96xf32>
    %5 = vector.broadcast %4 : vector<1x96xf32> to vector<16x96xf32>
    %6 = arith.addf %3, %5 : vector<16x96xf32>
    %7 = vector.extract_strided_slice %6 {offsets = [0, 0], sizes = [16, 32], strides = [1, 1]} : vector<16x96xf32> to vector<16x32xf32>
    %8 = vector.shape_cast %7 : vector<16x32xf32> to vector<2x8x32xf32>
    %9 = vector.extract_strided_slice %6 {offsets = [0, 32], sizes = [16, 32], strides = [1, 1]} : vector<16x96xf32> to vector<16x32xf32>
    %10 = vector.shape_cast %9 : vector<16x32xf32> to vector<2x8x32xf32>
    %11 = vector.extract_strided_slice %6 {offsets = [0, 64], sizes = [16, 32], strides = [1, 1]} : vector<16x96xf32> to vector<16x32xf32>
    %12 = vector.shape_cast %11 : vector<16x32xf32> to vector<2x8x32xf32>
    %c0_7 = arith.constant 0 : index
    %c0_8 = arith.constant 0 : index
    %13 = vector.load %arg2[%c0_7, %c0_8] : memref<2x8xf32, #tpu.memory_space<vmem>>, vector<2x8xf32>
    %c0_9 = arith.constant 0 : index
    %c0_10 = arith.constant 0 : index
    %14 = vector.load %arg6[%c0_9, %c0_10] : memref<32x32xf32, #tpu.memory_space<vmem>>, vector<32x32xf32>
    %c0_11 = arith.constant 0 : index
    %c0_12 = arith.constant 0 : index
    %15 = vector.load %arg7[%c0_11, %c0_12] : memref<1x32xf32, #tpu.memory_space<vmem>>, vector<1x32xf32>
    %cst_13 = arith.constant 0.000000e+00 : f32
    %16 = vector.broadcast %cst_13 : f32 to vector<2x8xf32>
    %17 = arith.cmpf ogt, %13, %16 : vector<2x8xf32>
    %cst_14 = arith.constant -1.000000e+09 : f32
    %cst_15 = arith.constant 0.000000e+00 : f32
    %18 = vector.broadcast %cst_14 : f32 to vector<2x8xf32>
    %19 = vector.broadcast %cst_15 : f32 to vector<2x8xf32>
    %20 = arith.select %17, %18, %19 : vector<2x8xi1>, vector<2x8xf32>
    %21 = vector.shape_cast %20 : vector<2x8xf32> to vector<2x1x8xf32>
    %22 = vector.shape_cast %21 : vector<2x1x8xf32> to vector<2x1x8xf32>
    %23 = vector.broadcast %22 : vector<2x1x8xf32> to vector<2x8x8xf32>
    %24 = vector.extract_strided_slice %8 {offsets = [0, 0, 0], sizes = [2, 8, 8], strides = [1, 1, 1]} : vector<2x8x32xf32> to vector<2x8x8xf32>
    %25 = vector.extract_strided_slice %10 {offsets = [0, 0, 0], sizes = [2, 8, 8], strides = [1, 1, 1]} : vector<2x8x32xf32> to vector<2x8x8xf32>
    %26 = vector.extract_strided_slice %12 {offsets = [0, 0, 0], sizes = [2, 8, 8], strides = [1, 1, 1]} : vector<2x8x32xf32> to vector<2x8x8xf32>
    "tpu.trace_start"() <{level = 10 : i32, message = "bqd,bkd->bqk"}> : () -> ()
    %cst_16 = arith.constant dense<0.000000e+00> : vector<2x8x8xf32>
    %27 = tpu.matmul %24, %25, %cst_16 {dimension_numbers = #tpu.dot_dimension_numbers<[2], [2], [1], [1], [0, 0, 0, 1, 1, 1], [0], [0]>} : vector<2x8x8xf32>, vector<2x8x8xf32>, vector<2x8x8xf32> -> vector<2x8x8xf32>
    "tpu.trace_stop"() : () -> ()
    %cst_17 = arith.constant 0.353553385 : f32
    %28 = vector.broadcast %cst_17 : f32 to vector<2x8x8xf32>
    %29 = arith.mulf %27, %28 : vector<2x8x8xf32>
    %30 = arith.addf %29, %23 : vector<2x8x8xf32>
    %cst_18 = arith.constant dense<0xFF800000> : vector<2x8xf32>
    %31 = vector.multi_reduction <maximumf>, %30, %cst_18 [2] : vector<2x8x8xf32> to vector<2x8xf32>
    %32 = vector.shape_cast %31 : vector<2x8xf32> to vector<2x8x1xf32>
    %33 = vector.broadcast %32 : vector<2x8x1xf32> to vector<2x8x8xf32>
    %34 = arith.subf %30, %33 : vector<2x8x8xf32>
    %35 = math.exp %34 : vector<2x8x8xf32>
    %cst_19 = arith.constant dense<0.000000e+00> : vector<2x8xf32>
    %36 = vector.multi_reduction <add>, %35, %cst_19 [2] : vector<2x8x8xf32> to vector<2x8xf32>
    %37 = vector.shape_cast %36 : vector<2x8xf32> to vector<2x8x1xf32>
    %38 = vector.broadcast %37 : vector<2x8x1xf32> to vector<2x8x8xf32>
    %39 = arith.divf %35, %38 : vector<2x8x8xf32>
    "tpu.trace_start"() <{level = 10 : i32, message = "bqk,bkd->bqd"}> : () -> ()
    %cst_20 = arith.constant dense<0.000000e+00> : vector<2x8x8xf32>
    %40 = tpu.matmul %39, %26, %cst_20 {dimension_numbers = #tpu.dot_dimension_numbers<[2], [1], [1], [2], [0, 0, 0, 1, 1, 2], [0], [0]>} : vector<2x8x8xf32>, vector<2x8x8xf32>, vector<2x8x8xf32> -> vector<2x8x8xf32>
    "tpu.trace_stop"() : () -> ()
    %41 = vector.extract_strided_slice %8 {offsets = [0, 0, 8], sizes = [2, 8, 8], strides = [1, 1, 1]} : vector<2x8x32xf32> to vector<2x8x8xf32>
    %42 = vector.extract_strided_slice %10 {offsets = [0, 0, 8], sizes = [2, 8, 8], strides = [1, 1, 1]} : vector<2x8x32xf32> to vector<2x8x8xf32>
    %43 = vector.extract_strided_slice %12 {offsets = [0, 0, 8], sizes = [2, 8, 8], strides = [1, 1, 1]} : vector<2x8x32xf32> to vector<2x8x8xf32>
    "tpu.trace_start"() <{level = 10 : i32, message = "bqd,bkd->bqk"}> : () -> ()
    %cst_21 = arith.constant dense<0.000000e+00> : vector<2x8x8xf32>
    %44 = tpu.matmul %41, %42, %cst_21 {dimension_numbers = #tpu.dot_dimension_numbers<[2], [2], [1], [1], [0, 0, 0, 1, 1, 1], [0], [0]>} : vector<2x8x8xf32>, vector<2x8x8xf32>, vector<2x8x8xf32> -> vector<2x8x8xf32>
    "tpu.trace_stop"() : () -> ()
    %cst_22 = arith.constant 0.353553385 : f32
    %45 = vector.broadcast %cst_22 : f32 to vector<2x8x8xf32>
    %46 = arith.mulf %44, %45 : vector<2x8x8xf32>
    %47 = arith.addf %46, %23 : vector<2x8x8xf32>
    %cst_23 = arith.constant dense<0xFF800000> : vector<2x8xf32>
    %48 = vector.multi_reduction <maximumf>, %47, %cst_23 [2] : vector<2x8x8xf32> to vector<2x8xf32>
    %49 = vector.shape_cast %48 : vector<2x8xf32> to vector<2x8x1xf32>
    %50 = vector.broadcast %49 : vector<2x8x1xf32> to vector<2x8x8xf32>
    %51 = arith.subf %47, %50 : vector<2x8x8xf32>
    %52 = math.exp %51 : vector<2x8x8xf32>
    %cst_24 = arith.constant dense<0.000000e+00> : vector<2x8xf32>
    %53 = vector.multi_reduction <add>, %52, %cst_24 [2] : vector<2x8x8xf32> to vector<2x8xf32>
    %54 = vector.shape_cast %53 : vector<2x8xf32> to vector<2x8x1xf32>
    %55 = vector.broadcast %54 : vector<2x8x1xf32> to vector<2x8x8xf32>
    %56 = arith.divf %52, %55 : vector<2x8x8xf32>
    "tpu.trace_start"() <{level = 10 : i32, message = "bqk,bkd->bqd"}> : () -> ()
    %cst_25 = arith.constant dense<0.000000e+00> : vector<2x8x8xf32>
    %57 = tpu.matmul %56, %43, %cst_25 {dimension_numbers = #tpu.dot_dimension_numbers<[2], [1], [1], [2], [0, 0, 0, 1, 1, 2], [0], [0]>} : vector<2x8x8xf32>, vector<2x8x8xf32>, vector<2x8x8xf32> -> vector<2x8x8xf32>
    "tpu.trace_stop"() : () -> ()
    %58 = vector.extract_strided_slice %8 {offsets = [0, 0, 16], sizes = [2, 8, 8], strides = [1, 1, 1]} : vector<2x8x32xf32> to vector<2x8x8xf32>
    %59 = vector.extract_strided_slice %10 {offsets = [0, 0, 16], sizes = [2, 8, 8], strides = [1, 1, 1]} : vector<2x8x32xf32> to vector<2x8x8xf32>
    %60 = vector.extract_strided_slice %12 {offsets = [0, 0, 16], sizes = [2, 8, 8], strides = [1, 1, 1]} : vector<2x8x32xf32> to vector<2x8x8xf32>
    "tpu.trace_start"() <{level = 10 : i32, message = "bqd,bkd->bqk"}> : () -> ()
    %cst_26 = arith.constant dense<0.000000e+00> : vector<2x8x8xf32>
    %61 = tpu.matmul %58, %59, %cst_26 {dimension_numbers = #tpu.dot_dimension_numbers<[2], [2], [1], [1], [0, 0, 0, 1, 1, 1], [0], [0]>} : vector<2x8x8xf32>, vector<2x8x8xf32>, vector<2x8x8xf32> -> vector<2x8x8xf32>
    "tpu.trace_stop"() : () -> ()
    %cst_27 = arith.constant 0.353553385 : f32
    %62 = vector.broadcast %cst_27 : f32 to vector<2x8x8xf32>
    %63 = arith.mulf %61, %62 : vector<2x8x8xf32>
    %64 = arith.addf %63, %23 : vector<2x8x8xf32>
    %cst_28 = arith.constant dense<0xFF800000> : vector<2x8xf32>
    %65 = vector.multi_reduction <maximumf>, %64, %cst_28 [2] : vector<2x8x8xf32> to vector<2x8xf32>
    %66 = vector.shape_cast %65 : vector<2x8xf32> to vector<2x8x1xf32>
    %67 = vector.broadcast %66 : vector<2x8x1xf32> to vector<2x8x8xf32>
    %68 = arith.subf %64, %67 : vector<2x8x8xf32>
    %69 = math.exp %68 : vector<2x8x8xf32>
    %cst_29 = arith.constant dense<0.000000e+00> : vector<2x8xf32>
    %70 = vector.multi_reduction <add>, %69, %cst_29 [2] : vector<2x8x8xf32> to vector<2x8xf32>
    %71 = vector.shape_cast %70 : vector<2x8xf32> to vector<2x8x1xf32>
    %72 = vector.broadcast %71 : vector<2x8x1xf32> to vector<2x8x8xf32>
    %73 = arith.divf %69, %72 : vector<2x8x8xf32>
    "tpu.trace_start"() <{level = 10 : i32, message = "bqk,bkd->bqd"}> : () -> ()
    %cst_30 = arith.constant dense<0.000000e+00> : vector<2x8x8xf32>
    %74 = tpu.matmul %73, %60, %cst_30 {dimension_numbers = #tpu.dot_dimension_numbers<[2], [1], [1], [2], [0, 0, 0, 1, 1, 2], [0], [0]>} : vector<2x8x8xf32>, vector<2x8x8xf32>, vector<2x8x8xf32> -> vector<2x8x8xf32>
    "tpu.trace_stop"() : () -> ()
    %75 = vector.extract_strided_slice %8 {offsets = [0, 0, 24], sizes = [2, 8, 8], strides = [1, 1, 1]} : vector<2x8x32xf32> to vector<2x8x8xf32>
    %76 = vector.extract_strided_slice %10 {offsets = [0, 0, 24], sizes = [2, 8, 8], strides = [1, 1, 1]} : vector<2x8x32xf32> to vector<2x8x8xf32>
    %77 = vector.extract_strided_slice %12 {offsets = [0, 0, 24], sizes = [2, 8, 8], strides = [1, 1, 1]} : vector<2x8x32xf32> to vector<2x8x8xf32>
    "tpu.trace_start"() <{level = 10 : i32, message = "bqd,bkd->bqk"}> : () -> ()
    %cst_31 = arith.constant dense<0.000000e+00> : vector<2x8x8xf32>
    %78 = tpu.matmul %75, %76, %cst_31 {dimension_numbers = #tpu.dot_dimension_numbers<[2], [2], [1], [1], [0, 0, 0, 1, 1, 1], [0], [0]>} : vector<2x8x8xf32>, vector<2x8x8xf32>, vector<2x8x8xf32> -> vector<2x8x8xf32>
    "tpu.trace_stop"() : () -> ()
    %cst_32 = arith.constant 0.353553385 : f32
    %79 = vector.broadcast %cst_32 : f32 to vector<2x8x8xf32>
    %80 = arith.mulf %78, %79 : vector<2x8x8xf32>
    %81 = arith.addf %80, %23 : vector<2x8x8xf32>
    %cst_33 = arith.constant dense<0xFF800000> : vector<2x8xf32>
    %82 = vector.multi_reduction <maximumf>, %81, %cst_33 [2] : vector<2x8x8xf32> to vector<2x8xf32>
    %83 = vector.shape_cast %82 : vector<2x8xf32> to vector<2x8x1xf32>
    %84 = vector.broadcast %83 : vector<2x8x1xf32> to vector<2x8x8xf32>
    %85 = arith.subf %81, %84 : vector<2x8x8xf32>
    %86 = math.exp %85 : vector<2x8x8xf32>
    %cst_34 = arith.constant dense<0.000000e+00> : vector<2x8xf32>
    %87 = vector.multi_reduction <add>, %86, %cst_34 [2] : vector<2x8x8xf32> to vector<2x8xf32>
    %88 = vector.shape_cast %87 : vector<2x8xf32> to vector<2x8x1xf32>
    %89 = vector.broadcast %88 : vector<2x8x1xf32> to vector<2x8x8xf32>
    %90 = arith.divf %86, %89 : vector<2x8x8xf32>
    "tpu.trace_start"() <{level = 10 : i32, message = "bqk,bkd->bqd"}> : () -> ()
    %cst_35 = arith.constant dense<0.000000e+00> : vector<2x8x8xf32>
    %91 = tpu.matmul %90, %77, %cst_35 {dimension_numbers = #tpu.dot_dimension_numbers<[2], [1], [1], [2], [0, 0, 0, 1, 1, 2], [0], [0]>} : vector<2x8x8xf32>, vector<2x8x8xf32>, vector<2x8x8xf32> -> vector<2x8x8xf32>
    "tpu.trace_stop"() : () -> ()
    %92 = tpu.concatenate %40, %57, %74, %91 in 2 : vector<2x8x8xf32>, vector<2x8x8xf32>, vector<2x8x8xf32>, vector<2x8x8xf32> -> vector<2x8x32xf32>
    %93 = vector.shape_cast %92 : vector<2x8x32xf32> to vector<16x32xf32>
    %cst_36 = arith.constant dense<0.000000e+00> : vector<16x32xf32>
    %94 = tpu.matmul %93, %14, %cst_36 {dimension_numbers = #tpu.dot_dimension_numbers<[1], [0], [0], [1], [0, 0, 1, 1], [], []>} : vector<16x32xf32>, vector<32x32xf32>, vector<16x32xf32> -> vector<16x32xf32>
    %95 = vector.broadcast %15 : vector<1x32xf32> to vector<16x32xf32>
    %96 = arith.addf %94, %95 : vector<16x32xf32>
    %97 = tpu.concatenate %39, %56, %73, %90 in 2 : vector<2x8x8xf32>, vector<2x8x8xf32>, vector<2x8x8xf32>, vector<2x8x8xf32> -> vector<2x8x32xf32>
    %c0_37 = arith.constant 0 : index
    %c0_38 = arith.constant 0 : index
    %c0_39 = arith.constant 0 : index
    %98 = vector.load %arg25[%c0_37, %c0_38, %c0_39] : memref<2x8x32xf32, #tpu.memory_space<vmem>>, vector<2x8x32xf32>
    tpu.vector_store %arg25[%c0_37, %c0_38, %c0_39], %97 {strides = array<i32>} : memref<2x8x32xf32, #tpu.memory_space<vmem>>, vector<2x8x32xf32>,
    %99 = arith.addf %0, %96 : vector<16x32xf32>
    %c0_40 = arith.constant 0 : index
    %c0_41 = arith.constant 0 : index
    %100 = vector.load %arg18[%c0_40, %c0_41] : memref<1x32xf32, #tpu.memory_space<vmem>>, vector<1x32xf32>
    %c0_42 = arith.constant 0 : index
    %c0_43 = arith.constant 0 : index
    %101 = vector.load %arg19[%c0_42, %c0_43] : memref<1x32xf32, #tpu.memory_space<vmem>>, vector<1x32xf32>
    %cst_44 = arith.constant dense<0.000000e+00> : vector<16xf32>
    %102 = vector.multi_reduction <add>, %99, %cst_44 [1] : vector<16x32xf32> to vector<16xf32>
    %103 = vector.shape_cast %102 : vector<16xf32> to vector<16x1xf32>
    %cst_45 = arith.constant 3.200000e+01 : f32
    %104 = vector.broadcast %cst_45 : f32 to vector<16x1xf32>
    %105 = arith.divf %103, %104 : vector<16x1xf32>
    %106 = vector.broadcast %105 : vector<16x1xf32> to vector<16x32xf32>
    %107 = arith.subf %99, %106 : vector<16x32xf32>
    %108 = arith.mulf %107, %107 : vector<16x32xf32>
    %cst_46 = arith.constant dense<0.000000e+00> : vector<16xf32>
    %109 = vector.multi_reduction <add>, %108, %cst_46 [1] : vector<16x32xf32> to vector<16xf32>
    %110 = vector.shape_cast %109 : vector<16xf32> to vector<16x1xf32>
    %cst_47 = arith.constant 0.0322580636 : f32
    %111 = vector.broadcast %cst_47 : f32 to vector<16x1xf32>
    %112 = arith.mulf %110, %111 : vector<16x1xf32>
    %113 = math.sqrt %112 : vector<16x1xf32>
    %cst_48 = arith.constant 9.99999997E-7 : f32
    %114 = vector.broadcast %cst_48 : f32 to vector<16x1xf32>
    %115 = arith.addf %113, %114 : vector<16x1xf32>
    %116 = tpu.reciprocal %115 {approx = true} : vector<16x1xf32> -> vector<16x1xf32>
    %117 = vector.broadcast %100 : vector<1x32xf32> to vector<16x32xf32>
    %118 = arith.mulf %117, %107 : vector<16x32xf32>
    %119 = vector.broadcast %116 : vector<16x1xf32> to vector<16x32xf32>
    %120 = arith.mulf %118, %119 : vector<16x32xf32>
    %121 = vector.broadcast %101 : vector<1x32xf32> to vector<16x32xf32>
    %122 = arith.addf %120, %121 : vector<16x32xf32>
    %c0_49 = arith.constant 0 : index
    %c0_50 = arith.constant 0 : index
    %123 = vector.load %arg8[%c0_49, %c0_50] : memref<32x32xf32, #tpu.memory_space<vmem>>, vector<32x32xf32>
    %cst_51 = arith.constant dense<0.000000e+00> : vector<16x32xf32>
    %124 = tpu.matmul %122, %123, %cst_51 {dimension_numbers = #tpu.dot_dimension_numbers<[1], [0], [0], [1], [0, 0, 1, 1], [], []>} : vector<16x32xf32>, vector<32x32xf32>, vector<16x32xf32> -> vector<16x32xf32>
    %c0_52 = arith.constant 0 : index
    %c0_53 = arith.constant 0 : index
    %125 = vector.load %arg9[%c0_52, %c0_53] : memref<1x32xf32, #tpu.memory_space<vmem>>, vector<1x32xf32>
    %126 = vector.broadcast %125 : vector<1x32xf32> to vector<16x32xf32>
    %127 = arith.addf %124, %126 : vector<16x32xf32>
    %128 = vector.shape_cast %127 : vector<16x32xf32> to vector<2x8x32xf32>
    %c0_54 = arith.constant 0 : index
    %c0_55 = arith.constant 0 : index
    %129 = vector.load %arg10[%c0_54, %c0_55] : memref<32x64xf32, #tpu.memory_space<vmem>>, vector<32x64xf32>
    %cst_56 = arith.constant dense<0.000000e+00> : vector<32x64xf32>
    %130 = tpu.matmul %1, %129, %cst_56 {dimension_numbers = #tpu.dot_dimension_numbers<[1], [0], [0], [1], [0, 0, 1, 1], [], []>} : vector<32x32xf32>, vector<32x64xf32>, vector<32x64xf32> -> vector<32x64xf32>
    %c0_57 = arith.constant 0 : index
    %c0_58 = arith.constant 0 : index
    %131 = vector.load %arg11[%c0_57, %c0_58] : memref<1x64xf32, #tpu.memory_space<vmem>>, vector<1x64xf32>
    %132 = vector.broadcast %131 : vector<1x64xf32> to vector<32x64xf32>
    %133 = arith.addf %130, %132 : vector<32x64xf32>
    %134 = vector.extract_strided_slice %133 {offsets = [0, 0], sizes = [32, 32], strides = [1, 1]} : vector<32x64xf32> to vector<32x32xf32>
    %135 = vector.shape_cast %134 : vector<32x32xf32> to vector<2x16x32xf32>
    %136 = vector.extract_strided_slice %133 {offsets = [0, 32], sizes = [32, 32], strides = [1, 1]} : vector<32x64xf32> to vector<32x32xf32>
    %137 = vector.shape_cast %136 : vector<32x32xf32> to vector<2x16x32xf32>
    %c0_59 = arith.constant 0 : index
    %c0_60 = arith.constant 0 : index
    %138 = vector.load %arg3[%c0_59, %c0_60] : memref<2x16xf32, #tpu.memory_space<vmem>>, vector<2x16xf32>
    %c0_61 = arith.constant 0 : index
    %c0_62 = arith.constant 0 : index
    %139 = vector.load %arg12[%c0_61, %c0_62] : memref<32x32xf32, #tpu.memory_space<vmem>>, vector<32x32xf32>
    %c0_63 = arith.constant 0 : index
    %c0_64 = arith.constant 0 : index
    %140 = vector.load %arg13[%c0_63, %c0_64] : memref<1x32xf32, #tpu.memory_space<vmem>>, vector<1x32xf32>
    %cst_65 = arith.constant 0.000000e+00 : f32
    %141 = vector.broadcast %cst_65 : f32 to vector<2x16xf32>
    %142 = arith.cmpf ogt, %138, %141 : vector<2x16xf32>
    %cst_66 = arith.constant -1.000000e+09 : f32
    %cst_67 = arith.constant 0.000000e+00 : f32
    %143 = vector.broadcast %cst_66 : f32 to vector<2x16xf32>
    %144 = vector.broadcast %cst_67 : f32 to vector<2x16xf32>
    %145 = arith.select %142, %143, %144 : vector<2x16xi1>, vector<2x16xf32>
    %146 = vector.shape_cast %145 : vector<2x16xf32> to vector<2x1x16xf32>
    %147 = vector.shape_cast %146 : vector<2x1x16xf32> to vector<2x1x16xf32>
    %148 = vector.broadcast %147 : vector<2x1x16xf32> to vector<2x8x16xf32>
    %149 = vector.extract_strided_slice %128 {offsets = [0, 0, 0], sizes = [2, 8, 8], strides = [1, 1, 1]} : vector<2x8x32xf32> to vector<2x8x8xf32>
    %150 = vector.extract_strided_slice %135 {offsets = [0, 0, 0], sizes = [2, 16, 8], strides = [1, 1, 1]} : vector<2x16x32xf32> to vector<2x16x8xf32>
    %151 = vector.extract_strided_slice %137 {offsets = [0, 0, 0], sizes = [2, 16, 8], strides = [1, 1, 1]} : vector<2x16x32xf32> to vector<2x16x8xf32>
    "tpu.trace_start"() <{level = 10 : i32, message = "bqd,bkd->bqk"}> : () -> ()
    %cst_68 = arith.constant dense<0.000000e+00> : vector<2x8x16xf32>
    %152 = tpu.matmul %149, %150, %cst_68 {dimension_numbers = #tpu.dot_dimension_numbers<[2], [2], [1], [1], [0, 0, 0, 1, 1, 1], [0], [0]>} : vector<2x8x8xf32>, vector<2x16x8xf32>, vector<2x8x16xf32> -> vector<2x8x16xf32>
    "tpu.trace_stop"() : () -> ()
    %cst_69 = arith.constant 0.353553385 : f32
    %153 = vector.broadcast %cst_69 : f32 to vector<2x8x16xf32>
    %154 = arith.mulf %152, %153 : vector<2x8x16xf32>
    %155 = arith.addf %154, %148 : vector<2x8x16xf32>
    %cst_70 = arith.constant dense<0xFF800000> : vector<2x8xf32>
    %156 = vector.multi_reduction <maximumf>, %155, %cst_70 [2] : vector<2x8x16xf32> to vector<2x8xf32>
    %157 = vector.shape_cast %156 : vector<2x8xf32> to vector<2x8x1xf32>
    %158 = vector.broadcast %157 : vector<2x8x1xf32> to vector<2x8x16xf32>
    %159 = arith.subf %155, %158 : vector<2x8x16xf32>
    %160 = math.exp %159 : vector<2x8x16xf32>
    %cst_71 = arith.constant dense<0.000000e+00> : vector<2x8xf32>
    %161 = vector.multi_reduction <add>, %160, %cst_71 [2] : vector<2x8x16xf32> to vector<2x8xf32>
    %162 = vector.shape_cast %161 : vector<2x8xf32> to vector<2x8x1xf32>
    %163 = tpu.reciprocal %162 {approx = true} : vector<2x8x1xf32> -> vector<2x8x1xf32>
    %164 = vector.broadcast %163 : vector<2x8x1xf32> to vector<2x8x16xf32>
    %165 = arith.mulf %160, %164 : vector<2x8x16xf32>
    "tpu.trace_start"() <{level = 10 : i32, message = "bqk,bkd->bqd"}> : () -> ()
    %cst_72 = arith.constant dense<0.000000e+00> : vector<2x8x8xf32>
    %166 = tpu.matmul %165, %151, %cst_72 {dimension_numbers = #tpu.dot_dimension_numbers<[2], [1], [1], [2], [0, 0, 0, 1, 1, 2], [0], [0]>} : vector<2x8x16xf32>, vector<2x16x8xf32>, vector<2x8x8xf32> -> vector<2x8x8xf32>
    "tpu.trace_stop"() : () -> ()
    %167 = vector.extract_strided_slice %128 {offsets = [0, 0, 8], sizes = [2, 8, 8], strides = [1, 1, 1]} : vector<2x8x32xf32> to vector<2x8x8xf32>
    %168 = vector.extract_strided_slice %135 {offsets = [0, 0, 8], sizes = [2, 16, 8], strides = [1, 1, 1]} : vector<2x16x32xf32> to vector<2x16x8xf32>
    %169 = vector.extract_strided_slice %137 {offsets = [0, 0, 8], sizes = [2, 16, 8], strides = [1, 1, 1]} : vector<2x16x32xf32> to vector<2x16x8xf32>
    "tpu.trace_start"() <{level = 10 : i32, message = "bqd,bkd->bqk"}> : () -> ()
    %cst_73 = arith.constant dense<0.000000e+00> : vector<2x8x16xf32>
    %170 = tpu.matmul %167, %168, %cst_73 {dimension_numbers = #tpu.dot_dimension_numbers<[2], [2], [1], [1], [0, 0, 0, 1, 1, 1], [0], [0]>} : vector<2x8x8xf32>, vector<2x16x8xf32>, vector<2x8x16xf32> -> vector<2x8x16xf32>
    "tpu.trace_stop"() : () -> ()
    %cst_74 = arith.constant 0.353553385 : f32
    %171 = vector.broadcast %cst_74 : f32 to vector<2x8x16xf32>
    %172 = arith.mulf %170, %171 : vector<2x8x16xf32>
    %173 = arith.addf %172, %148 : vector<2x8x16xf32>
    %cst_75 = arith.constant dense<0xFF800000> : vector<2x8xf32>
    %174 = vector.multi_reduction <maximumf>, %173, %cst_75 [2] : vector<2x8x16xf32> to vector<2x8xf32>
    %175 = vector.shape_cast %174 : vector<2x8xf32> to vector<2x8x1xf32>
    %176 = vector.broadcast %175 : vector<2x8x1xf32> to vector<2x8x16xf32>
    %177 = arith.subf %173, %176 : vector<2x8x16xf32>
    %178 = math.exp %177 : vector<2x8x16xf32>
    %cst_76 = arith.constant dense<0.000000e+00> : vector<2x8xf32>
    %179 = vector.multi_reduction <add>, %178, %cst_76 [2] : vector<2x8x16xf32> to vector<2x8xf32>
    %180 = vector.shape_cast %179 : vector<2x8xf32> to vector<2x8x1xf32>
    %181 = tpu.reciprocal %180 {approx = true} : vector<2x8x1xf32> -> vector<2x8x1xf32>
    %182 = vector.broadcast %181 : vector<2x8x1xf32> to vector<2x8x16xf32>
    %183 = arith.mulf %178, %182 : vector<2x8x16xf32>
    "tpu.trace_start"() <{level = 10 : i32, message = "bqk,bkd->bqd"}> : () -> ()
    %cst_77 = arith.constant dense<0.000000e+00> : vector<2x8x8xf32>
    %184 = tpu.matmul %183, %169, %cst_77 {dimension_numbers = #tpu.dot_dimension_numbers<[2], [1], [1], [2], [0, 0, 0, 1, 1, 2], [0], [0]>} : vector<2x8x16xf32>, vector<2x16x8xf32>, vector<2x8x8xf32> -> vector<2x8x8xf32>
    "tpu.trace_stop"() : () -> ()
    %185 = vector.extract_strided_slice %128 {offsets = [0, 0, 16], sizes = [2, 8, 8], strides = [1, 1, 1]} : vector<2x8x32xf32> to vector<2x8x8xf32>
    %186 = vector.extract_strided_slice %135 {offsets = [0, 0, 16], sizes = [2, 16, 8], strides = [1, 1, 1]} : vector<2x16x32xf32> to vector<2x16x8xf32>
    %187 = vector.extract_strided_slice %137 {offsets = [0, 0, 16], sizes = [2, 16, 8], strides = [1, 1, 1]} : vector<2x16x32xf32> to vector<2x16x8xf32>
    "tpu.trace_start"() <{level = 10 : i32, message = "bqd,bkd->bqk"}> : () -> ()
    %cst_78 = arith.constant dense<0.000000e+00> : vector<2x8x16xf32>
    %188 = tpu.matmul %185, %186, %cst_78 {dimension_numbers = #tpu.dot_dimension_numbers<[2], [2], [1], [1], [0, 0, 0, 1, 1, 1], [0], [0]>} : vector<2x8x8xf32>, vector<2x16x8xf32>, vector<2x8x16xf32> -> vector<2x8x16xf32>
    "tpu.trace_stop"() : () -> ()
    %cst_79 = arith.constant 0.353553385 : f32
    %189 = vector.broadcast %cst_79 : f32 to vector<2x8x16xf32>
    %190 = arith.mulf %188, %189 : vector<2x8x16xf32>
    %191 = arith.addf %190, %148 : vector<2x8x16xf32>
    %cst_80 = arith.constant dense<0xFF800000> : vector<2x8xf32>
    %192 = vector.multi_reduction <maximumf>, %191, %cst_80 [2] : vector<2x8x16xf32> to vector<2x8xf32>
    %193 = vector.shape_cast %192 : vector<2x8xf32> to vector<2x8x1xf32>
    %194 = vector.broadcast %193 : vector<2x8x1xf32> to vector<2x8x16xf32>
    %195 = arith.subf %191, %194 : vector<2x8x16xf32>
    %196 = math.exp %195 : vector<2x8x16xf32>
    %cst_81 = arith.constant dense<0.000000e+00> : vector<2x8xf32>
    %197 = vector.multi_reduction <add>, %196, %cst_81 [2] : vector<2x8x16xf32> to vector<2x8xf32>
    %198 = vector.shape_cast %197 : vector<2x8xf32> to vector<2x8x1xf32>
    %199 = tpu.reciprocal %198 {approx = true} : vector<2x8x1xf32> -> vector<2x8x1xf32>
    %200 = vector.broadcast %199 : vector<2x8x1xf32> to vector<2x8x16xf32>
    %201 = arith.mulf %196, %200 : vector<2x8x16xf32>
    "tpu.trace_start"() <{level = 10 : i32, message = "bqk,bkd->bqd"}> : () -> ()
    %cst_82 = arith.constant dense<0.000000e+00> : vector<2x8x8xf32>
    %202 = tpu.matmul %201, %187, %cst_82 {dimension_numbers = #tpu.dot_dimension_numbers<[2], [1], [1], [2], [0, 0, 0, 1, 1, 2], [0], [0]>} : vector<2x8x16xf32>, vector<2x16x8xf32>, vector<2x8x8xf32> -> vector<2x8x8xf32>
    "tpu.trace_stop"() : () -> ()
    %203 = vector.extract_strided_slice %128 {offsets = [0, 0, 24], sizes = [2, 8, 8], strides = [1, 1, 1]} : vector<2x8x32xf32> to vector<2x8x8xf32>
    %204 = vector.extract_strided_slice %135 {offsets = [0, 0, 24], sizes = [2, 16, 8], strides = [1, 1, 1]} : vector<2x16x32xf32> to vector<2x16x8xf32>
    %205 = vector.extract_strided_slice %137 {offsets = [0, 0, 24], sizes = [2, 16, 8], strides = [1, 1, 1]} : vector<2x16x32xf32> to vector<2x16x8xf32>
    "tpu.trace_start"() <{level = 10 : i32, message = "bqd,bkd->bqk"}> : () -> ()
    %cst_83 = arith.constant dense<0.000000e+00> : vector<2x8x16xf32>
    %206 = tpu.matmul %203, %204, %cst_83 {dimension_numbers = #tpu.dot_dimension_numbers<[2], [2], [1], [1], [0, 0, 0, 1, 1, 1], [0], [0]>} : vector<2x8x8xf32>, vector<2x16x8xf32>, vector<2x8x16xf32> -> vector<2x8x16xf32>
    "tpu.trace_stop"() : () -> ()
    %cst_84 = arith.constant 0.353553385 : f32
    %207 = vector.broadcast %cst_84 : f32 to vector<2x8x16xf32>
    %208 = arith.mulf %206, %207 : vector<2x8x16xf32>
    %209 = arith.addf %208, %148 : vector<2x8x16xf32>
    %cst_85 = arith.constant dense<0xFF800000> : vector<2x8xf32>
    %210 = vector.multi_reduction <maximumf>, %209, %cst_85 [2] : vector<2x8x16xf32> to vector<2x8xf32>
    %211 = vector.shape_cast %210 : vector<2x8xf32> to vector<2x8x1xf32>
    %212 = vector.broadcast %211 : vector<2x8x1xf32> to vector<2x8x16xf32>
    %213 = arith.subf %209, %212 : vector<2x8x16xf32>
    %214 = math.exp %213 : vector<2x8x16xf32>
    %cst_86 = arith.constant dense<0.000000e+00> : vector<2x8xf32>
    %215 = vector.multi_reduction <add>, %214, %cst_86 [2] : vector<2x8x16xf32> to vector<2x8xf32>
    %216 = vector.shape_cast %215 : vector<2x8xf32> to vector<2x8x1xf32>
    %217 = tpu.reciprocal %216 {approx = true} : vector<2x8x1xf32> -> vector<2x8x1xf32>
    %218 = vector.broadcast %217 : vector<2x8x1xf32> to vector<2x8x16xf32>
    %219 = arith.mulf %214, %218 : vector<2x8x16xf32>
    "tpu.trace_start"() <{level = 10 : i32, message = "bqk,bkd->bqd"}> : () -> ()
    %cst_87 = arith.constant dense<0.000000e+00> : vector<2x8x8xf32>
    %220 = tpu.matmul %219, %205, %cst_87 {dimension_numbers = #tpu.dot_dimension_numbers<[2], [1], [1], [2], [0, 0, 0, 1, 1, 2], [0], [0]>} : vector<2x8x16xf32>, vector<2x16x8xf32>, vector<2x8x8xf32> -> vector<2x8x8xf32>
    "tpu.trace_stop"() : () -> ()
    %221 = tpu.concatenate %166, %184, %202, %220 in 2 : vector<2x8x8xf32>, vector<2x8x8xf32>, vector<2x8x8xf32>, vector<2x8x8xf32> -> vector<2x8x32xf32>
    %222 = vector.shape_cast %221 : vector<2x8x32xf32> to vector<16x32xf32>
    %cst_88 = arith.constant dense<0.000000e+00> : vector<16x32xf32>
    %223 = tpu.matmul %222, %139, %cst_88 {dimension_numbers = #tpu.dot_dimension_numbers<[1], [0], [0], [1], [0, 0, 1, 1], [], []>} : vector<16x32xf32>, vector<32x32xf32>, vector<16x32xf32> -> vector<16x32xf32>
    %224 = vector.broadcast %140 : vector<1x32xf32> to vector<16x32xf32>
    %225 = arith.addf %223, %224 : vector<16x32xf32>
    %226 = arith.addf %122, %225 : vector<16x32xf32>
    %c0_89 = arith.constant 0 : index
    %c0_90 = arith.constant 0 : index
    %227 = vector.load %arg20[%c0_89, %c0_90] : memref<1x32xf32, #tpu.memory_space<vmem>>, vector<1x32xf32>
    %c0_91 = arith.constant 0 : index
    %c0_92 = arith.constant 0 : index
    %228 = vector.load %arg21[%c0_91, %c0_92] : memref<1x32xf32, #tpu.memory_space<vmem>>, vector<1x32xf32>
    %cst_93 = arith.constant dense<0.000000e+00> : vector<16xf32>
    %229 = vector.multi_reduction <add>, %226, %cst_93 [1] : vector<16x32xf32> to vector<16xf32>
    %230 = vector.shape_cast %229 : vector<16xf32> to vector<16x1xf32>
    %cst_94 = arith.constant 3.200000e+01 : f32
    %231 = vector.broadcast %cst_94 : f32 to vector<16x1xf32>
    %232 = arith.divf %230, %231 : vector<16x1xf32>
    %233 = vector.broadcast %232 : vector<16x1xf32> to vector<16x32xf32>
    %234 = arith.subf %226, %233 : vector<16x32xf32>
    %235 = arith.mulf %234, %234 : vector<16x32xf32>
    %cst_95 = arith.constant dense<0.000000e+00> : vector<16xf32>
    %236 = vector.multi_reduction <add>, %235, %cst_95 [1] : vector<16x32xf32> to vector<16xf32>
    %237 = vector.shape_cast %236 : vector<16xf32> to vector<16x1xf32>
    %cst_96 = arith.constant 0.0322580636 : f32
    %238 = vector.broadcast %cst_96 : f32 to vector<16x1xf32>
    %239 = arith.mulf %237, %238 : vector<16x1xf32>
    %240 = math.sqrt %239 : vector<16x1xf32>
    %cst_97 = arith.constant 9.99999997E-7 : f32
    %241 = vector.broadcast %cst_97 : f32 to vector<16x1xf32>
    %242 = arith.addf %240, %241 : vector<16x1xf32>
    %243 = tpu.reciprocal %242 {approx = true} : vector<16x1xf32> -> vector<16x1xf32>
    %244 = vector.broadcast %227 : vector<1x32xf32> to vector<16x32xf32>
    %245 = arith.mulf %244, %234 : vector<16x32xf32>
    %246 = vector.broadcast %243 : vector<16x1xf32> to vector<16x32xf32>
    %247 = arith.mulf %245, %246 : vector<16x32xf32>
    %248 = vector.broadcast %228 : vector<1x32xf32> to vector<16x32xf32>
    %249 = arith.addf %247, %248 : vector<16x32xf32>
    %c0_98 = arith.constant 0 : index
    %c0_99 = arith.constant 0 : index
    %250 = vector.load %arg14[%c0_98, %c0_99] : memref<32x64xf32, #tpu.memory_space<vmem>>, vector<32x64xf32>
    %cst_100 = arith.constant dense<0.000000e+00> : vector<16x64xf32>
    %251 = tpu.matmul %249, %250, %cst_100 {dimension_numbers = #tpu.dot_dimension_numbers<[1], [0], [0], [1], [0, 0, 1, 1], [], []>} : vector<16x32xf32>, vector<32x64xf32>, vector<16x64xf32> -> vector<16x64xf32>
    %c0_101 = arith.constant 0 : index
    %c0_102 = arith.constant 0 : index
    %252 = vector.load %arg15[%c0_101, %c0_102] : memref<1x64xf32, #tpu.memory_space<vmem>>, vector<1x64xf32>
    %253 = vector.broadcast %252 : vector<1x64xf32> to vector<16x64xf32>
    %254 = arith.addf %251, %253 : vector<16x64xf32>
    %cst_103 = arith.constant 0.000000e+00 : f32
    %255 = vector.broadcast %cst_103 : f32 to vector<16x64xf32>
    %256 = arith.maximumf %254, %255 : vector<16x64xf32>
    %c0_104 = arith.constant 0 : index
    %c0_105 = arith.constant 0 : index
    %257 = vector.load %arg16[%c0_104, %c0_105] : memref<64x32xf32, #tpu.memory_space<vmem>>, vector<64x32xf32>
    %cst_106 = arith.constant dense<0.000000e+00> : vector<16x32xf32>
    %258 = tpu.matmul %256, %257, %cst_106 {dimension_numbers = #tpu.dot_dimension_numbers<[1], [0], [0], [1], [0, 0, 1, 1], [], []>} : vector<16x64xf32>, vector<64x32xf32>, vector<16x32xf32> -> vector<16x32xf32>
    %c0_107 = arith.constant 0 : index
    %c0_108 = arith.constant 0 : index
    %259 = vector.load %arg17[%c0_107, %c0_108] : memref<1x32xf32, #tpu.memory_space<vmem>>, vector<1x32xf32>
    %260 = vector.broadcast %259 : vector<1x32xf32> to vector<16x32xf32>
    %261 = arith.addf %258, %260 : vector<16x32xf32>
    %262 = arith.addf %249, %261 : vector<16x32xf32>
    %c0_109 = arith.constant 0 : index
    %c0_110 = arith.constant 0 : index
    %263 = vector.load %arg22[%c0_109, %c0_110] : memref<1x32xf32, #tpu.memory_space<vmem>>, vector<1x32xf32>
    %c0_111 = arith.constant 0 : index
    %c0_112 = arith.constant 0 : index
    %264 = vector.load %arg23[%c0_111, %c0_112] : memref<1x32xf32, #tpu.memory_space<vmem>>, vector<1x32xf32>
    %cst_113 = arith.constant dense<0.000000e+00> : vector<16xf32>
    %265 = vector.multi_reduction <add>, %262, %cst_113 [1] : vector<16x32xf32> to vector<16xf32>
    %266 = vector.shape_cast %265 : vector<16xf32> to vector<16x1xf32>
    %cst_114 = arith.constant 3.200000e+01 : f32
    %267 = vector.broadcast %cst_114 : f32 to vector<16x1xf32>
    %268 = arith.divf %266, %267 : vector<16x1xf32>
    %269 = vector.broadcast %268 : vector<16x1xf32> to vector<16x32xf32>
    %270 = arith.subf %262, %269 : vector<16x32xf32>
    %271 = arith.mulf %270, %270 : vector<16x32xf32>
    %cst_115 = arith.constant dense<0.000000e+00> : vector<16xf32>
    %272 = vector.multi_reduction <add>, %271, %cst_115 [1] : vector<16x32xf32> to vector<16xf32>
    %273 = vector.shape_cast %272 : vector<16xf32> to vector<16x1xf32>
    %cst_116 = arith.constant 0.0322580636 : f32
    %274 = vector.broadcast %cst_116 : f32 to vector<16x1xf32>
    %275 = arith.mulf %273, %274 : vector<16x1xf32>
    %276 = math.sqrt %275 : vector<16x1xf32>
    %cst_117 = arith.constant 9.99999997E-7 : f32
    %277 = vector.broadcast %cst_117 : f32 to vector<16x1xf32>
    %278 = arith.addf %276, %277 : vector<16x1xf32>
    %279 = tpu.reciprocal %278 {approx = true} : vector<16x1xf32> -> vector<16x1xf32>
    %280 = vector.broadcast %263 : vector<1x32xf32> to vector<16x32xf32>
    %281 = arith.mulf %280, %270 : vector<16x32xf32>
    %282 = vector.broadcast %279 : vector<16x1xf32> to vector<16x32xf32>
    %283 = arith.mulf %281, %282 : vector<16x32xf32>
    %284 = vector.broadcast %264 : vector<1x32xf32> to vector<16x32xf32>
    %285 = arith.addf %283, %284 : vector<16x32xf32>
    %c0_118 = arith.constant 0 : index
    %c0_119 = arith.constant 0 : index
    %286 = vector.load %arg24[%c0_118, %c0_119] : memref<16x32xf32, #tpu.memory_space<vmem>>, vector<16x32xf32>
    tpu.vector_store %arg24[%c0_118, %c0_119], %285 {strides = array<i32>} : memref<16x32xf32, #tpu.memory_space<vmem>>, vector<16x32xf32>,
    return
  }
}

</mosaic_0001>

<llo_original>
// kernel: sga_forward.1
$region0: #{sga_forward.1}
  #allocation0 [shape = 'u32[]', space=smem, size = 0x4, offset = 0x4, fixed_abs, tag = 'smem constant byte address 0x4 - core index']
  #allocation1 [shape = 'u32[144,128]{1,0:T(1,128)}', space=vmem, size = 0x12000, scoped, tag = 'internal scratch']
  %s0 = inlined_call_operand.hbm [shape: f32[16,32], index: 0, kind: input, shape index: {}]
  %s1 = inlined_call_operand.vmem [shape: f32[32,32], index: 1, kind: input, shape index: {}]
  %s2 = inlined_call_operand.vmem [shape: f32[2,8], index: 2, kind: input, shape index: {}]
  %s3 = inlined_call_operand.vmem [shape: f32[2,16], index: 3, kind: input, shape index: {}]
  %s4 = inlined_call_operand.vmem [shape: f32[32,96], index: 4, kind: input, shape index: {}]
  %s5 = inlined_call_operand.hbm [shape: f32[1,96], index: 5, kind: input, shape index: {}]
  %s6 = inlined_call_operand.vmem [shape: f32[32,32], index: 6, kind: input, shape index: {}]
  %s7 = inlined_call_operand.hbm [shape: f32[1,32], index: 7, kind: input, shape index: {}]
  %s8 = inlined_call_operand.vmem [shape: f32[32,32], index: 8, kind: input, shape index: {}]
  %s9 = inlined_call_operand.hbm [shape: f32[1,32], index: 9, kind: input, shape index: {}]
  %s10 = inlined_call_operand.hbm [shape: f32[32,64], index: 10, kind: input, shape index: {}]
  %s11 = inlined_call_operand.hbm [shape: f32[1,64], index: 11, kind: input, shape index: {}]
  %s12 = inlined_call_operand.hbm [shape: f32[32,32], index: 12, kind: input, shape index: {}]
  %s13 = inlined_call_operand.hbm [shape: f32[1,32], index: 13, kind: input, shape index: {}]
  %s14 = inlined_call_operand.hbm [shape: f32[32,64], index: 14, kind: input, shape index: {}]
  %s15 = inlined_call_operand.hbm [shape: f32[1,64], index: 15, kind: input, shape index: {}]
  %s16 = inlined_call_operand.vmem [shape: f32[64,32], index: 16, kind: input, shape index: {}]
  %s17 = inlined_call_operand.hbm [shape: f32[1,32], index: 17, kind: input, shape index: {}]
  %s18 = inlined_call_operand.hbm [shape: f32[1,32], index: 18, kind: input, shape index: {}]
  %s19 = inlined_call_operand.hbm [shape: f32[1,32], index: 19, kind: input, shape index: {}]
  %s20 = inlined_call_operand.hbm [shape: f32[1,32], index: 20, kind: input, shape index: {}]
  %s21 = inlined_call_operand.hbm [shape: f32[1,32], index: 21, kind: input, shape index: {}]
  %s22 = inlined_call_operand.hbm [shape: f32[1,32], index: 22, kind: input, shape index: {}]
  %s23 = inlined_call_operand.hbm [shape: f32[1,32], index: 23, kind: input, shape index: {}]
  %s24 = inlined_call_operand.hbm [shape: f32[16,32], index: 24, kind: output, shape index: {0}]
  %s25 = inlined_call_operand.vmem [shape: f32[2,8,32], index: 25, kind: output, shape index: {1}]
  %26 = xla_tuple %s24, %s25
  %s27 = sld [smem:[#allocation0]]
  $region182: #{sga_forward.1} parent=0
    _
  %s29 = ssub.s32 1, %s27
  %s30 = scalar_select 0, %s29, %s27
  $region1: #{sga_forward.1} parent=0
    #allocation2 [shape = 'u8[8192]{0}', space=vmem, size = 0x2000, scoped, tag = 'input window, operand 0, single buffered']
    #allocation3 [shape = 's32[1]{0}', space=sflag, size = 0x4, scoped, tag = 'scoped memory for sga_forward.1']
    #allocation4 [shape = 's32[1]{0}', space=sflag, size = 0x4, scoped, tag = 'scoped memory for sga_forward.1']
    #allocation5 [shape = 'u8[512]{0}', space=vmem, size = 0x400, scoped, tag = 'input window, operand 5, single buffered']
    #allocation6 [shape = 's32[1]{0}', space=sflag, size = 0x4, scoped, tag = 'scoped memory for sga_forward.1']
    #allocation7 [shape = 'u8[512]{0}', space=vmem, size = 0x400, scoped, tag = 'input window, operand 7, single buffered']
    #allocation8 [shape = 'u8[512]{0}', space=vmem, size = 0x400, scoped, tag = 'input window, operand 9, single buffered']
    #allocation9 [shape = 's32[1]{0}', space=sflag, size = 0x4, scoped, tag = 'scoped memory for sga_forward.1']
    #allocation10 [shape = 'u8[16384]{0}', space=vmem, size = 0x4000, scoped, tag = 'input window, operand 10, single buffered']
    #allocation11 [shape = 'u8[512]{0}', space=vmem, size = 0x400, scoped, tag = 'input window, operand 11, single buffered']
    #allocation12 [shape = 's32[1]{0}', space=sflag, size = 0x4, scoped, tag = 'scoped memory for sga_forward.1']
    #allocation13 [shape = 'u8[16384]{0}', space=vmem, size = 0x4000, scoped, tag = 'input window, operand 12, single buffered']
    #allocation14 [shape = 'u8[512]{0}', space=vmem, size = 0x400, scoped, tag = 'input window, operand 13, single buffered']
    #allocation15 [shape = 's32[1]{0}', space=sflag, size = 0x4, scoped, tag = 'scoped memory for sga_forward.1']
    #allocation16 [shape = 'u8[16384]{0}', space=vmem, size = 0x4000, scoped, tag = 'input window, operand 14, single buffered']
    #allocation17 [shape = 'u8[512]{0}', space=vmem, size = 0x400, scoped, tag = 'input window, operand 15, single buffered']
    #allocation18 [shape = 's32[1]{0}', space=sflag, size = 0x4, scoped, tag = 'scoped memory for sga_forward.1']
    #allocation19 [shape = 'u8[512]{0}', space=vmem, size = 0x400, scoped, tag = 'input window, operand 17, single buffered']
    #allocation20 [shape = 'u8[512]{0}', space=vmem, size = 0x400, scoped, tag = 'input window, operand 18, single buffered']
    #allocation21 [shape = 's32[1]{0}', space=sflag, size = 0x4, scoped, tag = 'scoped memory for sga_forward.1']
    #allocation22 [shape = 'u8[512]{0}', space=vmem, size = 0x400, scoped, tag = 'input window, operand 19, single buffered']
    #allocation23 [shape = 'u8[512]{0}', space=vmem, size = 0x400, scoped, tag = 'input window, operand 20, single buffered']
    #allocation24 [shape = 's32[1]{0}', space=sflag, size = 0x4, scoped, tag = 'scoped memory for sga_forward.1']
    #allocation25 [shape = 'u8[512]{0}', space=vmem, size = 0x400, scoped, tag = 'input window, operand 21, single buffered']
    #allocation26 [shape = 'u8[512]{0}', space=vmem, size = 0x400, scoped, tag = 'input window, operand 22, single buffered']
    #allocation27 [shape = 's32[1]{0}', space=sflag, size = 0x4, scoped, tag = 'scoped memory for sga_forward.1']
    #allocation28 [shape = 'u8[512]{0}', space=vmem, size = 0x400, scoped, tag = 'input window, operand 23, single buffered']
    #allocation29 [shape = 'u8[8192]{0}', space=vmem, size = 0x2000, scoped, tag = 'output window, operand 0, single buffered']
    %31 = vsyncpa [#allocation3], 0
    %32 = vsyncpa [#allocation6], 0
    %33 = vsyncpa [#allocation9], 0
    %34 = vsyncpa [#allocation12], 0
    %35 = vsyncpa [#allocation15], 0
    %36 = vsyncpa [#allocation18], 0
    %37 = vsyncpa [#allocation21], 0
    %38 = vsyncpa [#allocation24], 0
    %39 = vsyncpa [#allocation27], 0
    %40 = vsyncpa [#allocation4], 0
    // Predicated region
    $region2: #{sga_forward.1} parent=1 // pred_check
      _
    $region3: #{sga_forward.1} parent=1 // pred_check_branch
      %42 = sbr.rel (0) target = $region5
    $region4: #{sga_forward.1} parent=1 // pred_region
      %s44 = ssub.s32 256, 256
      %45 = vsyncadd [#allocation3], %s44
      %s46 = sshll.u32 [#allocation2], 4
      %s47 = int_to_ptr.vmem [resolvable:$true] %s46
      %52 = dma.hbm_to_vmem [thread:$0]  %s0, 256, %s47, [#allocation3], 128, 128, 8
    $region5: #{sga_forward.1} parent=1 // pred_fallthru
      _
    // Predicated region
    $region6: #{sga_forward.1} parent=1 // pred_check
      _
    $region7: #{sga_forward.1} parent=1 // pred_check_branch
      %54 = sbr.rel (0) target = $region9
    $region8: #{sga_forward.1} parent=1 // pred_region
      _
    $region9: #{sga_forward.1} parent=1 // pred_fallthru
      _
    // Predicated region
    $region10: #{sga_forward.1} parent=1 // pred_check
      _
    $region11: #{sga_forward.1} parent=1 // pred_check_branch
      %56 = sbr.rel (0) target = $region13
    $region12: #{sga_forward.1} parent=1 // pred_region
      _
    $region13: #{sga_forward.1} parent=1 // pred_fallthru
      _
    // Predicated region
    $region14: #{sga_forward.1} parent=1 // pred_check
      _
    $region15: #{sga_forward.1} parent=1 // pred_check_branch
      %58 = sbr.rel (0) target = $region17
    $region16: #{sga_forward.1} parent=1 // pred_region
      _
    $region17: #{sga_forward.1} parent=1 // pred_fallthru
      _
    // Predicated region
    $region18: #{sga_forward.1} parent=1 // pred_check
      _
    $region19: #{sga_forward.1} parent=1 // pred_check_branch
      %60 = sbr.rel (0) target = $region21
    $region20: #{sga_forward.1} parent=1 // pred_region
      _
    $region21: #{sga_forward.1} parent=1 // pred_fallthru
      _
    // Predicated region
    $region22: #{sga_forward.1} parent=1 // pred_check
      _
    $region23: #{sga_forward.1} parent=1 // pred_check_branch
      %62 = sbr.rel (0) target = $region25
    $region24: #{sga_forward.1} parent=1 // pred_region
      %s64 = ssub.s32 16, 16
      %65 = vsyncadd [#allocation6], %s64
      %s67 = sshll.u32 [#allocation5], 4
      %s68 = int_to_ptr.vmem [resolvable:$true] %s67
      %70 = dma.hbm_to_vmem [thread:$0]  %s5, 16, %s68, [#allocation6]
    $region25: #{sga_forward.1} parent=1 // pred_fallthru
      _
    // Predicated region
    $region26: #{sga_forward.1} parent=1 // pred_check
      _
    $region27: #{sga_forward.1} parent=1 // pred_check_branch
      %72 = sbr.rel (0) target = $region29
    $region28: #{sga_forward.1} parent=1 // pred_region
      _
    $region29: #{sga_forward.1} parent=1 // pred_fallthru
      _
    // Predicated region
    $region30: #{sga_forward.1} parent=1 // pred_check
      _
    $region31: #{sga_forward.1} parent=1 // pred_check_branch
      %74 = sbr.rel (0) target = $region33
    $region32: #{sga_forward.1} parent=1 // pred_region
      %s76 = ssub.s32 16, 16
      %77 = vsyncadd [#allocation6], %s76
      %s79 = sshll.u32 [#allocation7], 4
      %s80 = int_to_ptr.vmem [resolvable:$true] %s79
      %82 = dma.hbm_to_vmem [thread:$0]  %s7, 16, %s80, [#allocation6]
    $region33: #{sga_forward.1} parent=1 // pred_fallthru
      _
    // Predicated region
    $region34: #{sga_forward.1} parent=1 // pred_check
      _
    $region35: #{sga_forward.1} parent=1 // pred_check_branch
      %84 = sbr.rel (0) target = $region37
    $region36: #{sga_forward.1} parent=1 // pred_region
      _
    $region37: #{sga_forward.1} parent=1 // pred_fallthru
      _
    // Predicated region
    $region38: #{sga_forward.1} parent=1 // pred_check
      _
    $region39: #{sga_forward.1} parent=1 // pred_check_branch
      %86 = sbr.rel (0) target = $region41
    $region40: #{sga_forward.1} parent=1 // pred_region
      %s88 = ssub.s32 16, 16
      %89 = vsyncadd [#allocation9], %s88
      %s91 = sshll.u32 [#allocation8], 4
      %s92 = int_to_ptr.vmem [resolvable:$true] %s91
      %94 = dma.hbm_to_vmem [thread:$0]  %s9, 16, %s92, [#allocation9]
    $region41: #{sga_forward.1} parent=1 // pred_fallthru
      _
    // Predicated region
    $region42: #{sga_forward.1} parent=1 // pred_check
      _
    $region43: #{sga_forward.1} parent=1 // pred_check_branch
      %96 = sbr.rel (0) target = $region45
    $region44: #{sga_forward.1} parent=1 // pred_region
      %s98 = ssub.s32 512, 512
      %99 = vsyncadd [#allocation9], %s98
      %s100 = sshll.u32 [#allocation10], 4
      %s101 = int_to_ptr.vmem [resolvable:$true] %s100
      %106 = dma.hbm_to_vmem [thread:$0]  %s10, 512, %s101, [#allocation9], 128, 128, 8
    $region45: #{sga_forward.1} parent=1 // pred_fallthru
      _
    // Predicated region
    $region46: #{sga_forward.1} parent=1 // pred_check
      _
    $region47: #{sga_forward.1} parent=1 // pred_check_branch
      %108 = sbr.rel (0) target = $region49
    $region48: #{sga_forward.1} parent=1 // pred_region
      %s110 = ssub.s32 16, 16
      %111 = vsyncadd [#allocation12], %s110
      %s113 = sshll.u32 [#allocation11], 4
      %s114 = int_to_ptr.vmem [resolvable:$true] %s113
      %116 = dma.hbm_to_vmem [thread:$0]  %s11, 16, %s114, [#allocation12]
    $region49: #{sga_forward.1} parent=1 // pred_fallthru
      _
    // Predicated region
    $region50: #{sga_forward.1} parent=1 // pred_check
      _
    $region51: #{sga_forward.1} parent=1 // pred_check_branch
      %118 = sbr.rel (0) target = $region53
    $region52: #{sga_forward.1} parent=1 // pred_region
      %s120 = ssub.s32 512, 512
      %121 = vsyncadd [#allocation12], %s120
      %s122 = sshll.u32 [#allocation13], 4
      %s123 = int_to_ptr.vmem [resolvable:$true] %s122
      %128 = dma.hbm_to_vmem [thread:$0]  %s12, 512, %s123, [#allocation12], 128, 128, 8
    $region53: #{sga_forward.1} parent=1 // pred_fallthru
      _
    // Predicated region
    $region54: #{sga_forward.1} parent=1 // pred_check
      _
    $region55: #{sga_forward.1} parent=1 // pred_check_branch
      %130 = sbr.rel (0) target = $region57
    $region56: #{sga_forward.1} parent=1 // pred_region
      %s132 = ssub.s32 16, 16
      %133 = vsyncadd [#allocation15], %s132
      %s135 = sshll.u32 [#allocation14], 4
      %s136 = int_to_ptr.vmem [resolvable:$true] %s135
      %138 = dma.hbm_to_vmem [thread:$0]  %s13, 16, %s136, [#allocation15]
    $region57: #{sga_forward.1} parent=1 // pred_fallthru
      _
    // Predicated region
    $region58: #{sga_forward.1} parent=1 // pred_check
      _
    $region59: #{sga_forward.1} parent=1 // pred_check_branch
      %140 = sbr.rel (0) target = $region61
    $region60: #{sga_forward.1} parent=1 // pred_region
      %s142 = ssub.s32 512, 512
      %143 = vsyncadd [#allocation15], %s142
      %s144 = sshll.u32 [#allocation16], 4
      %s145 = int_to_ptr.vmem [resolvable:$true] %s144
      %150 = dma.hbm_to_vmem [thread:$0]  %s14, 512, %s145, [#allocation15], 128, 128, 8
    $region61: #{sga_forward.1} parent=1 // pred_fallthru
      _
    // Predicated region
    $region62: #{sga_forward.1} parent=1 // pred_check
      _
    $region63: #{sga_forward.1} parent=1 // pred_check_branch
      %152 = sbr.rel (0) target = $region65
    $region64: #{sga_forward.1} parent=1 // pred_region
      %s154 = ssub.s32 16, 16
      %155 = vsyncadd [#allocation18], %s154
      %s157 = sshll.u32 [#allocation17], 4
      %s158 = int_to_ptr.vmem [resolvable:$true] %s157
      %160 = dma.hbm_to_vmem [thread:$0]  %s15, 16, %s158, [#allocation18]
    $region65: #{sga_forward.1} parent=1 // pred_fallthru
      _
    // Predicated region
    $region66: #{sga_forward.1} parent=1 // pred_check
      _
    $region67: #{sga_forward.1} parent=1 // pred_check_branch
      %162 = sbr.rel (0) target = $region69
    $region68: #{sga_forward.1} parent=1 // pred_region
      _
    $region69: #{sga_forward.1} parent=1 // pred_fallthru
      _
    // Predicated region
    $region70: #{sga_forward.1} parent=1 // pred_check
      _
    $region71: #{sga_forward.1} parent=1 // pred_check_branch
      %164 = sbr.rel (0) target = $region73
    $region72: #{sga_forward.1} parent=1 // pred_region
      %s166 = ssub.s32 16, 16
      %167 = vsyncadd [#allocation18], %s166
      %s169 = sshll.u32 [#allocation19], 4
      %s170 = int_to_ptr.vmem [resolvable:$true] %s169
      %172 = dma.hbm_to_vmem [thread:$0]  %s17, 16, %s170, [#allocation18]
    $region73: #{sga_forward.1} parent=1 // pred_fallthru
      _
    // Predicated region
    $region74: #{sga_forward.1} parent=1 // pred_check
      _
    $region75: #{sga_forward.1} parent=1 // pred_check_branch
      %174 = sbr.rel (0) target = $region77
    $region76: #{sga_forward.1} parent=1 // pred_region
      %s176 = ssub.s32 16, 16
      %177 = vsyncadd [#allocation21], %s176
      %s179 = sshll.u32 [#allocation20], 4
      %s180 = int_to_ptr.vmem [resolvable:$true] %s179
      %182 = dma.hbm_to_vmem [thread:$0]  %s18, 16, %s180, [#allocation21]
    $region77: #{sga_forward.1} parent=1 // pred_fallthru
      _
    // Predicated region
    $region78: #{sga_forward.1} parent=1 // pred_check
      _
    $region79: #{sga_forward.1} parent=1 // pred_check_branch
      %184 = sbr.rel (0) target = $region81
    $region80: #{sga_forward.1} parent=1 // pred_region
      %s186 = ssub.s32 16, 16
      %187 = vsyncadd [#allocation21], %s186
      %s189 = sshll.u32 [#allocation22], 4
      %s190 = int_to_ptr.vmem [resolvable:$true] %s189
      %192 = dma.hbm_to_vmem [thread:$0]  %s19, 16, %s190, [#allocation21]
    $region81: #{sga_forward.1} parent=1 // pred_fallthru
      _
    // Predicated region
    $region82: #{sga_forward.1} parent=1 // pred_check
      _
    $region83: #{sga_forward.1} parent=1 // pred_check_branch
      %194 = sbr.rel (0) target = $region85
    $region84: #{sga_forward.1} parent=1 // pred_region
      %s196 = ssub.s32 16, 16
      %197 = vsyncadd [#allocation24], %s196
      %s199 = sshll.u32 [#allocation23], 4
      %s200 = int_to_ptr.vmem [resolvable:$true] %s199
      %202 = dma.hbm_to_vmem [thread:$0]  %s20, 16, %s200, [#allocation24]
    $region85: #{sga_forward.1} parent=1 // pred_fallthru
      _
    // Predicated region
    $region86: #{sga_forward.1} parent=1 // pred_check
      _
    $region87: #{sga_forward.1} parent=1 // pred_check_branch
      %204 = sbr.rel (0) target = $region89
    $region88: #{sga_forward.1} parent=1 // pred_region
      %s206 = ssub.s32 16, 16
      %207 = vsyncadd [#allocation24], %s206
      %s209 = sshll.u32 [#allocation25], 4
      %s210 = int_to_ptr.vmem [resolvable:$true] %s209
      %212 = dma.hbm_to_vmem [thread:$0]  %s21, 16, %s210, [#allocation24]
    $region89: #{sga_forward.1} parent=1 // pred_fallthru
      _
    // Predicated region
    $region90: #{sga_forward.1} parent=1 // pred_check
      _
    $region91: #{sga_forward.1} parent=1 // pred_check_branch
      %214 = sbr.rel (0) target = $region93
    $region92: #{sga_forward.1} parent=1 // pred_region
      %s216 = ssub.s32 16, 16
      %217 = vsyncadd [#allocation27], %s216
      %s219 = sshll.u32 [#allocation26], 4
      %s220 = int_to_ptr.vmem [resolvable:$true] %s219
      %222 = dma.hbm_to_vmem [thread:$0]  %s22, 16, %s220, [#allocation27]
    $region93: #{sga_forward.1} parent=1 // pred_fallthru
      _
    // Predicated region
    $region94: #{sga_forward.1} parent=1 // pred_check
      _
    $region95: #{sga_forward.1} parent=1 // pred_check_branch
      %224 = sbr.rel (0) target = $region97
    $region96: #{sga_forward.1} parent=1 // pred_region
      %s226 = ssub.s32 16, 16
      %227 = vsyncadd [#allocation27], %s226
      %s229 = sshll.u32 [#allocation28], 4
      %s230 = int_to_ptr.vmem [resolvable:$true] %s229
      %232 = dma.hbm_to_vmem [thread:$0]  %s23, 16, %s230, [#allocation27]
    $region97: #{sga_forward.1} parent=1 // pred_fallthru
      _
    // Predicated region
    $region98: #{sga_forward.1} parent=1 // pred_check
      _
    $region99: #{sga_forward.1} parent=1 // pred_check_branch
      %234 = sbr.rel (0) target = $region101
    $region100: #{sga_forward.1} parent=1 // pred_region
      %235 = dma.done [#allocation3], 256
    $region101: #{sga_forward.1} parent=1 // pred_fallthru
      _
    // Predicated region
    $region102: #{sga_forward.1} parent=1 // pred_check
      _
    $region103: #{sga_forward.1} parent=1 // pred_check_branch
      %237 = sbr.rel (0) target = $region105
    $region104: #{sga_forward.1} parent=1 // pred_region
      %238 = dma.done [#allocation6], 16
    $region105: #{sga_forward.1} parent=1 // pred_fallthru
      _
    // Predicated region
    $region106: #{sga_forward.1} parent=1 // pred_check
      _
    $region107: #{sga_forward.1} parent=1 // pred_check_branch
      %240 = sbr.rel (0) target = $region109
    $region108: #{sga_forward.1} parent=1 // pred_region
      %241 = dma.done [#allocation6], 16
    $region109: #{sga_forward.1} parent=1 // pred_fallthru
      _
    // Predicated region
    $region110: #{sga_forward.1} parent=1 // pred_check
      _
    $region111: #{sga_forward.1} parent=1 // pred_check_branch
      %243 = sbr.rel (0) target = $region113
    $region112: #{sga_forward.1} parent=1 // pred_region
      %244 = dma.done [#allocation9], 16
    $region113: #{sga_forward.1} parent=1 // pred_fallthru
      _
    // Predicated region
    $region114: #{sga_forward.1} parent=1 // pred_check
      _
    $region115: #{sga_forward.1} parent=1 // pred_check_branch
      %246 = sbr.rel (0) target = $region117
    $region116: #{sga_forward.1} parent=1 // pred_region
      %247 = dma.done [#allocation9], 512
    $region117: #{sga_forward.1} parent=1 // pred_fallthru
      _
    // Predicated region
    $region118: #{sga_forward.1} parent=1 // pred_check
      _
    $region119: #{sga_forward.1} parent=1 // pred_check_branch
      %249 = sbr.rel (0) target = $region121
    $region120: #{sga_forward.1} parent=1 // pred_region
      %250 = dma.done [#allocation12], 16
    $region121: #{sga_forward.1} parent=1 // pred_fallthru
      _
    // Predicated region
    $region122: #{sga_forward.1} parent=1 // pred_check
      _
    $region123: #{sga_forward.1} parent=1 // pred_check_branch
      %252 = sbr.rel (0) target = $region125
    $region124: #{sga_forward.1} parent=1 // pred_region
      %253 = dma.done [#allocation12], 512
    $region125: #{sga_forward.1} parent=1 // pred_fallthru
      _
    // Predicated region
    $region126: #{sga_forward.1} parent=1 // pred_check
      _
    $region127: #{sga_forward.1} parent=1 // pred_check_branch
      %255 = sbr.rel (0) target = $region129
    $region128: #{sga_forward.1} parent=1 // pred_region
      %256 = dma.done [#allocation15], 16
    $region129: #{sga_forward.1} parent=1 // pred_fallthru
      _
    // Predicated region
    $region130: #{sga_forward.1} parent=1 // pred_check
      _
    $region131: #{sga_forward.1} parent=1 // pred_check_branch
      %258 = sbr.rel (0) target = $region133
    $region132: #{sga_forward.1} parent=1 // pred_region
      %259 = dma.done [#allocation15], 512
    $region133: #{sga_forward.1} parent=1 // pred_fallthru
      _
    // Predicated region
    $region134: #{sga_forward.1} parent=1 // pred_check
      _
    $region135: #{sga_forward.1} parent=1 // pred_check_branch
      %261 = sbr.rel (0) target = $region137
    $region136: #{sga_forward.1} parent=1 // pred_region
      %262 = dma.done [#allocation18], 16
    $region137: #{sga_forward.1} parent=1 // pred_fallthru
      _
    // Predicated region
    $region138: #{sga_forward.1} parent=1 // pred_check
      _
    $region139: #{sga_forward.1} parent=1 // pred_check_branch
      %264 = sbr.rel (0) target = $region141
    $region140: #{sga_forward.1} parent=1 // pred_region
      %265 = dma.done [#allocation18], 16
    $region141: #{sga_forward.1} parent=1 // pred_fallthru
      _
    // Predicated region
    $region142: #{sga_forward.1} parent=1 // pred_check
      _
    $region143: #{sga_forward.1} parent=1 // pred_check_branch
      %267 = sbr.rel (0) target = $region145
    $region144: #{sga_forward.1} parent=1 // pred_region
      %268 = dma.done [#allocation21], 16
    $region145: #{sga_forward.1} parent=1 // pred_fallthru
      _
    // Predicated region
    $region146: #{sga_forward.1} parent=1 // pred_check
      _
    $region147: #{sga_forward.1} parent=1 // pred_check_branch
      %270 = sbr.rel (0) target = $region149
    $region148: #{sga_forward.1} parent=1 // pred_region
      %271 = dma.done [#allocation21], 16
    $region149: #{sga_forward.1} parent=1 // pred_fallthru
      _
    // Predicated region
    $region150: #{sga_forward.1} parent=1 // pred_check
      _
    $region151: #{sga_forward.1} parent=1 // pred_check_branch
      %273 = sbr.rel (0) target = $region153
    $region152: #{sga_forward.1} parent=1 // pred_region
      %274 = dma.done [#allocation24], 16
    $region153: #{sga_forward.1} parent=1 // pred_fallthru
      _
    // Predicated region
    $region154: #{sga_forward.1} parent=1 // pred_check
      _
    $region155: #{sga_forward.1} parent=1 // pred_check_branch
      %276 = sbr.rel (0) target = $region157
    $region156: #{sga_forward.1} parent=1 // pred_region
      %277 = dma.done [#allocation24], 16
    $region157: #{sga_forward.1} parent=1 // pred_fallthru
      _
    // Predicated region
    $region158: #{sga_forward.1} parent=1 // pred_check
      _
    $region159: #{sga_forward.1} parent=1 // pred_check_branch
      %279 = sbr.rel (0) target = $region161
    $region160: #{sga_forward.1} parent=1 // pred_region
      %280 = dma.done [#allocation27], 16
    $region161: #{sga_forward.1} parent=1 // pred_fallthru
      _
    // Predicated region
    $region162: #{sga_forward.1} parent=1 // pred_check
      _
    $region163: #{sga_forward.1} parent=1 // pred_check_branch
      %282 = sbr.rel (0) target = $region165
    $region164: #{sga_forward.1} parent=1 // pred_region
      %283 = dma.done [#allocation27], 16
    $region165: #{sga_forward.1} parent=1 // pred_fallthru
      _
    %v284 = vld [vmem:[#allocation2] sm:$0xff]
    %v285 = vld [vmem:[#allocation2 + $0x8] sm:$0xff]
    %v286 = vld [vmem:[%s1] sm:$0xff]
    %v287 = vld [vmem:[%s1 + $0x8] sm:$0xff]
    %v288 = vld [vmem:[%s1 + $0x10] sm:$0xff]
    %v289 = vld [vmem:[%s1 + $0x18] sm:$0xff]
    %v290 = vld [vmem:[%s4] sm:$0xff]
    %v291 = vld [vmem:[%s4 + $0x8] sm:$0xff]
    %v292 = vld [vmem:[%s4 + $0x10] sm:$0xff]
    %v293 = vld [vmem:[%s4 + $0x18] sm:$0xff]
    %v294 = vld [vmem:[#allocation5] sm:$0x1]
    %v296 = vlaneseq
    %v297 = vshrl.u32 %v296, 7
    %v298 = vsub.s32 0, %v297
    %v299 = vrot.slane %v294, %v298
    %vm301 = vcmask 261120
    %v303 = vsel %vm301, %v284, 0
    %v306 = vsel %vm301, %v285, 0
    %308 = vmatprep.subr.mxu0 0.0
    %309 = vmatpush1.msra.mxu0 0.0
    %310 = vmatprep.subr.mxu0 0.0
    %311 = vmatpush1.msra.mxu0 0.0
    %312 = vmatprep.subr.mxu0 0.0
    %313 = vmatpush1.msra.mxu0 0.0
    %314 = vmatprep.subr.mxu0 0.0
    %315 = vmatpush1.msra.mxu0 0.0
    %316 = vmatprep.subr.mxu0 0.0
    %317 = vmatpush1.msra.mxu0 0.0
    %318 = vmatprep.subr.mxu0 0.0
    %319 = vmatpush1.msra.mxu0 0.0
    %320 = vmatprep.subr.mxu0 0.0
    %321 = vmatpush1.msra.mxu0 0.0
    %322 = vmatprep.subr.mxu0 0.0
    %323 = vmatpush1.msra.mxu0 0.0
    %324 = vmatprep.subr.mxu0 0.0
    %325 = vmatpush1.msra.mxu0 0.0
    %326 = vmatprep.subr.mxu0 0.0
    %327 = vmatpush1.msra.mxu0 0.0
    %328 = vmatprep.subr.mxu0 0.0
    %329 = vmatpush1.msra.mxu0 0.0
    %330 = vmatprep.subr.mxu0 0.0
    %331 = vmatpush1.msra.mxu0 0.0
    %332 = vmatprep.subr.mxu0 0.0
    %333 = vmatpush1.msra.mxu0 %v293
    %334 = vmatprep.subr.mxu0 0.0
    %335 = vmatpush1.msra.mxu0 %v292
    %336 = vmatprep.subr.mxu0 0.0
    %337 = vmatpush1.msra.mxu0 %v291
    %338 = vmatprep.subr.mxu0 0.0
    %339 = vmatpush1.msra.mxu0 %v290
    %340 = vmatprep.subr.mxu0 0.0
    %341 = vmatpush2.msra.mxu0 0.0
    %342 = vmatprep.subr.mxu0 0.0
    %343 = vmatpush2.msra.mxu0 0.0
    %344 = vmatprep.subr.mxu0 0.0
    %345 = vmatpush2.msra.mxu0 0.0
    %346 = vmatprep.subr.mxu0 0.0
    %347 = vmatpush2.msra.mxu0 0.0
    %348 = vmatprep.subr.mxu0 0.0
    %349 = vmatpush2.msra.mxu0 0.0
    %350 = vmatprep.subr.mxu0 0.0
    %351 = vmatpush2.msra.mxu0 0.0
    %352 = vmatprep.subr.mxu0 0.0
    %353 = vmatpush2.msra.mxu0 0.0
    %354 = vmatprep.subr.mxu0 0.0
    %355 = vmatpush2.msra.mxu0 0.0
    %356 = vmatprep.subr.mxu0 0.0
    %357 = vmatpush2.msra.mxu0 0.0
    %358 = vmatprep.subr.mxu0 0.0
    %359 = vmatpush2.msra.mxu0 0.0
    %360 = vmatprep.subr.mxu0 0.0
    %361 = vmatpush2.msra.mxu0 0.0
    %362 = vmatprep.subr.mxu0 0.0
    %363 = vmatpush2.msra.mxu0 0.0
    %364 = vmatprep.subr.mxu0 0.0
    %365 = vmatpush2.msra.mxu0 0.0
    %366 = vmatprep.subr.mxu0 0.0
    %367 = vmatpush2.msra.mxu0 0.0
    %368 = vmatprep.subr.mxu0 0.0
    %369 = vmatpush2.msra.mxu0 0.0
    %370 = vmatprep.subr.mxu0 0.0
    %371 = vmatpush2.msra.mxu0 0.0
    %372 = vmatprep.mubr.f32.mxu0 0.0
    %373 = vmatmul.mubr.f32.gmra.mxu0 %v303
    %v374 = vpop.f32.mrf.mxu0
    %v375 = vadd.f32 %v299, %v374
    %v376 = vpop.f32.mrf.mxu0
    %377 = vmatprep.mubr.f32.mxu0 0.0
    %378 = vmatmul.mubr.f32.gmra.mxu0 %v306
    %v379 = vpop.f32.mrf.mxu0
    %v380 = vadd.f32 %v299, %v379
    %v381 = vpop.f32.mrf.mxu0
    %382 = vdwg.mxu0
    %v383 = vld [vmem:[%s2] sm:$0x3]
    %v384 = vld [vmem:[%s6] sm:$0xff]
    %v385 = vld [vmem:[%s6 + $0x8] sm:$0xff]
    %v386 = vld [vmem:[%s6 + $0x10] sm:$0xff]
    %v387 = vld [vmem:[%s6 + $0x18] sm:$0xff]
    %v388 = vld [vmem:[#allocation7] sm:$0x1]
    %vm389 = vcmp.gt.f32.partialorder %v383, 0.0
    %v390 = vsel %vm389, -1e+09, 0.0
    %v393 = vunpack.c.l.s4 1966171168
    %v394 = vunpack.c.0.s8 %v393
    %v395 = vlaneseq
    %v396 = vshrl.u32 %v395, 7
    %v397 = vsub.s32 %v394, %v396
    %v398 = vrot.slane %v390, %v397
    %v399 = vcombine.high %v398, %v398
    %v401 = vunpack.c.l.s4 1966171168
    %v402 = vunpack.c.0.s8 %v401
    %v403 = vlaneseq
    %v404 = vshrl.u32 %v403, 7
    %v405 = vsub.s32 %v402, %v404
    %v406 = vrot.slane %v398, %v405
    %v408 = vunpack.c.l.s4 1966171168
    %v409 = vunpack.c.0.s8 %v408
    %v410 = vlaneseq
    %v411 = vshrl.u32 %v410, 7
    %v412 = vsub.s32 %v409, %v411
    %v413 = vrot.slane %v399, %v412
    %v414 = vlaneseq
    %v415 = vshrl.u32 %v414, 7
    %v416 = vsub.s32 0, %v415
    %v417 = vrot.slane %v406, %v416
    %v418 = vlaneseq
    %v419 = vshrl.u32 %v418, 7
    %v420 = vsub.s32 0, %v419
    %v421 = vrot.slane %v413, %v420
    %425 = vrot.lane.b32.xlu0 %v375, 96
    %v426 = vpop.permute.xlu0 %425
    %vm427 = vcmask 64512
    %v428 = vsel %vm427, %v375, 0
    %v430 = vsel %vm427, %v426, 0
    %432 = vmatprep.subr.mxu0 0.0
    %433 = vmatpush1.xpose.msra.mxu0 0.0
    %434 = vmatprep.subr.mxu0 0.0
    %435 = vmatpush1.xpose.msra.mxu0 0.0
    %436 = vmatprep.subr.mxu0 0.0
    %437 = vmatpush1.xpose.msra.mxu0 0.0
    %438 = vmatprep.subr.mxu0 0.0
    %439 = vmatpush1.xpose.msra.mxu0 0.0
    %440 = vmatprep.subr.mxu0 0.0
    %441 = vmatpush1.xpose.msra.mxu0 0.0
    %442 = vmatprep.subr.mxu0 0.0
    %443 = vmatpush1.xpose.msra.mxu0 0.0
    %444 = vmatprep.subr.mxu0 0.0
    %445 = vmatpush1.xpose.msra.mxu0 0.0
    %446 = vmatprep.subr.mxu0 0.0
    %447 = vmatpush1.xpose.msra.mxu0 0.0
    %448 = vmatprep.subr.mxu0 0.0
    %449 = vmatpush1.xpose.msra.mxu0 0.0
    %450 = vmatprep.subr.mxu0 0.0
    %451 = vmatpush1.xpose.msra.mxu0 0.0
    %452 = vmatprep.subr.mxu0 0.0
    %453 = vmatpush1.xpose.msra.mxu0 0.0
    %454 = vmatprep.subr.mxu0 0.0
    %455 = vmatpush1.xpose.msra.mxu0 0.0
    %456 = vmatprep.subr.mxu0 0.0
    %457 = vmatpush1.xpose.msra.mxu0 0.0
    %458 = vmatprep.subr.mxu0 0.0
    %459 = vmatpush1.xpose.msra.mxu0 0.0
    %460 = vmatprep.subr.mxu0 0.0
    %461 = vmatpush1.xpose.msra.mxu0 0.0
    %462 = vmatprep.subr.mxu0 0.0
    %463 = vmatpush1.xpose.msra.mxu0 %v430
    %464 = vmatprep.subr.mxu0 0.0
    %465 = vmatpush2.xpose.msra.mxu0 0.0
    %466 = vmatprep.subr.mxu0 0.0
    %467 = vmatpush2.xpose.msra.mxu0 0.0
    %468 = vmatprep.subr.mxu0 0.0
    %469 = vmatpush2.xpose.msra.mxu0 0.0
    %470 = vmatprep.subr.mxu0 0.0
    %471 = vmatpush2.xpose.msra.mxu0 0.0
    %472 = vmatprep.subr.mxu0 0.0
    %473 = vmatpush2.xpose.msra.mxu0 0.0
    %474 = vmatprep.subr.mxu0 0.0
    %475 = vmatpush2.xpose.msra.mxu0 0.0
    %476 = vmatprep.subr.mxu0 0.0
    %477 = vmatpush2.xpose.msra.mxu0 0.0
    %478 = vmatprep.subr.mxu0 0.0
    %479 = vmatpush2.xpose.msra.mxu0 0.0
    %480 = vmatprep.subr.mxu0 0.0
    %481 = vmatpush2.xpose.msra.mxu0 0.0
    %482 = vmatprep.subr.mxu0 0.0
    %483 = vmatpush2.xpose.msra.mxu0 0.0
    %484 = vmatprep.subr.mxu0 0.0
    %485 = vmatpush2.xpose.msra.mxu0 0.0
    %486 = vmatprep.subr.mxu0 0.0
    %487 = vmatpush2.xpose.msra.mxu0 0.0
    %488 = vmatprep.subr.mxu0 0.0
    %489 = vmatpush2.xpose.msra.mxu0 0.0
    %490 = vmatprep.subr.mxu0 0.0
    %491 = vmatpush2.xpose.msra.mxu0 0.0
    %492 = vmatprep.subr.mxu0 0.0
    %493 = vmatpush2.xpose.msra.mxu0 0.0
    %494 = vmatprep.subr.mxu0 0.0
    %495 = vmatpush2.xpose.msra.mxu0 0.0
    %496 = vmatprep.mubr.f32.mxu0 0.0
    %497 = vmatmul.mubr.f32.gmra.mxu0 %v428
    %v498 = vpop.f32.mrf.mxu0
    %v499 = vadd.f32 0.0, %v498
    %v500 = vpop.f32.mrf.mxu0
    %501 = vdwg.mxu0
    %503 = vrot.lane.b32.xlu0 %v380, 96
    %v504 = vpop.permute.xlu0 %503
    %v505 = vsel %vm427, %v380, 0
    %v507 = vsel %vm427, %v504, 0
    %509 = vmatprep.subr.mxu0 0.0
    %510 = vmatpush1.xpose.msra.mxu0 0.0
    %511 = vmatprep.subr.mxu0 0.0
    %512 = vmatpush1.xpose.msra.mxu0 0.0
    %513 = vmatprep.subr.mxu0 0.0
    %514 = vmatpush1.xpose.msra.mxu0 0.0
    %515 = vmatprep.subr.mxu0 0.0
    %516 = vmatpush1.xpose.msra.mxu0 0.0
    %517 = vmatprep.subr.mxu0 0.0
    %518 = vmatpush1.xpose.msra.mxu0 0.0
    %519 = vmatprep.subr.mxu0 0.0
    %520 = vmatpush1.xpose.msra.mxu0 0.0
    %521 = vmatprep.subr.mxu0 0.0
    %522 = vmatpush1.xpose.msra.mxu0 0.0
    %523 = vmatprep.subr.mxu0 0.0
    %524 = vmatpush1.xpose.msra.mxu0 0.0
    %525 = vmatprep.subr.mxu0 0.0
    %526 = vmatpush1.xpose.msra.mxu0 0.0
    %527 = vmatprep.subr.mxu0 0.0
    %528 = vmatpush1.xpose.msra.mxu0 0.0
    %529 = vmatprep.subr.mxu0 0.0
    %530 = vmatpush1.xpose.msra.mxu0 0.0
    %531 = vmatprep.subr.mxu0 0.0
    %532 = vmatpush1.xpose.msra.mxu0 0.0
    %533 = vmatprep.subr.mxu0 0.0
    %534 = vmatpush1.xpose.msra.mxu0 0.0
    %535 = vmatprep.subr.mxu0 0.0
    %536 = vmatpush1.xpose.msra.mxu0 0.0
    %537 = vmatprep.subr.mxu0 0.0
    %538 = vmatpush1.xpose.msra.mxu0 0.0
    %539 = vmatprep.subr.mxu0 0.0
    %540 = vmatpush1.xpose.msra.mxu0 %v507
    %541 = vmatprep.subr.mxu0 0.0
    %542 = vmatpush2.xpose.msra.mxu0 0.0
    %543 = vmatprep.subr.mxu0 0.0
    %544 = vmatpush2.xpose.msra.mxu0 0.0
    %545 = vmatprep.subr.mxu0 0.0
    %546 = vmatpush2.xpose.msra.mxu0 0.0
    %547 = vmatprep.subr.mxu0 0.0
    %548 = vmatpush2.xpose.msra.mxu0 0.0
    %549 = vmatprep.subr.mxu0 0.0
    %550 = vmatpush2.xpose.msra.mxu0 0.0
    %551 = vmatprep.subr.mxu0 0.0
    %552 = vmatpush2.xpose.msra.mxu0 0.0
    %553 = vmatprep.subr.mxu0 0.0
    %554 = vmatpush2.xpose.msra.mxu0 0.0
    %555 = vmatprep.subr.mxu0 0.0
    %556 = vmatpush2.xpose.msra.mxu0 0.0
    %557 = vmatprep.subr.mxu0 0.0
    %558 = vmatpush2.xpose.msra.mxu0 0.0
    %559 = vmatprep.subr.mxu0 0.0
    %560 = vmatpush2.xpose.msra.mxu0 0.0
    %561 = vmatprep.subr.mxu0 0.0
    %562 = vmatpush2.xpose.msra.mxu0 0.0
    %563 = vmatprep.subr.mxu0 0.0
    %564 = vmatpush2.xpose.msra.mxu0 0.0
    %565 = vmatprep.subr.mxu0 0.0
    %566 = vmatpush2.xpose.msra.mxu0 0.0
    %567 = vmatprep.subr.mxu0 0.0
    %568 = vmatpush2.xpose.msra.mxu0 0.0
    %569 = vmatprep.subr.mxu0 0.0
    %570 = vmatpush2.xpose.msra.mxu0 0.0
    %571 = vmatprep.subr.mxu0 0.0
    %572 = vmatpush2.xpose.msra.mxu0 0.0
    %573 = vmatprep.mubr.f32.mxu0 0.0
    %574 = vmatmul.mubr.f32.gmra.mxu0 %v505
    %v575 = vpop.f32.mrf.mxu0
    %v576 = vadd.f32 0.0, %v575
    %v577 = vpop.f32.mrf.mxu0
    %578 = vdwg.mxu0
    %v579 = vmul.f32 %v499, 0.35355338
    %v580 = vmul.f32 %v576, 0.35355338
    %v581 = vadd.f32 %v579, %v417
    %v582 = vadd.f32 %v580, %v421
    %v583 = vsel %vm427, %v581, -inf
    %584 = vmax.xlane.f32.xlu0 %v583
    %v585 = vpop.xlane.xlu0 %584
    %v586 = vsel %vm427, %v582, -inf
    %587 = vmax.xlane.f32.xlu0 %v586
    %v588 = vpop.xlane.xlu0 %587
    %v589 = vsub.f32 %v581, %v585
    %v590 = vsub.f32 %v582, %v588
    %v591 = vmul.f32 %v589, 1.442695
    %v592 = vpow.pop %v591
    %v593 = vmul.f32 %v590, 1.442695
    %v594 = vpow.pop %v593
    %v595 = vsel %vm427, %v592, 0.0
    %596 = vadd.xlane.f32.xlu0 %v595
    %v597 = vpop.xlane.xlu0 %596
    %v598 = vsel %vm427, %v594, 0.0
    %599 = vadd.xlane.f32.xlu0 %v598
    %v600 = vpop.xlane.xlu0 %599
    %v601 = vrcp.pop %v597
    %v602 = vmul.f32 %v592, %v601
    %v603 = vrcp.pop %v600
    %v604 = vmul.f32 %v594, %v603
    %605 = vrot.lane.b32.xlu0 %v375, 64
    %v606 = vpop.permute.xlu0 %605
    %v609 = vsel %vm427, %v602, 0
    %611 = vmatprep.subr.mxu0 0.0
    %612 = vmatpush1.msra.mxu0 0.0
    %613 = vmatprep.subr.mxu0 0.0
    %614 = vmatpush1.msra.mxu0 0.0
    %615 = vmatprep.subr.mxu0 0.0
    %616 = vmatpush1.msra.mxu0 0.0
    %617 = vmatprep.subr.mxu0 0.0
    %618 = vmatpush1.msra.mxu0 0.0
    %619 = vmatprep.subr.mxu0 0.0
    %620 = vmatpush1.msra.mxu0 0.0
    %621 = vmatprep.subr.mxu0 0.0
    %622 = vmatpush1.msra.mxu0 0.0
    %623 = vmatprep.subr.mxu0 0.0
    %624 = vmatpush1.msra.mxu0 0.0
    %625 = vmatprep.subr.mxu0 0.0
    %626 = vmatpush1.msra.mxu0 0.0
    %627 = vmatprep.subr.mxu0 0.0
    %628 = vmatpush1.msra.mxu0 0.0
    %629 = vmatprep.subr.mxu0 0.0
    %630 = vmatpush1.msra.mxu0 0.0
    %631 = vmatprep.subr.mxu0 0.0
    %632 = vmatpush1.msra.mxu0 0.0
    %633 = vmatprep.subr.mxu0 0.0
    %634 = vmatpush1.msra.mxu0 0.0
    %635 = vmatprep.subr.mxu0 0.0
    %636 = vmatpush1.msra.mxu0 0.0
    %637 = vmatprep.subr.mxu0 0.0
    %638 = vmatpush1.msra.mxu0 0.0
    %639 = vmatprep.subr.mxu0 0.0
    %640 = vmatpush1.msra.mxu0 0.0
    %641 = vmatprep.subr.mxu0 0.0
    %642 = vmatpush1.msra.mxu0 %v606
    %643 = vmatprep.subr.mxu0 0.0
    %644 = vmatpush2.msra.mxu0 0.0
    %645 = vmatprep.subr.mxu0 0.0
    %646 = vmatpush2.msra.mxu0 0.0
    %647 = vmatprep.subr.mxu0 0.0
    %648 = vmatpush2.msra.mxu0 0.0
    %649 = vmatprep.subr.mxu0 0.0
    %650 = vmatpush2.msra.mxu0 0.0
    %651 = vmatprep.subr.mxu0 0.0
    %652 = vmatpush2.msra.mxu0 0.0
    %653 = vmatprep.subr.mxu0 0.0
    %654 = vmatpush2.msra.mxu0 0.0
    %655 = vmatprep.subr.mxu0 0.0
    %656 = vmatpush2.msra.mxu0 0.0
    %657 = vmatprep.subr.mxu0 0.0
    %658 = vmatpush2.msra.mxu0 0.0
    %659 = vmatprep.subr.mxu0 0.0
    %660 = vmatpush2.msra.mxu0 0.0
    %661 = vmatprep.subr.mxu0 0.0
    %662 = vmatpush2.msra.mxu0 0.0
    %663 = vmatprep.subr.mxu0 0.0
    %664 = vmatpush2.msra.mxu0 0.0
    %665 = vmatprep.subr.mxu0 0.0
    %666 = vmatpush2.msra.mxu0 0.0
    %667 = vmatprep.subr.mxu0 0.0
    %668 = vmatpush2.msra.mxu0 0.0
    %669 = vmatprep.subr.mxu0 0.0
    %670 = vmatpush2.msra.mxu0 0.0
    %671 = vmatprep.subr.mxu0 0.0
    %672 = vmatpush2.msra.mxu0 0.0
    %673 = vmatprep.subr.mxu0 0.0
    %674 = vmatpush2.msra.mxu0 0.0
    %675 = vmatprep.mubr.f32.mxu0 0.0
    %676 = vmatmul.mubr.f32.gmra.mxu0 %v609
    %v677 = vpop.f32.mrf.mxu0
    %v678 = vadd.f32 0.0, %v677
    %v679 = vpop.f32.mrf.mxu0
    %680 = vdwg.mxu0
    %681 = vrot.lane.b32.xlu0 %v380, 64
    %v682 = vpop.permute.xlu0 %681
    %v685 = vsel %vm427, %v604, 0
    %687 = vmatprep.subr.mxu0 0.0
    %688 = vmatpush1.msra.mxu0 0.0
    %689 = vmatprep.subr.mxu0 0.0
    %690 = vmatpush1.msra.mxu0 0.0
    %691 = vmatprep.subr.mxu0 0.0
    %692 = vmatpush1.msra.mxu0 0.0
    %693 = vmatprep.subr.mxu0 0.0
    %694 = vmatpush1.msra.mxu0 0.0
    %695 = vmatprep.subr.mxu0 0.0
    %696 = vmatpush1.msra.mxu0 0.0
    %697 = vmatprep.subr.mxu0 0.0
    %698 = vmatpush1.msra.mxu0 0.0
    %699 = vmatprep.subr.mxu0 0.0
    %700 = vmatpush1.msra.mxu0 0.0
    %701 = vmatprep.subr.mxu0 0.0
    %702 = vmatpush1.msra.mxu0 0.0
    %703 = vmatprep.subr.mxu0 0.0
    %704 = vmatpush1.msra.mxu0 0.0
    %705 = vmatprep.subr.mxu0 0.0
    %706 = vmatpush1.msra.mxu0 0.0
    %707 = vmatprep.subr.mxu0 0.0
    %708 = vmatpush1.msra.mxu0 0.0
    %709 = vmatprep.subr.mxu0 0.0
    %710 = vmatpush1.msra.mxu0 0.0
    %711 = vmatprep.subr.mxu0 0.0
    %712 = vmatpush1.msra.mxu0 0.0
    %713 = vmatprep.subr.mxu0 0.0
    %714 = vmatpush1.msra.mxu0 0.0
    %715 = vmatprep.subr.mxu0 0.0
    %716 = vmatpush1.msra.mxu0 0.0
    %717 = vmatprep.subr.mxu0 0.0
    %718 = vmatpush1.msra.mxu0 %v682
    %719 = vmatprep.subr.mxu0 0.0
    %720 = vmatpush2.msra.mxu0 0.0
    %721 = vmatprep.subr.mxu0 0.0
    %722 = vmatpush2.msra.mxu0 0.0
    %723 = vmatprep.subr.mxu0 0.0
    %724 = vmatpush2.msra.mxu0 0.0
    %725 = vmatprep.subr.mxu0 0.0
    %726 = vmatpush2.msra.mxu0 0.0
    %727 = vmatprep.subr.mxu0 0.0
    %728 = vmatpush2.msra.mxu0 0.0
    %729 = vmatprep.subr.mxu0 0.0
    %730 = vmatpush2.msra.mxu0 0.0
    %731 = vmatprep.subr.mxu0 0.0
    %732 = vmatpush2.msra.mxu0 0.0
    %733 = vmatprep.subr.mxu0 0.0
    %734 = vmatpush2.msra.mxu0 0.0
    %735 = vmatprep.subr.mxu0 0.0
    %736 = vmatpush2.msra.mxu0 0.0
    %737 = vmatprep.subr.mxu0 0.0
    %738 = vmatpush2.msra.mxu0 0.0
    %739 = vmatprep.subr.mxu0 0.0
    %740 = vmatpush2.msra.mxu0 0.0
    %741 = vmatprep.subr.mxu0 0.0
    %742 = vmatpush2.msra.mxu0 0.0
    %743 = vmatprep.subr.mxu0 0.0
    %744 = vmatpush2.msra.mxu0 0.0
    %745 = vmatprep.subr.mxu0 0.0
    %746 = vmatpush2.msra.mxu0 0.0
    %747 = vmatprep.subr.mxu0 0.0
    %748 = vmatpush2.msra.mxu0 0.0
    %749 = vmatprep.subr.mxu0 0.0
    %750 = vmatpush2.msra.mxu0 0.0
    %751 = vmatprep.mubr.f32.mxu0 0.0
    %752 = vmatmul.mubr.f32.gmra.mxu0 %v685
    %v753 = vpop.f32.mrf.mxu0
    %v754 = vadd.f32 0.0, %v753
    %v755 = vpop.f32.mrf.mxu0
    %756 = vdwg.mxu0
    %757 = vrot.lane.b32.xlu0 %v375, 120
    %v758 = vpop.permute.xlu0 %757
    %759 = vrot.lane.b32.xlu0 %v375, 88
    %v760 = vpop.permute.xlu0 %759
    %v761 = vsel %vm427, %v758, 0
    %v763 = vsel %vm427, %v760, 0
    %765 = vmatprep.subr.mxu0 0.0
    %766 = vmatpush1.xpose.msra.mxu0 0.0
    %767 = vmatprep.subr.mxu0 0.0
    %768 = vmatpush1.xpose.msra.mxu0 0.0
    %769 = vmatprep.subr.mxu0 0.0
    %770 = vmatpush1.xpose.msra.mxu0 0.0
    %771 = vmatprep.subr.mxu0 0.0
    %772 = vmatpush1.xpose.msra.mxu0 0.0
    %773 = vmatprep.subr.mxu0 0.0
    %774 = vmatpush1.xpose.msra.mxu0 0.0
    %775 = vmatprep.subr.mxu0 0.0
    %776 = vmatpush1.xpose.msra.mxu0 0.0
    %777 = vmatprep.subr.mxu0 0.0
    %778 = vmatpush1.xpose.msra.mxu0 0.0
    %779 = vmatprep.subr.mxu0 0.0
    %780 = vmatpush1.xpose.msra.mxu0 0.0
    %781 = vmatprep.subr.mxu0 0.0
    %782 = vmatpush1.xpose.msra.mxu0 0.0
    %783 = vmatprep.subr.mxu0 0.0
    %784 = vmatpush1.xpose.msra.mxu0 0.0
    %785 = vmatprep.subr.mxu0 0.0
    %786 = vmatpush1.xpose.msra.mxu0 0.0
    %787 = vmatprep.subr.mxu0 0.0
    %788 = vmatpush1.xpose.msra.mxu0 0.0
    %789 = vmatprep.subr.mxu0 0.0
    %790 = vmatpush1.xpose.msra.mxu0 0.0
    %791 = vmatprep.subr.mxu0 0.0
    %792 = vmatpush1.xpose.msra.mxu0 0.0
    %793 = vmatprep.subr.mxu0 0.0
    %794 = vmatpush1.xpose.msra.mxu0 0.0
    %795 = vmatprep.subr.mxu0 0.0
    %796 = vmatpush1.xpose.msra.mxu0 %v763
    %797 = vmatprep.subr.mxu0 0.0
    %798 = vmatpush2.xpose.msra.mxu0 0.0
    %799 = vmatprep.subr.mxu0 0.0
    %800 = vmatpush2.xpose.msra.mxu0 0.0
    %801 = vmatprep.subr.mxu0 0.0
    %802 = vmatpush2.xpose.msra.mxu0 0.0
    %803 = vmatprep.subr.mxu0 0.0
    %804 = vmatpush2.xpose.msra.mxu0 0.0
    %805 = vmatprep.subr.mxu0 0.0
    %806 = vmatpush2.xpose.msra.mxu0 0.0
    %807 = vmatprep.subr.mxu0 0.0
    %808 = vmatpush2.xpose.msra.mxu0 0.0
    %809 = vmatprep.subr.mxu0 0.0
    %810 = vmatpush2.xpose.msra.mxu0 0.0
    %811 = vmatprep.subr.mxu0 0.0
    %812 = vmatpush2.xpose.msra.mxu0 0.0
    %813 = vmatprep.subr.mxu0 0.0
    %814 = vmatpush2.xpose.msra.mxu0 0.0
    %815 = vmatprep.subr.mxu0 0.0
    %816 = vmatpush2.xpose.msra.mxu0 0.0
    %817 = vmatprep.subr.mxu0 0.0
    %818 = vmatpush2.xpose.msra.mxu0 0.0
    %819 = vmatprep.subr.mxu0 0.0
    %820 = vmatpush2.xpose.msra.mxu0 0.0
    %821 = vmatprep.subr.mxu0 0.0
    %822 = vmatpush2.xpose.msra.mxu0 0.0
    %823 = vmatprep.subr.mxu0 0.0
    %824 = vmatpush2.xpose.msra.mxu0 0.0
    %825 = vmatprep.subr.mxu0 0.0
    %826 = vmatpush2.xpose.msra.mxu0 0.0
    %827 = vmatprep.subr.mxu0 0.0
    %828 = vmatpush2.xpose.msra.mxu0 0.0
    %829 = vmatprep.mubr.f32.mxu0 0.0
    %830 = vmatmul.mubr.f32.gmra.mxu0 %v761
    %v831 = vpop.f32.mrf.mxu0
    %v832 = vadd.f32 0.0, %v831
    %v833 = vpop.f32.mrf.mxu0
    %834 = vdwg.mxu0
    %835 = vrot.lane.b32.xlu0 %v380, 120
    %v836 = vpop.permute.xlu0 %835
    %837 = vrot.lane.b32.xlu0 %v380, 88
    %v838 = vpop.permute.xlu0 %837
    %v839 = vsel %vm427, %v836, 0
    %v841 = vsel %vm427, %v838, 0
    %843 = vmatprep.subr.mxu0 0.0
    %844 = vmatpush1.xpose.msra.mxu0 0.0
    %845 = vmatprep.subr.mxu0 0.0
    %846 = vmatpush1.xpose.msra.mxu0 0.0
    %847 = vmatprep.subr.mxu0 0.0
    %848 = vmatpush1.xpose.msra.mxu0 0.0
    %849 = vmatprep.subr.mxu0 0.0
    %850 = vmatpush1.xpose.msra.mxu0 0.0
    %851 = vmatprep.subr.mxu0 0.0
    %852 = vmatpush1.xpose.msra.mxu0 0.0
    %853 = vmatprep.subr.mxu0 0.0
    %854 = vmatpush1.xpose.msra.mxu0 0.0
    %855 = vmatprep.subr.mxu0 0.0
    %856 = vmatpush1.xpose.msra.mxu0 0.0
    %857 = vmatprep.subr.mxu0 0.0
    %858 = vmatpush1.xpose.msra.mxu0 0.0
    %859 = vmatprep.subr.mxu0 0.0
    %860 = vmatpush1.xpose.msra.mxu0 0.0
    %861 = vmatprep.subr.mxu0 0.0
    %862 = vmatpush1.xpose.msra.mxu0 0.0
    %863 = vmatprep.subr.mxu0 0.0
    %864 = vmatpush1.xpose.msra.mxu0 0.0
    %865 = vmatprep.subr.mxu0 0.0
    %866 = vmatpush1.xpose.msra.mxu0 0.0
    %867 = vmatprep.subr.mxu0 0.0
    %868 = vmatpush1.xpose.msra.mxu0 0.0
    %869 = vmatprep.subr.mxu0 0.0
    %870 = vmatpush1.xpose.msra.mxu0 0.0
    %871 = vmatprep.subr.mxu0 0.0
    %872 = vmatpush1.xpose.msra.mxu0 0.0
    %873 = vmatprep.subr.mxu0 0.0
    %874 = vmatpush1.xpose.msra.mxu0 %v841
    %875 = vmatprep.subr.mxu0 0.0
    %876 = vmatpush2.xpose.msra.mxu0 0.0
    %877 = vmatprep.subr.mxu0 0.0
    %878 = vmatpush2.xpose.msra.mxu0 0.0
    %879 = vmatprep.subr.mxu0 0.0
    %880 = vmatpush2.xpose.msra.mxu0 0.0
    %881 = vmatprep.subr.mxu0 0.0
    %882 = vmatpush2.xpose.msra.mxu0 0.0
    %883 = vmatprep.subr.mxu0 0.0
    %884 = vmatpush2.xpose.msra.mxu0 0.0
    %885 = vmatprep.subr.mxu0 0.0
    %886 = vmatpush2.xpose.msra.mxu0 0.0
    %887 = vmatprep.subr.mxu0 0.0
    %888 = vmatpush2.xpose.msra.mxu0 0.0
    %889 = vmatprep.subr.mxu0 0.0
    %890 = vmatpush2.xpose.msra.mxu0 0.0
    %891 = vmatprep.subr.mxu0 0.0
    %892 = vmatpush2.xpose.msra.mxu0 0.0
    %893 = vmatprep.subr.mxu0 0.0
    %894 = vmatpush2.xpose.msra.mxu0 0.0
    %895 = vmatprep.subr.mxu0 0.0
    %896 = vmatpush2.xpose.msra.mxu0 0.0
    %897 = vmatprep.subr.mxu0 0.0
    %898 = vmatpush2.xpose.msra.mxu0 0.0
    %899 = vmatprep.subr.mxu0 0.0
    %900 = vmatpush2.xpose.msra.mxu0 0.0
    %901 = vmatprep.subr.mxu0 0.0
    %902 = vmatpush2.xpose.msra.mxu0 0.0
    %903 = vmatprep.subr.mxu0 0.0
    %904 = vmatpush2.xpose.msra.mxu0 0.0
    %905 = vmatprep.subr.mxu0 0.0
    %906 = vmatpush2.xpose.msra.mxu0 0.0
    %907 = vmatprep.mubr.f32.mxu0 0.0
    %908 = vmatmul.mubr.f32.gmra.mxu0 %v839
    %v909 = vpop.f32.mrf.mxu0
    %v910 = vadd.f32 0.0, %v909
    %v911 = vpop.f32.mrf.mxu0
    %912 = vdwg.mxu0
    %v913 = vmul.f32 %v832, 0.35355338
    %v914 = vmul.f32 %v910, 0.35355338
    %v915 = vadd.f32 %v913, %v417
    %v916 = vadd.f32 %v914, %v421
    %v917 = vsel %vm427, %v915, -inf
    %918 = vmax.xlane.f32.xlu0 %v917
    %v919 = vpop.xlane.xlu0 %918
    %v920 = vsel %vm427, %v916, -inf
    %921 = vmax.xlane.f32.xlu0 %v920
    %v922 = vpop.xlane.xlu0 %921
    %v923 = vsub.f32 %v915, %v919
    %v924 = vsub.f32 %v916, %v922
    %v925 = vmul.f32 %v923, 1.442695
    %v926 = vpow.pop %v925
    %v927 = vmul.f32 %v924, 1.442695
    %v928 = vpow.pop %v927
    %v929 = vsel %vm427, %v926, 0.0
    %930 = vadd.xlane.f32.xlu0 %v929
    %v931 = vpop.xlane.xlu0 %930
    %v932 = vsel %vm427, %v928, 0.0
    %933 = vadd.xlane.f32.xlu0 %v932
    %v934 = vpop.xlane.xlu0 %933
    %v935 = vrcp.pop %v931
    %v936 = vmul.f32 %v926, %v935
    %v937 = vrcp.pop %v934
    %v938 = vmul.f32 %v928, %v937
    %939 = vrot.lane.b32.xlu0 %v375, 56
    %v940 = vpop.permute.xlu0 %939
    %v943 = vsel %vm427, %v936, 0
    %945 = vmatprep.subr.mxu0 0.0
    %946 = vmatpush1.msra.mxu0 0.0
    %947 = vmatprep.subr.mxu0 0.0
    %948 = vmatpush1.msra.mxu0 0.0
    %949 = vmatprep.subr.mxu0 0.0
    %950 = vmatpush1.msra.mxu0 0.0
    %951 = vmatprep.subr.mxu0 0.0
    %952 = vmatpush1.msra.mxu0 0.0
    %953 = vmatprep.subr.mxu0 0.0
    %954 = vmatpush1.msra.mxu0 0.0
    %955 = vmatprep.subr.mxu0 0.0
    %956 = vmatpush1.msra.mxu0 0.0
    %957 = vmatprep.subr.mxu0 0.0
    %958 = vmatpush1.msra.mxu0 0.0
    %959 = vmatprep.subr.mxu0 0.0
    %960 = vmatpush1.msra.mxu0 0.0
    %961 = vmatprep.subr.mxu0 0.0
    %962 = vmatpush1.msra.mxu0 0.0
    %963 = vmatprep.subr.mxu0 0.0
    %964 = vmatpush1.msra.mxu0 0.0
    %965 = vmatprep.subr.mxu0 0.0
    %966 = vmatpush1.msra.mxu0 0.0
    %967 = vmatprep.subr.mxu0 0.0
    %968 = vmatpush1.msra.mxu0 0.0
    %969 = vmatprep.subr.mxu0 0.0
    %970 = vmatpush1.msra.mxu0 0.0
    %971 = vmatprep.subr.mxu0 0.0
    %972 = vmatpush1.msra.mxu0 0.0
    %973 = vmatprep.subr.mxu0 0.0
    %974 = vmatpush1.msra.mxu0 0.0
    %975 = vmatprep.subr.mxu0 0.0
    %976 = vmatpush1.msra.mxu0 %v940
    %977 = vmatprep.subr.mxu0 0.0
    %978 = vmatpush2.msra.mxu0 0.0
    %979 = vmatprep.subr.mxu0 0.0
    %980 = vmatpush2.msra.mxu0 0.0
    %981 = vmatprep.subr.mxu0 0.0
    %982 = vmatpush2.msra.mxu0 0.0
    %983 = vmatprep.subr.mxu0 0.0
    %984 = vmatpush2.msra.mxu0 0.0
    %985 = vmatprep.subr.mxu0 0.0
    %986 = vmatpush2.msra.mxu0 0.0
    %987 = vmatprep.subr.mxu0 0.0
    %988 = vmatpush2.msra.mxu0 0.0
    %989 = vmatprep.subr.mxu0 0.0
    %990 = vmatpush2.msra.mxu0 0.0
    %991 = vmatprep.subr.mxu0 0.0
    %992 = vmatpush2.msra.mxu0 0.0
    %993 = vmatprep.subr.mxu0 0.0
    %994 = vmatpush2.msra.mxu0 0.0
    %995 = vmatprep.subr.mxu0 0.0
    %996 = vmatpush2.msra.mxu0 0.0
    %997 = vmatprep.subr.mxu0 0.0
    %998 = vmatpush2.msra.mxu0 0.0
    %999 = vmatprep.subr.mxu0 0.0
    %1000 = vmatpush2.msra.mxu0 0.0
    %1001 = vmatprep.subr.mxu0 0.0
    %1002 = vmatpush2.msra.mxu0 0.0
    %1003 = vmatprep.subr.mxu0 0.0
    %1004 = vmatpush2.msra.mxu0 0.0
    %1005 = vmatprep.subr.mxu0 0.0
    %1006 = vmatpush2.msra.mxu0 0.0
    %1007 = vmatprep.subr.mxu0 0.0
    %1008 = vmatpush2.msra.mxu0 0.0
    %1009 = vmatprep.mubr.f32.mxu0 0.0
    %1010 = vmatmul.mubr.f32.gmra.mxu0 %v943
    %v1011 = vpop.f32.mrf.mxu0
    %v1012 = vadd.f32 0.0, %v1011
    %v1013 = vpop.f32.mrf.mxu0
    %1014 = vdwg.mxu0
    %1015 = vrot.lane.b32.xlu0 %v380, 56
    %v1016 = vpop.permute.xlu0 %1015
    %v1019 = vsel %vm427, %v938, 0
    %1021 = vmatprep.subr.mxu0 0.0
    %1022 = vmatpush1.msra.mxu0 0.0
    %1023 = vmatprep.subr.mxu0 0.0
    %1024 = vmatpush1.msra.mxu0 0.0
    %1025 = vmatprep.subr.mxu0 0.0
    %1026 = vmatpush1.msra.mxu0 0.0
    %1027 = vmatprep.subr.mxu0 0.0
    %1028 = vmatpush1.msra.mxu0 0.0
    %1029 = vmatprep.subr.mxu0 0.0
    %1030 = vmatpush1.msra.mxu0 0.0
    %1031 = vmatprep.subr.mxu0 0.0
    %1032 = vmatpush1.msra.mxu0 0.0
    %1033 = vmatprep.subr.mxu0 0.0
    %1034 = vmatpush1.msra.mxu0 0.0
    %1035 = vmatprep.subr.mxu0 0.0
    %1036 = vmatpush1.msra.mxu0 0.0
    %1037 = vmatprep.subr.mxu0 0.0
    %1038 = vmatpush1.msra.mxu0 0.0
    %1039 = vmatprep.subr.mxu0 0.0
    %1040 = vmatpush1.msra.mxu0 0.0
    %1041 = vmatprep.subr.mxu0 0.0
    %1042 = vmatpush1.msra.mxu0 0.0
    %1043 = vmatprep.subr.mxu0 0.0
    %1044 = vmatpush1.msra.mxu0 0.0
    %1045 = vmatprep.subr.mxu0 0.0
    %1046 = vmatpush1.msra.mxu0 0.0
    %1047 = vmatprep.subr.mxu0 0.0
    %1048 = vmatpush1.msra.mxu0 0.0
    %1049 = vmatprep.subr.mxu0 0.0
    %1050 = vmatpush1.msra.mxu0 0.0
    %1051 = vmatprep.subr.mxu0 0.0
    %1052 = vmatpush1.msra.mxu0 %v1016
    %1053 = vmatprep.subr.mxu0 0.0
    %1054 = vmatpush2.msra.mxu0 0.0
    %1055 = vmatprep.subr.mxu0 0.0
    %1056 = vmatpush2.msra.mxu0 0.0
    %1057 = vmatprep.subr.mxu0 0.0
    %1058 = vmatpush2.msra.mxu0 0.0
    %1059 = vmatprep.subr.mxu0 0.0
    %1060 = vmatpush2.msra.mxu0 0.0
    %1061 = vmatprep.subr.mxu0 0.0
    %1062 = vmatpush2.msra.mxu0 0.0
    %1063 = vmatprep.subr.mxu0 0.0
    %1064 = vmatpush2.msra.mxu0 0.0
    %1065 = vmatprep.subr.mxu0 0.0
    %1066 = vmatpush2.msra.mxu0 0.0
    %1067 = vmatprep.subr.mxu0 0.0
    %1068 = vmatpush2.msra.mxu0 0.0
    %1069 = vmatprep.subr.mxu0 0.0
    %1070 = vmatpush2.msra.mxu0 0.0
    %1071 = vmatprep.subr.mxu0 0.0
    %1072 = vmatpush2.msra.mxu0 0.0
    %1073 = vmatprep.subr.mxu0 0.0
    %1074 = vmatpush2.msra.mxu0 0.0
    %1075 = vmatprep.subr.mxu0 0.0
    %1076 = vmatpush2.msra.mxu0 0.0
    %1077 = vmatprep.subr.mxu0 0.0
    %1078 = vmatpush2.msra.mxu0 0.0
    %1079 = vmatprep.subr.mxu0 0.0
    %1080 = vmatpush2.msra.mxu0 0.0
    %1081 = vmatprep.subr.mxu0 0.0
    %1082 = vmatpush2.msra.mxu0 0.0
    %1083 = vmatprep.subr.mxu0 0.0
    %1084 = vmatpush2.msra.mxu0 0.0
    %1085 = vmatprep.mubr.f32.mxu0 0.0
    %1086 = vmatmul.mubr.f32.gmra.mxu0 %v1019
    %v1087 = vpop.f32.mrf.mxu0
    %v1088 = vadd.f32 0.0, %v1087
    %v1089 = vpop.f32.mrf.mxu0
    %1090 = vdwg.mxu0
    %1091 = vrot.lane.b32.xlu0 %v375, 112
    %v1092 = vpop.permute.xlu0 %1091
    %1093 = vrot.lane.b32.xlu0 %v375, 80
    %v1094 = vpop.permute.xlu0 %1093
    %v1095 = vsel %vm427, %v1092, 0
    %v1097 = vsel %vm427, %v1094, 0
    %1099 = vmatprep.subr.mxu0 0.0
    %1100 = vmatpush1.xpose.msra.mxu0 0.0
    %1101 = vmatprep.subr.mxu0 0.0
    %1102 = vmatpush1.xpose.msra.mxu0 0.0
    %1103 = vmatprep.subr.mxu0 0.0
    %1104 = vmatpush1.xpose.msra.mxu0 0.0
    %1105 = vmatprep.subr.mxu0 0.0
    %1106 = vmatpush1.xpose.msra.mxu0 0.0
    %1107 = vmatprep.subr.mxu0 0.0
    %1108 = vmatpush1.xpose.msra.mxu0 0.0
    %1109 = vmatprep.subr.mxu0 0.0
    %1110 = vmatpush1.xpose.msra.mxu0 0.0
    %1111 = vmatprep.subr.mxu0 0.0
    %1112 = vmatpush1.xpose.msra.mxu0 0.0
    %1113 = vmatprep.subr.mxu0 0.0
    %1114 = vmatpush1.xpose.msra.mxu0 0.0
    %1115 = vmatprep.subr.mxu0 0.0
    %1116 = vmatpush1.xpose.msra.mxu0 0.0
    %1117 = vmatprep.subr.mxu0 0.0
    %1118 = vmatpush1.xpose.msra.mxu0 0.0
    %1119 = vmatprep.subr.mxu0 0.0
    %1120 = vmatpush1.xpose.msra.mxu0 0.0
    %1121 = vmatprep.subr.mxu0 0.0
    %1122 = vmatpush1.xpose.msra.mxu0 0.0
    %1123 = vmatprep.subr.mxu0 0.0
    %1124 = vmatpush1.xpose.msra.mxu0 0.0
    %1125 = vmatprep.subr.mxu0 0.0
    %1126 = vmatpush1.xpose.msra.mxu0 0.0
    %1127 = vmatprep.subr.mxu0 0.0
    %1128 = vmatpush1.xpose.msra.mxu0 0.0
    %1129 = vmatprep.subr.mxu0 0.0
    %1130 = vmatpush1.xpose.msra.mxu0 %v1097
    %1131 = vmatprep.subr.mxu0 0.0
    %1132 = vmatpush2.xpose.msra.mxu0 0.0
    %1133 = vmatprep.subr.mxu0 0.0
    %1134 = vmatpush2.xpose.msra.mxu0 0.0
    %1135 = vmatprep.subr.mxu0 0.0
    %1136 = vmatpush2.xpose.msra.mxu0 0.0
    %1137 = vmatprep.subr.mxu0 0.0
    %1138 = vmatpush2.xpose.msra.mxu0 0.0
    %1139 = vmatprep.subr.mxu0 0.0
    %1140 = vmatpush2.xpose.msra.mxu0 0.0
    %1141 = vmatprep.subr.mxu0 0.0
    %1142 = vmatpush2.xpose.msra.mxu0 0.0
    %1143 = vmatprep.subr.mxu0 0.0
    %1144 = vmatpush2.xpose.msra.mxu0 0.0
    %1145 = vmatprep.subr.mxu0 0.0
    %1146 = vmatpush2.xpose.msra.mxu0 0.0
    %1147 = vmatprep.subr.mxu0 0.0
    %1148 = vmatpush2.xpose.msra.mxu0 0.0
    %1149 = vmatprep.subr.mxu0 0.0
    %1150 = vmatpush2.xpose.msra.mxu0 0.0
    %1151 = vmatprep.subr.mxu0 0.0
    %1152 = vmatpush2.xpose.msra.mxu0 0.0
    %1153 = vmatprep.subr.mxu0 0.0
    %1154 = vmatpush2.xpose.msra.mxu0 0.0
    %1155 = vmatprep.subr.mxu0 0.0
    %1156 = vmatpush2.xpose.msra.mxu0 0.0
    %1157 = vmatprep.subr.mxu0 0.0
    %1158 = vmatpush2.xpose.msra.mxu0 0.0
    %1159 = vmatprep.subr.mxu0 0.0
    %1160 = vmatpush2.xpose.msra.mxu0 0.0
    %1161 = vmatprep.subr.mxu0 0.0
    %1162 = vmatpush2.xpose.msra.mxu0 0.0
    %1163 = vmatprep.mubr.f32.mxu0 0.0
    %1164 = vmatmul.mubr.f32.gmra.mxu0 %v1095
    %v1165 = vpop.f32.mrf.mxu0
    %v1166 = vadd.f32 0.0, %v1165
    %v1167 = vpop.f32.mrf.mxu0
    %1168 = vdwg.mxu0
    %1169 = vrot.lane.b32.xlu0 %v380, 112
    %v1170 = vpop.permute.xlu0 %1169
    %1171 = vrot.lane.b32.xlu0 %v380, 80
    %v1172 = vpop.permute.xlu0 %1171
    %v1173 = vsel %vm427, %v1170, 0
    %v1175 = vsel %vm427, %v1172, 0
    %1177 = vmatprep.subr.mxu0 0.0
    %1178 = vmatpush1.xpose.msra.mxu0 0.0
    %1179 = vmatprep.subr.mxu0 0.0
    %1180 = vmatpush1.xpose.msra.mxu0 0.0
    %1181 = vmatprep.subr.mxu0 0.0
    %1182 = vmatpush1.xpose.msra.mxu0 0.0
    %1183 = vmatprep.subr.mxu0 0.0
    %1184 = vmatpush1.xpose.msra.mxu0 0.0
    %1185 = vmatprep.subr.mxu0 0.0
    %1186 = vmatpush1.xpose.msra.mxu0 0.0
    %1187 = vmatprep.subr.mxu0 0.0
    %1188 = vmatpush1.xpose.msra.mxu0 0.0
    %1189 = vmatprep.subr.mxu0 0.0
    %1190 = vmatpush1.xpose.msra.mxu0 0.0
    %1191 = vmatprep.subr.mxu0 0.0
    %1192 = vmatpush1.xpose.msra.mxu0 0.0
    %1193 = vmatprep.subr.mxu0 0.0
    %1194 = vmatpush1.xpose.msra.mxu0 0.0
    %1195 = vmatprep.subr.mxu0 0.0
    %1196 = vmatpush1.xpose.msra.mxu0 0.0
    %1197 = vmatprep.subr.mxu0 0.0
    %1198 = vmatpush1.xpose.msra.mxu0 0.0
    %1199 = vmatprep.subr.mxu0 0.0
    %1200 = vmatpush1.xpose.msra.mxu0 0.0
    %1201 = vmatprep.subr.mxu0 0.0
    %1202 = vmatpush1.xpose.msra.mxu0 0.0
    %1203 = vmatprep.subr.mxu0 0.0
    %1204 = vmatpush1.xpose.msra.mxu0 0.0
    %1205 = vmatprep.subr.mxu0 0.0
    %1206 = vmatpush1.xpose.msra.mxu0 0.0
    %1207 = vmatprep.subr.mxu0 0.0
    %1208 = vmatpush1.xpose.msra.mxu0 %v1175
    %1209 = vmatprep.subr.mxu0 0.0
    %1210 = vmatpush2.xpose.msra.mxu0 0.0
    %1211 = vmatprep.subr.mxu0 0.0
    %1212 = vmatpush2.xpose.msra.mxu0 0.0
    %1213 = vmatprep.subr.mxu0 0.0
    %1214 = vmatpush2.xpose.msra.mxu0 0.0
    %1215 = vmatprep.subr.mxu0 0.0
    %1216 = vmatpush2.xpose.msra.mxu0 0.0
    %1217 = vmatprep.subr.mxu0 0.0
    %1218 = vmatpush2.xpose.msra.mxu0 0.0
    %1219 = vmatprep.subr.mxu0 0.0
    %1220 = vmatpush2.xpose.msra.mxu0 0.0
    %1221 = vmatprep.subr.mxu0 0.0
    %1222 = vmatpush2.xpose.msra.mxu0 0.0
    %1223 = vmatprep.subr.mxu0 0.0
    %1224 = vmatpush2.xpose.msra.mxu0 0.0
    %1225 = vmatprep.subr.mxu0 0.0
    %1226 = vmatpush2.xpose.msra.mxu0 0.0
    %1227 = vmatprep.subr.mxu0 0.0
    %1228 = vmatpush2.xpose.msra.mxu0 0.0
    %1229 = vmatprep.subr.mxu0 0.0
    %1230 = vmatpush2.xpose.msra.mxu0 0.0
    %1231 = vmatprep.subr.mxu0 0.0
    %1232 = vmatpush2.xpose.msra.mxu0 0.0
    %1233 = vmatprep.subr.mxu0 0.0
    %1234 = vmatpush2.xpose.msra.mxu0 0.0
    %1235 = vmatprep.subr.mxu0 0.0
    %1236 = vmatpush2.xpose.msra.mxu0 0.0
    %1237 = vmatprep.subr.mxu0 0.0
    %1238 = vmatpush2.xpose.msra.mxu0 0.0
    %1239 = vmatprep.subr.mxu0 0.0
    %1240 = vmatpush2.xpose.msra.mxu0 0.0
    %1241 = vmatprep.mubr.f32.mxu0 0.0
    %1242 = vmatmul.mubr.f32.gmra.mxu0 %v1173
    %v1243 = vpop.f32.mrf.mxu0
    %v1244 = vadd.f32 0.0, %v1243
    %v1245 = vpop.f32.mrf.mxu0
    %1246 = vdwg.mxu0
    %v1247 = vmul.f32 %v1166, 0.35355338
    %v1248 = vmul.f32 %v1244, 0.35355338
    %v1249 = vadd.f32 %v1247, %v417
    %v1250 = vadd.f32 %v1248, %v421
    %v1251 = vsel %vm427, %v1249, -inf
    %1252 = vmax.xlane.f32.xlu0 %v1251
    %v1253 = vpop.xlane.xlu0 %1252
    %v1254 = vsel %vm427, %v1250, -inf
    %1255 = vmax.xlane.f32.xlu0 %v1254
    %v1256 = vpop.xlane.xlu0 %1255
    %v1257 = vsub.f32 %v1249, %v1253
    %v1258 = vsub.f32 %v1250, %v1256
    %v1259 = vmul.f32 %v1257, 1.442695
    %v1260 = vpow.pop %v1259
    %v1261 = vmul.f32 %v1258, 1.442695
    %v1262 = vpow.pop %v1261
    %v1263 = vsel %vm427, %v1260, 0.0
    %1264 = vadd.xlane.f32.xlu0 %v1263
    %v1265 = vpop.xlane.xlu0 %1264
    %v1266 = vsel %vm427, %v1262, 0.0
    %1267 = vadd.xlane.f32.xlu0 %v1266
    %v1268 = vpop.xlane.xlu0 %1267
    %v1269 = vrcp.pop %v1265
    %v1270 = vmul.f32 %v1260, %v1269
    %v1271 = vrcp.pop %v1268
    %v1272 = vmul.f32 %v1262, %v1271
    %1273 = vrot.lane.b32.xlu0 %v375, 48
    %v1274 = vpop.permute.xlu0 %1273
    %v1277 = vsel %vm427, %v1270, 0
    %1279 = vmatprep.subr.mxu0 0.0
    %1280 = vmatpush1.msra.mxu0 0.0
    %1281 = vmatprep.subr.mxu0 0.0
    %1282 = vmatpush1.msra.mxu0 0.0
    %1283 = vmatprep.subr.mxu0 0.0
    %1284 = vmatpush1.msra.mxu0 0.0
    %1285 = vmatprep.subr.mxu0 0.0
    %1286 = vmatpush1.msra.mxu0 0.0
    %1287 = vmatprep.subr.mxu0 0.0
    %1288 = vmatpush1.msra.mxu0 0.0
    %1289 = vmatprep.subr.mxu0 0.0
    %1290 = vmatpush1.msra.mxu0 0.0
    %1291 = vmatprep.subr.mxu0 0.0
    %1292 = vmatpush1.msra.mxu0 0.0
    %1293 = vmatprep.subr.mxu0 0.0
    %1294 = vmatpush1.msra.mxu0 0.0
    %1295 = vmatprep.subr.mxu0 0.0
    %1296 = vmatpush1.msra.mxu0 0.0
    %1297 = vmatprep.subr.mxu0 0.0
    %1298 = vmatpush1.msra.mxu0 0.0
    %1299 = vmatprep.subr.mxu0 0.0
    %1300 = vmatpush1.msra.mxu0 0.0
    %1301 = vmatprep.subr.mxu0 0.0
    %1302 = vmatpush1.msra.mxu0 0.0
    %1303 = vmatprep.subr.mxu0 0.0
    %1304 = vmatpush1.msra.mxu0 0.0
    %1305 = vmatprep.subr.mxu0 0.0
    %1306 = vmatpush1.msra.mxu0 0.0
    %1307 = vmatprep.subr.mxu0 0.0
    %1308 = vmatpush1.msra.mxu0 0.0
    %1309 = vmatprep.subr.mxu0 0.0
    %1310 = vmatpush1.msra.mxu0 %v1274
    %1311 = vmatprep.subr.mxu0 0.0
    %1312 = vmatpush2.msra.mxu0 0.0
    %1313 = vmatprep.subr.mxu0 0.0
    %1314 = vmatpush2.msra.mxu0 0.0
    %1315 = vmatprep.subr.mxu0 0.0
    %1316 = vmatpush2.msra.mxu0 0.0
    %1317 = vmatprep.subr.mxu0 0.0
    %1318 = vmatpush2.msra.mxu0 0.0
    %1319 = vmatprep.subr.mxu0 0.0
    %1320 = vmatpush2.msra.mxu0 0.0
    %1321 = vmatprep.subr.mxu0 0.0
    %1322 = vmatpush2.msra.mxu0 0.0
    %1323 = vmatprep.subr.mxu0 0.0
    %1324 = vmatpush2.msra.mxu0 0.0
    %1325 = vmatprep.subr.mxu0 0.0
    %1326 = vmatpush2.msra.mxu0 0.0
    %1327 = vmatprep.subr.mxu0 0.0
    %1328 = vmatpush2.msra.mxu0 0.0
    %1329 = vmatprep.subr.mxu0 0.0
    %1330 = vmatpush2.msra.mxu0 0.0
    %1331 = vmatprep.subr.mxu0 0.0
    %1332 = vmatpush2.msra.mxu0 0.0
    %1333 = vmatprep.subr.mxu0 0.0
    %1334 = vmatpush2.msra.mxu0 0.0
    %1335 = vmatprep.subr.mxu0 0.0
    %1336 = vmatpush2.msra.mxu0 0.0
    %1337 = vmatprep.subr.mxu0 0.0
    %1338 = vmatpush2.msra.mxu0 0.0
    %1339 = vmatprep.subr.mxu0 0.0
    %1340 = vmatpush2.msra.mxu0 0.0
    %1341 = vmatprep.subr.mxu0 0.0
    %1342 = vmatpush2.msra.mxu0 0.0
    %1343 = vmatprep.mubr.f32.mxu0 0.0
    %1344 = vmatmul.mubr.f32.gmra.mxu0 %v1277
    %v1345 = vpop.f32.mrf.mxu0
    %v1346 = vadd.f32 0.0, %v1345
    %v1347 = vpop.f32.mrf.mxu0
    %1348 = vdwg.mxu0
    %1349 = vrot.lane.b32.xlu0 %v380, 48
    %v1350 = vpop.permute.xlu0 %1349
    %v1353 = vsel %vm427, %v1272, 0
    %1355 = vmatprep.subr.mxu0 0.0
    %1356 = vmatpush1.msra.mxu0 0.0
    %1357 = vmatprep.subr.mxu0 0.0
    %1358 = vmatpush1.msra.mxu0 0.0
    %1359 = vmatprep.subr.mxu0 0.0
    %1360 = vmatpush1.msra.mxu0 0.0
    %1361 = vmatprep.subr.mxu0 0.0
    %1362 = vmatpush1.msra.mxu0 0.0
    %1363 = vmatprep.subr.mxu0 0.0
    %1364 = vmatpush1.msra.mxu0 0.0
    %1365 = vmatprep.subr.mxu0 0.0
    %1366 = vmatpush1.msra.mxu0 0.0
    %1367 = vmatprep.subr.mxu0 0.0
    %1368 = vmatpush1.msra.mxu0 0.0
    %1369 = vmatprep.subr.mxu0 0.0
    %1370 = vmatpush1.msra.mxu0 0.0
    %1371 = vmatprep.subr.mxu0 0.0
    %1372 = vmatpush1.msra.mxu0 0.0
    %1373 = vmatprep.subr.mxu0 0.0
    %1374 = vmatpush1.msra.mxu0 0.0
    %1375 = vmatprep.subr.mxu0 0.0
    %1376 = vmatpush1.msra.mxu0 0.0
    %1377 = vmatprep.subr.mxu0 0.0
    %1378 = vmatpush1.msra.mxu0 0.0
    %1379 = vmatprep.subr.mxu0 0.0
    %1380 = vmatpush1.msra.mxu0 0.0
    %1381 = vmatprep.subr.mxu0 0.0
    %1382 = vmatpush1.msra.mxu0 0.0
    %1383 = vmatprep.subr.mxu0 0.0
    %1384 = vmatpush1.msra.mxu0 0.0
    %1385 = vmatprep.subr.mxu0 0.0
    %1386 = vmatpush1.msra.mxu0 %v1350
    %1387 = vmatprep.subr.mxu0 0.0
    %1388 = vmatpush2.msra.mxu0 0.0
    %1389 = vmatprep.subr.mxu0 0.0
    %1390 = vmatpush2.msra.mxu0 0.0
    %1391 = vmatprep.subr.mxu0 0.0
    %1392 = vmatpush2.msra.mxu0 0.0
    %1393 = vmatprep.subr.mxu0 0.0
    %1394 = vmatpush2.msra.mxu0 0.0
    %1395 = vmatprep.subr.mxu0 0.0
    %1396 = vmatpush2.msra.mxu0 0.0
    %1397 = vmatprep.subr.mxu0 0.0
    %1398 = vmatpush2.msra.mxu0 0.0
    %1399 = vmatprep.subr.mxu0 0.0
    %1400 = vmatpush2.msra.mxu0 0.0
    %1401 = vmatprep.subr.mxu0 0.0
    %1402 = vmatpush2.msra.mxu0 0.0
    %1403 = vmatprep.subr.mxu0 0.0
    %1404 = vmatpush2.msra.mxu0 0.0
    %1405 = vmatprep.subr.mxu0 0.0
    %1406 = vmatpush2.msra.mxu0 0.0
    %1407 = vmatprep.subr.mxu0 0.0
    %1408 = vmatpush2.msra.mxu0 0.0
    %1409 = vmatprep.subr.mxu0 0.0
    %1410 = vmatpush2.msra.mxu0 0.0
    %1411 = vmatprep.subr.mxu0 0.0
    %1412 = vmatpush2.msra.mxu0 0.0
    %1413 = vmatprep.subr.mxu0 0.0
    %1414 = vmatpush2.msra.mxu0 0.0
    %1415 = vmatprep.subr.mxu0 0.0
    %1416 = vmatpush2.msra.mxu0 0.0
    %1417 = vmatprep.subr.mxu0 0.0
    %1418 = vmatpush2.msra.mxu0 0.0
    %1419 = vmatprep.mubr.f32.mxu0 0.0
    %1420 = vmatmul.mubr.f32.gmra.mxu0 %v1353
    %v1421 = vpop.f32.mrf.mxu0
    %v1422 = vadd.f32 0.0, %v1421
    %v1423 = vpop.f32.mrf.mxu0
    %1424 = vdwg.mxu0
    %1425 = vrot.lane.b32.xlu0 %v375, 104
    %v1426 = vpop.permute.xlu0 %1425
    %1427 = vrot.lane.b32.xlu0 %v375, 72
    %v1428 = vpop.permute.xlu0 %1427
    %v1429 = vsel %vm427, %v1426, 0
    %v1431 = vsel %vm427, %v1428, 0
    %1433 = vmatprep.subr.mxu0 0.0
    %1434 = vmatpush1.xpose.msra.mxu0 0.0
    %1435 = vmatprep.subr.mxu0 0.0
    %1436 = vmatpush1.xpose.msra.mxu0 0.0
    %1437 = vmatprep.subr.mxu0 0.0
    %1438 = vmatpush1.xpose.msra.mxu0 0.0
    %1439 = vmatprep.subr.mxu0 0.0
    %1440 = vmatpush1.xpose.msra.mxu0 0.0
    %1441 = vmatprep.subr.mxu0 0.0
    %1442 = vmatpush1.xpose.msra.mxu0 0.0
    %1443 = vmatprep.subr.mxu0 0.0
    %1444 = vmatpush1.xpose.msra.mxu0 0.0
    %1445 = vmatprep.subr.mxu0 0.0
    %1446 = vmatpush1.xpose.msra.mxu0 0.0
    %1447 = vmatprep.subr.mxu0 0.0
    %1448 = vmatpush1.xpose.msra.mxu0 0.0
    %1449 = vmatprep.subr.mxu0 0.0
    %1450 = vmatpush1.xpose.msra.mxu0 0.0
    %1451 = vmatprep.subr.mxu0 0.0
    %1452 = vmatpush1.xpose.msra.mxu0 0.0
    %1453 = vmatprep.subr.mxu0 0.0
    %1454 = vmatpush1.xpose.msra.mxu0 0.0
    %1455 = vmatprep.subr.mxu0 0.0
    %1456 = vmatpush1.xpose.msra.mxu0 0.0
    %1457 = vmatprep.subr.mxu0 0.0
    %1458 = vmatpush1.xpose.msra.mxu0 0.0
    %1459 = vmatprep.subr.mxu0 0.0
    %1460 = vmatpush1.xpose.msra.mxu0 0.0
    %1461 = vmatprep.subr.mxu0 0.0
    %1462 = vmatpush1.xpose.msra.mxu0 0.0
    %1463 = vmatprep.subr.mxu0 0.0
    %1464 = vmatpush1.xpose.msra.mxu0 %v1431
    %1465 = vmatprep.subr.mxu0 0.0
    %1466 = vmatpush2.xpose.msra.mxu0 0.0
    %1467 = vmatprep.subr.mxu0 0.0
    %1468 = vmatpush2.xpose.msra.mxu0 0.0
    %1469 = vmatprep.subr.mxu0 0.0
    %1470 = vmatpush2.xpose.msra.mxu0 0.0
    %1471 = vmatprep.subr.mxu0 0.0
    %1472 = vmatpush2.xpose.msra.mxu0 0.0
    %1473 = vmatprep.subr.mxu0 0.0
    %1474 = vmatpush2.xpose.msra.mxu0 0.0
    %1475 = vmatprep.subr.mxu0 0.0
    %1476 = vmatpush2.xpose.msra.mxu0 0.0
    %1477 = vmatprep.subr.mxu0 0.0
    %1478 = vmatpush2.xpose.msra.mxu0 0.0
    %1479 = vmatprep.subr.mxu0 0.0
    %1480 = vmatpush2.xpose.msra.mxu0 0.0
    %1481 = vmatprep.subr.mxu0 0.0
    %1482 = vmatpush2.xpose.msra.mxu0 0.0
    %1483 = vmatprep.subr.mxu0 0.0
    %1484 = vmatpush2.xpose.msra.mxu0 0.0
    %1485 = vmatprep.subr.mxu0 0.0
    %1486 = vmatpush2.xpose.msra.mxu0 0.0
    %1487 = vmatprep.subr.mxu0 0.0
    %1488 = vmatpush2.xpose.msra.mxu0 0.0
    %1489 = vmatprep.subr.mxu0 0.0
    %1490 = vmatpush2.xpose.msra.mxu0 0.0
    %1491 = vmatprep.subr.mxu0 0.0
    %1492 = vmatpush2.xpose.msra.mxu0 0.0
    %1493 = vmatprep.subr.mxu0 0.0
    %1494 = vmatpush2.xpose.msra.mxu0 0.0
    %1495 = vmatprep.subr.mxu0 0.0
    %1496 = vmatpush2.xpose.msra.mxu0 0.0
    %1497 = vmatprep.mubr.f32.mxu0 0.0
    %1498 = vmatmul.mubr.f32.gmra.mxu0 %v1429
    %v1499 = vpop.f32.mrf.mxu0
    %v1500 = vadd.f32 0.0, %v1499
    %v1501 = vpop.f32.mrf.mxu0
    %1502 = vdwg.mxu0
    %1503 = vrot.lane.b32.xlu0 %v380, 104
    %v1504 = vpop.permute.xlu0 %1503
    %1505 = vrot.lane.b32.xlu0 %v380, 72
    %v1506 = vpop.permute.xlu0 %1505
    %v1507 = vsel %vm427, %v1504, 0
    %v1509 = vsel %vm427, %v1506, 0
    %1511 = vmatprep.subr.mxu0 0.0
    %1512 = vmatpush1.xpose.msra.mxu0 0.0
    %1513 = vmatprep.subr.mxu0 0.0
    %1514 = vmatpush1.xpose.msra.mxu0 0.0
    %1515 = vmatprep.subr.mxu0 0.0
    %1516 = vmatpush1.xpose.msra.mxu0 0.0
    %1517 = vmatprep.subr.mxu0 0.0
    %1518 = vmatpush1.xpose.msra.mxu0 0.0
    %1519 = vmatprep.subr.mxu0 0.0
    %1520 = vmatpush1.xpose.msra.mxu0 0.0
    %1521 = vmatprep.subr.mxu0 0.0
    %1522 = vmatpush1.xpose.msra.mxu0 0.0
    %1523 = vmatprep.subr.mxu0 0.0
    %1524 = vmatpush1.xpose.msra.mxu0 0.0
    %1525 = vmatprep.subr.mxu0 0.0
    %1526 = vmatpush1.xpose.msra.mxu0 0.0
    %1527 = vmatprep.subr.mxu0 0.0
    %1528 = vmatpush1.xpose.msra.mxu0 0.0
    %1529 = vmatprep.subr.mxu0 0.0
    %1530 = vmatpush1.xpose.msra.mxu0 0.0
    %1531 = vmatprep.subr.mxu0 0.0
    %1532 = vmatpush1.xpose.msra.mxu0 0.0
    %1533 = vmatprep.subr.mxu0 0.0
    %1534 = vmatpush1.xpose.msra.mxu0 0.0
    %1535 = vmatprep.subr.mxu0 0.0
    %1536 = vmatpush1.xpose.msra.mxu0 0.0
    %1537 = vmatprep.subr.mxu0 0.0
    %1538 = vmatpush1.xpose.msra.mxu0 0.0
    %1539 = vmatprep.subr.mxu0 0.0
    %1540 = vmatpush1.xpose.msra.mxu0 0.0
    %1541 = vmatprep.subr.mxu0 0.0
    %1542 = vmatpush1.xpose.msra.mxu0 %v1509
    %1543 = vmatprep.subr.mxu0 0.0
    %1544 = vmatpush2.xpose.msra.mxu0 0.0
    %1545 = vmatprep.subr.mxu0 0.0
    %1546 = vmatpush2.xpose.msra.mxu0 0.0
    %1547 = vmatprep.subr.mxu0 0.0
    %1548 = vmatpush2.xpose.msra.mxu0 0.0
    %1549 = vmatprep.subr.mxu0 0.0
    %1550 = vmatpush2.xpose.msra.mxu0 0.0
    %1551 = vmatprep.subr.mxu0 0.0
    %1552 = vmatpush2.xpose.msra.mxu0 0.0
    %1553 = vmatprep.subr.mxu0 0.0
    %1554 = vmatpush2.xpose.msra.mxu0 0.0
    %1555 = vmatprep.subr.mxu0 0.0
    %1556 = vmatpush2.xpose.msra.mxu0 0.0
    %1557 = vmatprep.subr.mxu0 0.0
    %1558 = vmatpush2.xpose.msra.mxu0 0.0
    %1559 = vmatprep.subr.mxu0 0.0
    %1560 = vmatpush2.xpose.msra.mxu0 0.0
    %1561 = vmatprep.subr.mxu0 0.0
    %1562 = vmatpush2.xpose.msra.mxu0 0.0
    %1563 = vmatprep.subr.mxu0 0.0
    %1564 = vmatpush2.xpose.msra.mxu0 0.0
    %1565 = vmatprep.subr.mxu0 0.0
    %1566 = vmatpush2.xpose.msra.mxu0 0.0
    %1567 = vmatprep.subr.mxu0 0.0
    %1568 = vmatpush2.xpose.msra.mxu0 0.0
    %1569 = vmatprep.subr.mxu0 0.0
    %1570 = vmatpush2.xpose.msra.mxu0 0.0
    %1571 = vmatprep.subr.mxu0 0.0
    %1572 = vmatpush2.xpose.msra.mxu0 0.0
    %1573 = vmatprep.subr.mxu0 0.0
    %1574 = vmatpush2.xpose.msra.mxu0 0.0
    %1575 = vmatprep.mubr.f32.mxu0 0.0
    %1576 = vmatmul.mubr.f32.gmra.mxu0 %v1507
    %v1577 = vpop.f32.mrf.mxu0
    %v1578 = vadd.f32 0.0, %v1577
    %v1579 = vpop.f32.mrf.mxu0
    %1580 = vdwg.mxu0
    %v1581 = vmul.f32 %v1500, 0.35355338
    %v1582 = vmul.f32 %v1578, 0.35355338
    %v1583 = vadd.f32 %v1581, %v417
    %v1584 = vadd.f32 %v1582, %v421
    %v1585 = vsel %vm427, %v1583, -inf
    %1586 = vmax.xlane.f32.xlu0 %v1585
    %v1587 = vpop.xlane.xlu0 %1586
    %v1588 = vsel %vm427, %v1584, -inf
    %1589 = vmax.xlane.f32.xlu0 %v1588
    %v1590 = vpop.xlane.xlu0 %1589
    %v1591 = vsub.f32 %v1583, %v1587
    %v1592 = vsub.f32 %v1584, %v1590
    %v1593 = vmul.f32 %v1591, 1.442695
    %v1594 = vpow.pop %v1593
    %v1595 = vmul.f32 %v1592, 1.442695
    %v1596 = vpow.pop %v1595
    %v1597 = vsel %vm427, %v1594, 0.0
    %1598 = vadd.xlane.f32.xlu0 %v1597
    %v1599 = vpop.xlane.xlu0 %1598
    %v1600 = vsel %vm427, %v1596, 0.0
    %1601 = vadd.xlane.f32.xlu0 %v1600
    %v1602 = vpop.xlane.xlu0 %1601
    %v1603 = vrcp.pop %v1599
    %v1604 = vmul.f32 %v1594, %v1603
    %v1605 = vrcp.pop %v1602
    %v1606 = vmul.f32 %v1596, %v1605
    %1607 = vrot.lane.b32.xlu0 %v375, 40
    %v1608 = vpop.permute.xlu0 %1607
    %v1611 = vsel %vm427, %v1604, 0
    %1613 = vmatprep.subr.mxu0 0.0
    %1614 = vmatpush1.msra.mxu0 0.0
    %1615 = vmatprep.subr.mxu0 0.0
    %1616 = vmatpush1.msra.mxu0 0.0
    %1617 = vmatprep.subr.mxu0 0.0
    %1618 = vmatpush1.msra.mxu0 0.0
    %1619 = vmatprep.subr.mxu0 0.0
    %1620 = vmatpush1.msra.mxu0 0.0
    %1621 = vmatprep.subr.mxu0 0.0
    %1622 = vmatpush1.msra.mxu0 0.0
    %1623 = vmatprep.subr.mxu0 0.0
    %1624 = vmatpush1.msra.mxu0 0.0
    %1625 = vmatprep.subr.mxu0 0.0
    %1626 = vmatpush1.msra.mxu0 0.0
    %1627 = vmatprep.subr.mxu0 0.0
    %1628 = vmatpush1.msra.mxu0 0.0
    %1629 = vmatprep.subr.mxu0 0.0
    %1630 = vmatpush1.msra.mxu0 0.0
    %1631 = vmatprep.subr.mxu0 0.0
    %1632 = vmatpush1.msra.mxu0 0.0
    %1633 = vmatprep.subr.mxu0 0.0
    %1634 = vmatpush1.msra.mxu0 0.0
    %1635 = vmatprep.subr.mxu0 0.0
    %1636 = vmatpush1.msra.mxu0 0.0
    %1637 = vmatprep.subr.mxu0 0.0
    %1638 = vmatpush1.msra.mxu0 0.0
    %1639 = vmatprep.subr.mxu0 0.0
    %1640 = vmatpush1.msra.mxu0 0.0
    %1641 = vmatprep.subr.mxu0 0.0
    %1642 = vmatpush1.msra.mxu0 0.0
    %1643 = vmatprep.subr.mxu0 0.0
    %1644 = vmatpush1.msra.mxu0 %v1608
    %1645 = vmatprep.subr.mxu0 0.0
    %1646 = vmatpush2.msra.mxu0 0.0
    %1647 = vmatprep.subr.mxu0 0.0
    %1648 = vmatpush2.msra.mxu0 0.0
    %1649 = vmatprep.subr.mxu0 0.0
    %1650 = vmatpush2.msra.mxu0 0.0
    %1651 = vmatprep.subr.mxu0 0.0
    %1652 = vmatpush2.msra.mxu0 0.0
    %1653 = vmatprep.subr.mxu0 0.0
    %1654 = vmatpush2.msra.mxu0 0.0
    %1655 = vmatprep.subr.mxu0 0.0
    %1656 = vmatpush2.msra.mxu0 0.0
    %1657 = vmatprep.subr.mxu0 0.0
    %1658 = vmatpush2.msra.mxu0 0.0
    %1659 = vmatprep.subr.mxu0 0.0
    %1660 = vmatpush2.msra.mxu0 0.0
    %1661 = vmatprep.subr.mxu0 0.0
    %1662 = vmatpush2.msra.mxu0 0.0
    %1663 = vmatprep.subr.mxu0 0.0
    %1664 = vmatpush2.msra.mxu0 0.0
    %1665 = vmatprep.subr.mxu0 0.0
    %1666 = vmatpush2.msra.mxu0 0.0
    %1667 = vmatprep.subr.mxu0 0.0
    %1668 = vmatpush2.msra.mxu0 0.0
    %1669 = vmatprep.subr.mxu0 0.0
    %1670 = vmatpush2.msra.mxu0 0.0
    %1671 = vmatprep.subr.mxu0 0.0
    %1672 = vmatpush2.msra.mxu0 0.0
    %1673 = vmatprep.subr.mxu0 0.0
    %1674 = vmatpush2.msra.mxu0 0.0
    %1675 = vmatprep.subr.mxu0 0.0
    %1676 = vmatpush2.msra.mxu0 0.0
    %1677 = vmatprep.mubr.f32.mxu0 0.0
    %1678 = vmatmul.mubr.f32.gmra.mxu0 %v1611
    %v1679 = vpop.f32.mrf.mxu0
    %v1680 = vadd.f32 0.0, %v1679
    %v1681 = vpop.f32.mrf.mxu0
    %1682 = vdwg.mxu0
    %1683 = vrot.lane.b32.xlu0 %v380, 40
    %v1684 = vpop.permute.xlu0 %1683
    %v1687 = vsel %vm427, %v1606, 0
    %1689 = vmatprep.subr.mxu0 0.0
    %1690 = vmatpush1.msra.mxu0 0.0
    %1691 = vmatprep.subr.mxu0 0.0
    %1692 = vmatpush1.msra.mxu0 0.0
    %1693 = vmatprep.subr.mxu0 0.0
    %1694 = vmatpush1.msra.mxu0 0.0
    %1695 = vmatprep.subr.mxu0 0.0
    %1696 = vmatpush1.msra.mxu0 0.0
    %1697 = vmatprep.subr.mxu0 0.0
    %1698 = vmatpush1.msra.mxu0 0.0
    %1699 = vmatprep.subr.mxu0 0.0
    %1700 = vmatpush1.msra.mxu0 0.0
    %1701 = vmatprep.subr.mxu0 0.0
    %1702 = vmatpush1.msra.mxu0 0.0
    %1703 = vmatprep.subr.mxu0 0.0
    %1704 = vmatpush1.msra.mxu0 0.0
    %1705 = vmatprep.subr.mxu0 0.0
    %1706 = vmatpush1.msra.mxu0 0.0
    %1707 = vmatprep.subr.mxu0 0.0
    %1708 = vmatpush1.msra.mxu0 0.0
    %1709 = vmatprep.subr.mxu0 0.0
    %1710 = vmatpush1.msra.mxu0 0.0
    %1711 = vmatprep.subr.mxu0 0.0
    %1712 = vmatpush1.msra.mxu0 0.0
    %1713 = vmatprep.subr.mxu0 0.0
    %1714 = vmatpush1.msra.mxu0 0.0
    %1715 = vmatprep.subr.mxu0 0.0
    %1716 = vmatpush1.msra.mxu0 0.0
    %1717 = vmatprep.subr.mxu0 0.0
    %1718 = vmatpush1.msra.mxu0 0.0
    %1719 = vmatprep.subr.mxu0 0.0
    %1720 = vmatpush1.msra.mxu0 %v1684
    %1721 = vmatprep.subr.mxu0 0.0
    %1722 = vmatpush2.msra.mxu0 0.0
    %1723 = vmatprep.subr.mxu0 0.0
    %1724 = vmatpush2.msra.mxu0 0.0
    %1725 = vmatprep.subr.mxu0 0.0
    %1726 = vmatpush2.msra.mxu0 0.0
    %1727 = vmatprep.subr.mxu0 0.0
    %1728 = vmatpush2.msra.mxu0 0.0
    %1729 = vmatprep.subr.mxu0 0.0
    %1730 = vmatpush2.msra.mxu0 0.0
    %1731 = vmatprep.subr.mxu0 0.0
    %1732 = vmatpush2.msra.mxu0 0.0
    %1733 = vmatprep.subr.mxu0 0.0
    %1734 = vmatpush2.msra.mxu0 0.0
    %1735 = vmatprep.subr.mxu0 0.0
    %1736 = vmatpush2.msra.mxu0 0.0
    %1737 = vmatprep.subr.mxu0 0.0
    %1738 = vmatpush2.msra.mxu0 0.0
    %1739 = vmatprep.subr.mxu0 0.0
    %1740 = vmatpush2.msra.mxu0 0.0
    %1741 = vmatprep.subr.mxu0 0.0
    %1742 = vmatpush2.msra.mxu0 0.0
    %1743 = vmatprep.subr.mxu0 0.0
    %1744 = vmatpush2.msra.mxu0 0.0
    %1745 = vmatprep.subr.mxu0 0.0
    %1746 = vmatpush2.msra.mxu0 0.0
    %1747 = vmatprep.subr.mxu0 0.0
    %1748 = vmatpush2.msra.mxu0 0.0
    %1749 = vmatprep.subr.mxu0 0.0
    %1750 = vmatpush2.msra.mxu0 0.0
    %1751 = vmatprep.subr.mxu0 0.0
    %1752 = vmatpush2.msra.mxu0 0.0
    %1753 = vmatprep.mubr.f32.mxu0 0.0
    %1754 = vmatmul.mubr.f32.gmra.mxu0 %v1687
    %v1755 = vpop.f32.mrf.mxu0
    %v1756 = vadd.f32 0.0, %v1755
    %v1757 = vpop.f32.mrf.mxu0
    %1758 = vdwg.mxu0
    %1761 = vrot.lane.b32.xlu0 %v1012, 8
    %v1762 = vpop.permute.xlu0 %1761
    %1763 = vrot.lane.b32.xlu0 %v1088, 8
    %v1764 = vpop.permute.xlu0 %1763
    %1769 = vrot.lane.b32.xlu0 %v1346, 16
    %v1770 = vpop.permute.xlu0 %1769
    %1771 = vrot.lane.b32.xlu0 %v1422, 16
    %v1772 = vpop.permute.xlu0 %1771
    %1777 = vrot.lane.b32.xlu0 %v1680, 24
    %v1778 = vpop.permute.xlu0 %1777
    %1779 = vrot.lane.b32.xlu0 %v1756, 24
    %v1780 = vpop.permute.xlu0 %1779
    %v1783 = vsel %vm427, %v678, %v1762
    %v1784 = vsel %vm427, %v754, %v1764
    %vm1785 = vcmask 130048
    %v1786 = vsel %vm1785, %v1783, %v1770
    %v1787 = vsel %vm1785, %v1784, %v1772
    %vm1788 = vcmask 195584
    %v1789 = vsel %vm1788, %v1786, %v1778
    %v1790 = vsel %vm1788, %v1787, %v1780
    %v1792 = vlaneseq
    %v1793 = vshrl.u32 %v1792, 7
    %v1794 = vsub.s32 0, %v1793
    %v1795 = vrot.slane %v388, %v1794
    %v1798 = vsel %vm301, %v1789, 0
    %v1801 = vsel %vm301, %v1790, 0
    %1803 = vmatprep.subr.mxu0 0.0
    %1804 = vmatpush1.msra.mxu0 0.0
    %1805 = vmatprep.subr.mxu0 0.0
    %1806 = vmatpush1.msra.mxu0 0.0
    %1807 = vmatprep.subr.mxu0 0.0
    %1808 = vmatpush1.msra.mxu0 0.0
    %1809 = vmatprep.subr.mxu0 0.0
    %1810 = vmatpush1.msra.mxu0 0.0
    %1811 = vmatprep.subr.mxu0 0.0
    %1812 = vmatpush1.msra.mxu0 0.0
    %1813 = vmatprep.subr.mxu0 0.0
    %1814 = vmatpush1.msra.mxu0 0.0
    %1815 = vmatprep.subr.mxu0 0.0
    %1816 = vmatpush1.msra.mxu0 0.0
    %1817 = vmatprep.subr.mxu0 0.0
    %1818 = vmatpush1.msra.mxu0 0.0
    %1819 = vmatprep.subr.mxu0 0.0
    %1820 = vmatpush1.msra.mxu0 0.0
    %1821 = vmatprep.subr.mxu0 0.0
    %1822 = vmatpush1.msra.mxu0 0.0
    %1823 = vmatprep.subr.mxu0 0.0
    %1824 = vmatpush1.msra.mxu0 0.0
    %1825 = vmatprep.subr.mxu0 0.0
    %1826 = vmatpush1.msra.mxu0 0.0
    %1827 = vmatprep.subr.mxu0 0.0
    %1828 = vmatpush1.msra.mxu0 %v387
    %1829 = vmatprep.subr.mxu0 0.0
    %1830 = vmatpush1.msra.mxu0 %v386
    %1831 = vmatprep.subr.mxu0 0.0
    %1832 = vmatpush1.msra.mxu0 %v385
    %1833 = vmatprep.subr.mxu0 0.0
    %1834 = vmatpush1.msra.mxu0 %v384
    %1835 = vmatprep.subr.mxu0 0.0
    %1836 = vmatpush2.msra.mxu0 0.0
    %1837 = vmatprep.subr.mxu0 0.0
    %1838 = vmatpush2.msra.mxu0 0.0
    %1839 = vmatprep.subr.mxu0 0.0
    %1840 = vmatpush2.msra.mxu0 0.0
    %1841 = vmatprep.subr.mxu0 0.0
    %1842 = vmatpush2.msra.mxu0 0.0
    %1843 = vmatprep.subr.mxu0 0.0
    %1844 = vmatpush2.msra.mxu0 0.0
    %1845 = vmatprep.subr.mxu0 0.0
    %1846 = vmatpush2.msra.mxu0 0.0
    %1847 = vmatprep.subr.mxu0 0.0
    %1848 = vmatpush2.msra.mxu0 0.0
    %1849 = vmatprep.subr.mxu0 0.0
    %1850 = vmatpush2.msra.mxu0 0.0
    %1851 = vmatprep.subr.mxu0 0.0
    %1852 = vmatpush2.msra.mxu0 0.0
    %1853 = vmatprep.subr.mxu0 0.0
    %1854 = vmatpush2.msra.mxu0 0.0
    %1855 = vmatprep.subr.mxu0 0.0
    %1856 = vmatpush2.msra.mxu0 0.0
    %1857 = vmatprep.subr.mxu0 0.0
    %1858 = vmatpush2.msra.mxu0 0.0
    %1859 = vmatprep.subr.mxu0 0.0
    %1860 = vmatpush2.msra.mxu0 0.0
    %1861 = vmatprep.subr.mxu0 0.0
    %1862 = vmatpush2.msra.mxu0 0.0
    %1863 = vmatprep.subr.mxu0 0.0
    %1864 = vmatpush2.msra.mxu0 0.0
    %1865 = vmatprep.subr.mxu0 0.0
    %1866 = vmatpush2.msra.mxu0 0.0
    %1867 = vmatprep.mubr.f32.mxu0 0.0
    %1868 = vmatmul.mubr.f32.gmra.mxu0 %v1798
    %v1869 = vpop.f32.mrf.mxu0
    %v1870 = vadd.f32 %v1795, %v1869
    %v1871 = vpop.f32.mrf.mxu0
    %1872 = vmatprep.mubr.f32.mxu0 0.0
    %1873 = vmatmul.mubr.f32.gmra.mxu0 %v1801
    %v1874 = vpop.f32.mrf.mxu0
    %v1875 = vadd.f32 %v1795, %v1874
    %v1876 = vpop.f32.mrf.mxu0
    %1877 = vdwg.mxu0
    %1878 = vrot.lane.b32.xlu0 %v936, 8
    %v1879 = vpop.permute.xlu0 %1878
    %1880 = vrot.lane.b32.xlu0 %v938, 8
    %v1881 = vpop.permute.xlu0 %1880
    %1884 = vrot.lane.b32.xlu0 %v1270, 16
    %v1885 = vpop.permute.xlu0 %1884
    %1886 = vrot.lane.b32.xlu0 %v1272, 16
    %v1887 = vpop.permute.xlu0 %1886
    %1890 = vrot.lane.b32.xlu0 %v1604, 24
    %v1891 = vpop.permute.xlu0 %1890
    %1892 = vrot.lane.b32.xlu0 %v1606, 24
    %v1893 = vpop.permute.xlu0 %1892
    %v1896 = vsel %vm427, %v602, %v1879
    %v1897 = vsel %vm427, %v604, %v1881
    %v1898 = vsel %vm1785, %v1896, %v1885
    %v1899 = vsel %vm1785, %v1897, %v1887
    %v1900 = vsel %vm1788, %v1898, %v1891
    %v1901 = vsel %vm1788, %v1899, %v1893
    %1902 = vst.msk [vmem:[%s25] sm:$0xff] %vm301, %v1900
    %1903 = vst.msk [vmem:[%s25 + $0x8] sm:$0xff] %vm301, %v1901
    %v1904 = vadd.f32 %v284, %v1870
    %v1905 = vadd.f32 %v285, %v1875
    %v1906 = vld [vmem:[#allocation20] sm:$0x1]
    %v1907 = vld [vmem:[#allocation22] sm:$0x1]
    %v1908 = vsel %vm301, %v1904, 0.0
    %1909 = vadd.xlane.f32.xlu0 %v1908
    %v1910 = vpop.xlane.xlu0 %1909
    %v1911 = vsel %vm301, %v1905, 0.0
    %1912 = vadd.xlane.f32.xlu0 %v1911
    %v1913 = vpop.xlane.xlu0 %1912
    %v1914 = vrcp.pop 32.0
    %v1915 = vmul.f32 %v1910, %v1914
    %v1916 = vmul.f32 %v1913, %v1914
    %v1917 = vsub.f32 %v1904, %v1915
    %v1918 = vsub.f32 %v1905, %v1916
    %v1919 = vmul.f32 %v1917, %v1917
    %v1920 = vmul.f32 %v1918, %v1918
    %v1921 = vsel %vm301, %v1919, 0.0
    %1922 = vadd.xlane.f32.xlu0 %v1921
    %v1923 = vpop.xlane.xlu0 %1922
    %v1924 = vsel %vm301, %v1920, 0.0
    %1925 = vadd.xlane.f32.xlu0 %v1924
    %v1926 = vpop.xlane.xlu0 %1925
    %v1927 = vmul.f32 %v1923, 0.032258064
    %v1928 = vmul.f32 %v1926, 0.032258064
    %v1929 = vrsqrt.pop %v1927
    %v1930 = vmul.f32 %v1927, %v1929
    %vm1931 = vcmp.eq.f32.partialorder %v1927, inf
    %v1932 = vsel %vm1931, %v1927, %v1930
    %vm1933 = vcmp.eq.f32.partialorder %v1927, 0.0
    %v1934 = vand.u32 %v1927, 2147483648
    %v1935 = vsel %vm1933, %v1934, %v1932
    %v1936 = vrsqrt.pop %v1928
    %v1937 = vmul.f32 %v1928, %v1936
    %vm1938 = vcmp.eq.f32.partialorder %v1928, inf
    %v1939 = vsel %vm1938, %v1928, %v1937
    %vm1940 = vcmp.eq.f32.partialorder %v1928, 0.0
    %v1941 = vand.u32 %v1928, 2147483648
    %v1942 = vsel %vm1940, %v1941, %v1939
    %v1943 = vadd.f32 %v1935, 1e-06
    %v1944 = vadd.f32 %v1942, 1e-06
    %v1945 = vrcp.pop %v1943
    %v1946 = vrcp.pop %v1944
    %v1948 = vlaneseq
    %v1949 = vshrl.u32 %v1948, 7
    %v1950 = vsub.s32 0, %v1949
    %v1951 = vrot.slane %v1906, %v1950
    %v1953 = vmul.f32 %v1951, %v1917
    %v1954 = vmul.f32 %v1951, %v1918
    %v1955 = vmul.f32 %v1953, %v1945
    %v1956 = vmul.f32 %v1954, %v1946
    %v1958 = vlaneseq
    %v1959 = vshrl.u32 %v1958, 7
    %v1960 = vsub.s32 0, %v1959
    %v1961 = vrot.slane %v1907, %v1960
    %v1963 = vadd.f32 %v1955, %v1961
    %v1964 = vadd.f32 %v1956, %v1961
    %v1965 = vld [vmem:[%s8] sm:$0xff]
    %v1966 = vld [vmem:[%s8 + $0x8] sm:$0xff]
    %v1967 = vld [vmem:[%s8 + $0x10] sm:$0xff]
    %v1968 = vld [vmem:[%s8 + $0x18] sm:$0xff]
    %v1969 = vld [vmem:[#allocation8] sm:$0x1]
    %v1971 = vlaneseq
    %v1972 = vshrl.u32 %v1971, 7
    %v1973 = vsub.s32 0, %v1972
    %v1974 = vrot.slane %v1969, %v1973
    %v1977 = vsel %vm301, %v1963, 0
    %v1980 = vsel %vm301, %v1964, 0
    %1982 = vmatprep.subr.mxu0 0.0
    %1983 = vmatpush1.msra.mxu0 0.0
    %1984 = vmatprep.subr.mxu0 0.0
    %1985 = vmatpush1.msra.mxu0 0.0
    %1986 = vmatprep.subr.mxu0 0.0
    %1987 = vmatpush1.msra.mxu0 0.0
    %1988 = vmatprep.subr.mxu0 0.0
    %1989 = vmatpush1.msra.mxu0 0.0
    %1990 = vmatprep.subr.mxu0 0.0
    %1991 = vmatpush1.msra.mxu0 0.0
    %1992 = vmatprep.subr.mxu0 0.0
    %1993 = vmatpush1.msra.mxu0 0.0
    %1994 = vmatprep.subr.mxu0 0.0
    %1995 = vmatpush1.msra.mxu0 0.0
    %1996 = vmatprep.subr.mxu0 0.0
    %1997 = vmatpush1.msra.mxu0 0.0
    %1998 = vmatprep.subr.mxu0 0.0
    %1999 = vmatpush1.msra.mxu0 0.0
    %2000 = vmatprep.subr.mxu0 0.0
    %2001 = vmatpush1.msra.mxu0 0.0
    %2002 = vmatprep.subr.mxu0 0.0
    %2003 = vmatpush1.msra.mxu0 0.0
    %2004 = vmatprep.subr.mxu0 0.0
    %2005 = vmatpush1.msra.mxu0 0.0
    %2006 = vmatprep.subr.mxu0 0.0
    %2007 = vmatpush1.msra.mxu0 %v1968
    %2008 = vmatprep.subr.mxu0 0.0
    %2009 = vmatpush1.msra.mxu0 %v1967
    %2010 = vmatprep.subr.mxu0 0.0
    %2011 = vmatpush1.msra.mxu0 %v1966
    %2012 = vmatprep.subr.mxu0 0.0
    %2013 = vmatpush1.msra.mxu0 %v1965
    %2014 = vmatprep.subr.mxu0 0.0
    %2015 = vmatpush2.msra.mxu0 0.0
    %2016 = vmatprep.subr.mxu0 0.0
    %2017 = vmatpush2.msra.mxu0 0.0
    %2018 = vmatprep.subr.mxu0 0.0
    %2019 = vmatpush2.msra.mxu0 0.0
    %2020 = vmatprep.subr.mxu0 0.0
    %2021 = vmatpush2.msra.mxu0 0.0
    %2022 = vmatprep.subr.mxu0 0.0
    %2023 = vmatpush2.msra.mxu0 0.0
    %2024 = vmatprep.subr.mxu0 0.0
    %2025 = vmatpush2.msra.mxu0 0.0
    %2026 = vmatprep.subr.mxu0 0.0
    %2027 = vmatpush2.msra.mxu0 0.0
    %2028 = vmatprep.subr.mxu0 0.0
    %2029 = vmatpush2.msra.mxu0 0.0
    %2030 = vmatprep.subr.mxu0 0.0
    %2031 = vmatpush2.msra.mxu0 0.0
    %2032 = vmatprep.subr.mxu0 0.0
    %2033 = vmatpush2.msra.mxu0 0.0
    %2034 = vmatprep.subr.mxu0 0.0
    %2035 = vmatpush2.msra.mxu0 0.0
    %2036 = vmatprep.subr.mxu0 0.0
    %2037 = vmatpush2.msra.mxu0 0.0
    %2038 = vmatprep.subr.mxu0 0.0
    %2039 = vmatpush2.msra.mxu0 0.0
    %2040 = vmatprep.subr.mxu0 0.0
    %2041 = vmatpush2.msra.mxu0 0.0
    %2042 = vmatprep.subr.mxu0 0.0
    %2043 = vmatpush2.msra.mxu0 0.0
    %2044 = vmatprep.subr.mxu0 0.0
    %2045 = vmatpush2.msra.mxu0 0.0
    %2046 = vmatprep.mubr.f32.mxu0 0.0
    %2047 = vmatmul.mubr.f32.gmra.mxu0 %v1977
    %v2048 = vpop.f32.mrf.mxu0
    %v2049 = vadd.f32 %v1974, %v2048
    %v2050 = vpop.f32.mrf.mxu0
    %2051 = vmatprep.mubr.f32.mxu0 0.0
    %2052 = vmatmul.mubr.f32.gmra.mxu0 %v1980
    %v2053 = vpop.f32.mrf.mxu0
    %v2054 = vadd.f32 %v1974, %v2053
    %v2055 = vpop.f32.mrf.mxu0
    %2056 = vdwg.mxu0
    %v2057 = vld [vmem:[#allocation10] sm:$0xff]
    %v2058 = vld [vmem:[#allocation10 + $0x8] sm:$0xff]
    %v2059 = vld [vmem:[#allocation10 + $0x10] sm:$0xff]
    %v2060 = vld [vmem:[#allocation10 + $0x18] sm:$0xff]
    %v2061 = vld [vmem:[#allocation11] sm:$0x1]
    %v2063 = vlaneseq
    %v2064 = vshrl.u32 %v2063, 7
    %v2065 = vsub.s32 0, %v2064
    %v2066 = vrot.slane %v2061, %v2065
    %v2069 = vsel %vm301, %v286, 0
    %v2072 = vsel %vm301, %v287, 0
    %v2075 = vsel %vm301, %v288, 0
    %v2078 = vsel %vm301, %v289, 0
    %2080 = vmatprep.subr.mxu0 0.0
    %2081 = vmatpush1.msra.mxu0 0.0
    %2082 = vmatprep.subr.mxu0 0.0
    %2083 = vmatpush1.msra.mxu0 0.0
    %2084 = vmatprep.subr.mxu0 0.0
    %2085 = vmatpush1.msra.mxu0 0.0
    %2086 = vmatprep.subr.mxu0 0.0
    %2087 = vmatpush1.msra.mxu0 0.0
    %2088 = vmatprep.subr.mxu0 0.0
    %2089 = vmatpush1.msra.mxu0 0.0
    %2090 = vmatprep.subr.mxu0 0.0
    %2091 = vmatpush1.msra.mxu0 0.0
    %2092 = vmatprep.subr.mxu0 0.0
    %2093 = vmatpush1.msra.mxu0 0.0
    %2094 = vmatprep.subr.mxu0 0.0
    %2095 = vmatpush1.msra.mxu0 0.0
    %2096 = vmatprep.subr.mxu0 0.0
    %2097 = vmatpush1.msra.mxu0 0.0
    %2098 = vmatprep.subr.mxu0 0.0
    %2099 = vmatpush1.msra.mxu0 0.0
    %2100 = vmatprep.subr.mxu0 0.0
    %2101 = vmatpush1.msra.mxu0 0.0
    %2102 = vmatprep.subr.mxu0 0.0
    %2103 = vmatpush1.msra.mxu0 0.0
    %2104 = vmatprep.subr.mxu0 0.0
    %2105 = vmatpush1.msra.mxu0 %v2060
    %2106 = vmatprep.subr.mxu0 0.0
    %2107 = vmatpush1.msra.mxu0 %v2059
    %2108 = vmatprep.subr.mxu0 0.0
    %2109 = vmatpush1.msra.mxu0 %v2058
    %2110 = vmatprep.subr.mxu0 0.0
    %2111 = vmatpush1.msra.mxu0 %v2057
    %2112 = vmatprep.subr.mxu0 0.0
    %2113 = vmatpush2.msra.mxu0 0.0
    %2114 = vmatprep.subr.mxu0 0.0
    %2115 = vmatpush2.msra.mxu0 0.0
    %2116 = vmatprep.subr.mxu0 0.0
    %2117 = vmatpush2.msra.mxu0 0.0
    %2118 = vmatprep.subr.mxu0 0.0
    %2119 = vmatpush2.msra.mxu0 0.0
    %2120 = vmatprep.subr.mxu0 0.0
    %2121 = vmatpush2.msra.mxu0 0.0
    %2122 = vmatprep.subr.mxu0 0.0
    %2123 = vmatpush2.msra.mxu0 0.0
    %2124 = vmatprep.subr.mxu0 0.0
    %2125 = vmatpush2.msra.mxu0 0.0
    %2126 = vmatprep.subr.mxu0 0.0
    %2127 = vmatpush2.msra.mxu0 0.0
    %2128 = vmatprep.subr.mxu0 0.0
    %2129 = vmatpush2.msra.mxu0 0.0
    %2130 = vmatprep.subr.mxu0 0.0
    %2131 = vmatpush2.msra.mxu0 0.0
    %2132 = vmatprep.subr.mxu0 0.0
    %2133 = vmatpush2.msra.mxu0 0.0
    %2134 = vmatprep.subr.mxu0 0.0
    %2135 = vmatpush2.msra.mxu0 0.0
    %2136 = vmatprep.subr.mxu0 0.0
    %2137 = vmatpush2.msra.mxu0 0.0
    %2138 = vmatprep.subr.mxu0 0.0
    %2139 = vmatpush2.msra.mxu0 0.0
    %2140 = vmatprep.subr.mxu0 0.0
    %2141 = vmatpush2.msra.mxu0 0.0
    %2142 = vmatprep.subr.mxu0 0.0
    %2143 = vmatpush2.msra.mxu0 0.0
    %2144 = vmatprep.mubr.f32.mxu0 0.0
    %2145 = vmatmul.mubr.f32.gmra.mxu0 %v2069
    %v2146 = vpop.f32.mrf.mxu0
    %v2147 = vadd.f32 %v2066, %v2146
    %v2148 = vpop.f32.mrf.mxu0
    %2149 = vmatprep.mubr.f32.mxu0 0.0
    %2150 = vmatmul.mubr.f32.gmra.mxu0 %v2072
    %v2151 = vpop.f32.mrf.mxu0
    %v2152 = vadd.f32 %v2066, %v2151
    %v2153 = vpop.f32.mrf.mxu0
    %2154 = vmatprep.mubr.f32.mxu0 0.0
    %2155 = vmatmul.mubr.f32.gmra.mxu0 %v2075
    %v2156 = vpop.f32.mrf.mxu0
    %v2157 = vadd.f32 %v2066, %v2156
    %v2158 = vpop.f32.mrf.mxu0
    %2159 = vmatprep.mubr.f32.mxu0 0.0
    %2160 = vmatmul.mubr.f32.gmra.mxu0 %v2078
    %v2161 = vpop.f32.mrf.mxu0
    %v2162 = vadd.f32 %v2066, %v2161
    %v2163 = vpop.f32.mrf.mxu0
    %2164 = vdwg.mxu0
    %v2165 = vld [vmem:[%s3] sm:$0x3]
    %v2166 = vld [vmem:[#allocation13] sm:$0xff]
    %v2167 = vld [vmem:[#allocation13 + $0x8] sm:$0xff]
    %v2168 = vld [vmem:[#allocation13 + $0x10] sm:$0xff]
    %v2169 = vld [vmem:[#allocation13 + $0x18] sm:$0xff]
    %v2170 = vld [vmem:[#allocation14] sm:$0x1]
    %vm2171 = vcmp.gt.f32.partialorder %v2165, 0.0
    %v2172 = vsel %vm2171, -1e+09, 0.0
    %v2175 = vunpack.c.l.s4 1966171168
    %v2176 = vunpack.c.0.s8 %v2175
    %v2177 = vlaneseq
    %v2178 = vshrl.u32 %v2177, 7
    %v2179 = vsub.s32 %v2176, %v2178
    %v2180 = vrot.slane %v2172, %v2179
    %v2181 = vcombine.high %v2180, %v2180
    %v2183 = vunpack.c.l.s4 1966171168
    %v2184 = vunpack.c.0.s8 %v2183
    %v2185 = vlaneseq
    %v2186 = vshrl.u32 %v2185, 7
    %v2187 = vsub.s32 %v2184, %v2186
    %v2188 = vrot.slane %v2180, %v2187
    %v2190 = vunpack.c.l.s4 1966171168
    %v2191 = vunpack.c.0.s8 %v2190
    %v2192 = vlaneseq
    %v2193 = vshrl.u32 %v2192, 7
    %v2194 = vsub.s32 %v2191, %v2193
    %v2195 = vrot.slane %v2181, %v2194
    %v2196 = vlaneseq
    %v2197 = vshrl.u32 %v2196, 7
    %v2198 = vsub.s32 0, %v2197
    %v2199 = vrot.slane %v2188, %v2198
    %v2200 = vlaneseq
    %v2201 = vshrl.u32 %v2200, 7
    %v2202 = vsub.s32 0, %v2201
    %v2203 = vrot.slane %v2195, %v2202
    %v2207 = vsel %vm427, %v2049, 0
    %v2210 = vsel %vm427, %v2147, 0
    %v2213 = vsel %vm427, %v2152, 0
    %2215 = vmatprep.subr.mxu0 0.0
    %2216 = vmatpush1.xpose.msra.mxu0 0.0
    %2217 = vmatprep.subr.mxu0 0.0
    %2218 = vmatpush1.xpose.msra.mxu0 0.0
    %2219 = vmatprep.subr.mxu0 0.0
    %2220 = vmatpush1.xpose.msra.mxu0 0.0
    %2221 = vmatprep.subr.mxu0 0.0
    %2222 = vmatpush1.xpose.msra.mxu0 0.0
    %2223 = vmatprep.subr.mxu0 0.0
    %2224 = vmatpush1.xpose.msra.mxu0 0.0
    %2225 = vmatprep.subr.mxu0 0.0
    %2226 = vmatpush1.xpose.msra.mxu0 0.0
    %2227 = vmatprep.subr.mxu0 0.0
    %2228 = vmatpush1.xpose.msra.mxu0 0.0
    %2229 = vmatprep.subr.mxu0 0.0
    %2230 = vmatpush1.xpose.msra.mxu0 0.0
    %2231 = vmatprep.subr.mxu0 0.0
    %2232 = vmatpush1.xpose.msra.mxu0 0.0
    %2233 = vmatprep.subr.mxu0 0.0
    %2234 = vmatpush1.xpose.msra.mxu0 0.0
    %2235 = vmatprep.subr.mxu0 0.0
    %2236 = vmatpush1.xpose.msra.mxu0 0.0
    %2237 = vmatprep.subr.mxu0 0.0
    %2238 = vmatpush1.xpose.msra.mxu0 0.0
    %2239 = vmatprep.subr.mxu0 0.0
    %2240 = vmatpush1.xpose.msra.mxu0 0.0
    %2241 = vmatprep.subr.mxu0 0.0
    %2242 = vmatpush1.xpose.msra.mxu0 0.0
    %2243 = vmatprep.subr.mxu0 0.0
    %2244 = vmatpush1.xpose.msra.mxu0 %v2213
    %2245 = vmatprep.subr.mxu0 0.0
    %2246 = vmatpush1.xpose.msra.mxu0 %v2210
    %2247 = vmatprep.subr.mxu0 0.0
    %2248 = vmatpush2.xpose.msra.mxu0 0.0
    %2249 = vmatprep.subr.mxu0 0.0
    %2250 = vmatpush2.xpose.msra.mxu0 0.0
    %2251 = vmatprep.subr.mxu0 0.0
    %2252 = vmatpush2.xpose.msra.mxu0 0.0
    %2253 = vmatprep.subr.mxu0 0.0
    %2254 = vmatpush2.xpose.msra.mxu0 0.0
    %2255 = vmatprep.subr.mxu0 0.0
    %2256 = vmatpush2.xpose.msra.mxu0 0.0
    %2257 = vmatprep.subr.mxu0 0.0
    %2258 = vmatpush2.xpose.msra.mxu0 0.0
    %2259 = vmatprep.subr.mxu0 0.0
    %2260 = vmatpush2.xpose.msra.mxu0 0.0
    %2261 = vmatprep.subr.mxu0 0.0
    %2262 = vmatpush2.xpose.msra.mxu0 0.0
    %2263 = vmatprep.subr.mxu0 0.0
    %2264 = vmatpush2.xpose.msra.mxu0 0.0
    %2265 = vmatprep.subr.mxu0 0.0
    %2266 = vmatpush2.xpose.msra.mxu0 0.0
    %2267 = vmatprep.subr.mxu0 0.0
    %2268 = vmatpush2.xpose.msra.mxu0 0.0
    %2269 = vmatprep.subr.mxu0 0.0
    %2270 = vmatpush2.xpose.msra.mxu0 0.0
    %2271 = vmatprep.subr.mxu0 0.0
    %2272 = vmatpush2.xpose.msra.mxu0 0.0
    %2273 = vmatprep.subr.mxu0 0.0
    %2274 = vmatpush2.xpose.msra.mxu0 0.0
    %2275 = vmatprep.subr.mxu0 0.0
    %2276 = vmatpush2.xpose.msra.mxu0 0.0
    %2277 = vmatprep.subr.mxu0 0.0
    %2278 = vmatpush2.xpose.msra.mxu0 0.0
    %2279 = vmatprep.mubr.f32.mxu0 0.0
    %2280 = vmatmul.mubr.f32.gmra.mxu0 %v2207
    %v2281 = vpop.f32.mrf.mxu0
    %v2282 = vadd.f32 0.0, %v2281
    %v2283 = vpop.f32.mrf.mxu0
    %2284 = vdwg.mxu0
    %v2286 = vsel %vm427, %v2054, 0
    %v2289 = vsel %vm427, %v2157, 0
    %v2292 = vsel %vm427, %v2162, 0
    %2294 = vmatprep.subr.mxu0 0.0
    %2295 = vmatpush1.xpose.msra.mxu0 0.0
    %2296 = vmatprep.subr.mxu0 0.0
    %2297 = vmatpush1.xpose.msra.mxu0 0.0
    %2298 = vmatprep.subr.mxu0 0.0
    %2299 = vmatpush1.xpose.msra.mxu0 0.0
    %2300 = vmatprep.subr.mxu0 0.0
    %2301 = vmatpush1.xpose.msra.mxu0 0.0
    %2302 = vmatprep.subr.mxu0 0.0
    %2303 = vmatpush1.xpose.msra.mxu0 0.0
    %2304 = vmatprep.subr.mxu0 0.0
    %2305 = vmatpush1.xpose.msra.mxu0 0.0
    %2306 = vmatprep.subr.mxu0 0.0
    %2307 = vmatpush1.xpose.msra.mxu0 0.0
    %2308 = vmatprep.subr.mxu0 0.0
    %2309 = vmatpush1.xpose.msra.mxu0 0.0
    %2310 = vmatprep.subr.mxu0 0.0
    %2311 = vmatpush1.xpose.msra.mxu0 0.0
    %2312 = vmatprep.subr.mxu0 0.0
    %2313 = vmatpush1.xpose.msra.mxu0 0.0
    %2314 = vmatprep.subr.mxu0 0.0
    %2315 = vmatpush1.xpose.msra.mxu0 0.0
    %2316 = vmatprep.subr.mxu0 0.0
    %2317 = vmatpush1.xpose.msra.mxu0 0.0
    %2318 = vmatprep.subr.mxu0 0.0
    %2319 = vmatpush1.xpose.msra.mxu0 0.0
    %2320 = vmatprep.subr.mxu0 0.0
    %2321 = vmatpush1.xpose.msra.mxu0 0.0
    %2322 = vmatprep.subr.mxu0 0.0
    %2323 = vmatpush1.xpose.msra.mxu0 %v2292
    %2324 = vmatprep.subr.mxu0 0.0
    %2325 = vmatpush1.xpose.msra.mxu0 %v2289
    %2326 = vmatprep.subr.mxu0 0.0
    %2327 = vmatpush2.xpose.msra.mxu0 0.0
    %2328 = vmatprep.subr.mxu0 0.0
    %2329 = vmatpush2.xpose.msra.mxu0 0.0
    %2330 = vmatprep.subr.mxu0 0.0
    %2331 = vmatpush2.xpose.msra.mxu0 0.0
    %2332 = vmatprep.subr.mxu0 0.0
    %2333 = vmatpush2.xpose.msra.mxu0 0.0
    %2334 = vmatprep.subr.mxu0 0.0
    %2335 = vmatpush2.xpose.msra.mxu0 0.0
    %2336 = vmatprep.subr.mxu0 0.0
    %2337 = vmatpush2.xpose.msra.mxu0 0.0
    %2338 = vmatprep.subr.mxu0 0.0
    %2339 = vmatpush2.xpose.msra.mxu0 0.0
    %2340 = vmatprep.subr.mxu0 0.0
    %2341 = vmatpush2.xpose.msra.mxu0 0.0
    %2342 = vmatprep.subr.mxu0 0.0
    %2343 = vmatpush2.xpose.msra.mxu0 0.0
    %2344 = vmatprep.subr.mxu0 0.0
    %2345 = vmatpush2.xpose.msra.mxu0 0.0
    %2346 = vmatprep.subr.mxu0 0.0
    %2347 = vmatpush2.xpose.msra.mxu0 0.0
    %2348 = vmatprep.subr.mxu0 0.0
    %2349 = vmatpush2.xpose.msra.mxu0 0.0
    %2350 = vmatprep.subr.mxu0 0.0
    %2351 = vmatpush2.xpose.msra.mxu0 0.0
    %2352 = vmatprep.subr.mxu0 0.0
    %2353 = vmatpush2.xpose.msra.mxu0 0.0
    %2354 = vmatprep.subr.mxu0 0.0
    %2355 = vmatpush2.xpose.msra.mxu0 0.0
    %2356 = vmatprep.subr.mxu0 0.0
    %2357 = vmatpush2.xpose.msra.mxu0 0.0
    %2358 = vmatprep.mubr.f32.mxu0 0.0
    %2359 = vmatmul.mubr.f32.gmra.mxu0 %v2286
    %v2360 = vpop.f32.mrf.mxu0
    %v2361 = vadd.f32 0.0, %v2360
    %v2362 = vpop.f32.mrf.mxu0
    %2363 = vdwg.mxu0
    %v2364 = vmul.f32 %v2282, 0.35355338
    %v2365 = vmul.f32 %v2361, 0.35355338
    %v2366 = vadd.f32 %v2364, %v2199
    %v2367 = vadd.f32 %v2365, %v2203
    %v2368 = vsel %vm1785, %v2366, -inf
    %2369 = vmax.xlane.f32.xlu0 %v2368
    %v2370 = vpop.xlane.xlu0 %2369
    %v2371 = vsel %vm1785, %v2367, -inf
    %2372 = vmax.xlane.f32.xlu0 %v2371
    %v2373 = vpop.xlane.xlu0 %2372
    %v2374 = vsub.f32 %v2366, %v2370
    %v2375 = vsub.f32 %v2367, %v2373
    %v2376 = vmul.f32 %v2374, 1.442695
    %v2377 = vpow.pop %v2376
    %v2378 = vmul.f32 %v2375, 1.442695
    %v2379 = vpow.pop %v2378
    %v2380 = vsel %vm1785, %v2377, 0.0
    %2381 = vadd.xlane.f32.xlu0 %v2380
    %v2382 = vpop.xlane.xlu0 %2381
    %v2383 = vsel %vm1785, %v2379, 0.0
    %2384 = vadd.xlane.f32.xlu0 %v2383
    %v2385 = vpop.xlane.xlu0 %2384
    %v2386 = vrcp.pop %v2382
    %v2387 = vrcp.pop %v2385
    %v2388 = vmul.f32 %v2377, %v2386
    %v2389 = vmul.f32 %v2379, %v2387
    %2390 = vrot.lane.b32.xlu0 %v2147, 96
    %v2391 = vpop.permute.xlu0 %2390
    %2392 = vrot.lane.b32.xlu0 %v2152, 96
    %v2393 = vpop.permute.xlu0 %2392
    %v2397 = vsel %vm1785, %v2388, 0
    %2399 = vmatprep.subr.mxu0 0.0
    %2400 = vmatpush1.msra.mxu0 0.0
    %2401 = vmatprep.subr.mxu0 0.0
    %2402 = vmatpush1.msra.mxu0 0.0
    %2403 = vmatprep.subr.mxu0 0.0
    %2404 = vmatpush1.msra.mxu0 0.0
    %2405 = vmatprep.subr.mxu0 0.0
    %2406 = vmatpush1.msra.mxu0 0.0
    %2407 = vmatprep.subr.mxu0 0.0
    %2408 = vmatpush1.msra.mxu0 0.0
    %2409 = vmatprep.subr.mxu0 0.0
    %2410 = vmatpush1.msra.mxu0 0.0
    %2411 = vmatprep.subr.mxu0 0.0
    %2412 = vmatpush1.msra.mxu0 0.0
    %2413 = vmatprep.subr.mxu0 0.0
    %2414 = vmatpush1.msra.mxu0 0.0
    %2415 = vmatprep.subr.mxu0 0.0
    %2416 = vmatpush1.msra.mxu0 0.0
    %2417 = vmatprep.subr.mxu0 0.0
    %2418 = vmatpush1.msra.mxu0 0.0
    %2419 = vmatprep.subr.mxu0 0.0
    %2420 = vmatpush1.msra.mxu0 0.0
    %2421 = vmatprep.subr.mxu0 0.0
    %2422 = vmatpush1.msra.mxu0 0.0
    %2423 = vmatprep.subr.mxu0 0.0
    %2424 = vmatpush1.msra.mxu0 0.0
    %2425 = vmatprep.subr.mxu0 0.0
    %2426 = vmatpush1.msra.mxu0 0.0
    %2427 = vmatprep.subr.mxu0 0.0
    %2428 = vmatpush1.msra.mxu0 %v2393
    %2429 = vmatprep.subr.mxu0 0.0
    %2430 = vmatpush1.msra.mxu0 %v2391
    %2431 = vmatprep.subr.mxu0 0.0
    %2432 = vmatpush2.msra.mxu0 0.0
    %2433 = vmatprep.subr.mxu0 0.0
    %2434 = vmatpush2.msra.mxu0 0.0
    %2435 = vmatprep.subr.mxu0 0.0
    %2436 = vmatpush2.msra.mxu0 0.0
    %2437 = vmatprep.subr.mxu0 0.0
    %2438 = vmatpush2.msra.mxu0 0.0
    %2439 = vmatprep.subr.mxu0 0.0
    %2440 = vmatpush2.msra.mxu0 0.0
    %2441 = vmatprep.subr.mxu0 0.0
    %2442 = vmatpush2.msra.mxu0 0.0
    %2443 = vmatprep.subr.mxu0 0.0
    %2444 = vmatpush2.msra.mxu0 0.0
    %2445 = vmatprep.subr.mxu0 0.0
    %2446 = vmatpush2.msra.mxu0 0.0
    %2447 = vmatprep.subr.mxu0 0.0
    %2448 = vmatpush2.msra.mxu0 0.0
    %2449 = vmatprep.subr.mxu0 0.0
    %2450 = vmatpush2.msra.mxu0 0.0
    %2451 = vmatprep.subr.mxu0 0.0
    %2452 = vmatpush2.msra.mxu0 0.0
    %2453 = vmatprep.subr.mxu0 0.0
    %2454 = vmatpush2.msra.mxu0 0.0
    %2455 = vmatprep.subr.mxu0 0.0
    %2456 = vmatpush2.msra.mxu0 0.0
    %2457 = vmatprep.subr.mxu0 0.0
    %2458 = vmatpush2.msra.mxu0 0.0
    %2459 = vmatprep.subr.mxu0 0.0
    %2460 = vmatpush2.msra.mxu0 0.0
    %2461 = vmatprep.subr.mxu0 0.0
    %2462 = vmatpush2.msra.mxu0 0.0
    %2463 = vmatprep.mubr.f32.mxu0 0.0
    %2464 = vmatmul.mubr.f32.gmra.mxu0 %v2397
    %v2465 = vpop.f32.mrf.mxu0
    %v2466 = vadd.f32 0.0, %v2465
    %v2467 = vpop.f32.mrf.mxu0
    %2468 = vdwg.mxu0
    %2469 = vrot.lane.b32.xlu0 %v2157, 96
    %v2470 = vpop.permute.xlu0 %2469
    %2471 = vrot.lane.b32.xlu0 %v2162, 96
    %v2472 = vpop.permute.xlu0 %2471
    %v2476 = vsel %vm1785, %v2389, 0
    %2478 = vmatprep.subr.mxu0 0.0
    %2479 = vmatpush1.msra.mxu0 0.0
    %2480 = vmatprep.subr.mxu0 0.0
    %2481 = vmatpush1.msra.mxu0 0.0
    %2482 = vmatprep.subr.mxu0 0.0
    %2483 = vmatpush1.msra.mxu0 0.0
    %2484 = vmatprep.subr.mxu0 0.0
    %2485 = vmatpush1.msra.mxu0 0.0
    %2486 = vmatprep.subr.mxu0 0.0
    %2487 = vmatpush1.msra.mxu0 0.0
    %2488 = vmatprep.subr.mxu0 0.0
    %2489 = vmatpush1.msra.mxu0 0.0
    %2490 = vmatprep.subr.mxu0 0.0
    %2491 = vmatpush1.msra.mxu0 0.0
    %2492 = vmatprep.subr.mxu0 0.0
    %2493 = vmatpush1.msra.mxu0 0.0
    %2494 = vmatprep.subr.mxu0 0.0
    %2495 = vmatpush1.msra.mxu0 0.0
    %2496 = vmatprep.subr.mxu0 0.0
    %2497 = vmatpush1.msra.mxu0 0.0
    %2498 = vmatprep.subr.mxu0 0.0
    %2499 = vmatpush1.msra.mxu0 0.0
    %2500 = vmatprep.subr.mxu0 0.0
    %2501 = vmatpush1.msra.mxu0 0.0
    %2502 = vmatprep.subr.mxu0 0.0
    %2503 = vmatpush1.msra.mxu0 0.0
    %2504 = vmatprep.subr.mxu0 0.0
    %2505 = vmatpush1.msra.mxu0 0.0
    %2506 = vmatprep.subr.mxu0 0.0
    %2507 = vmatpush1.msra.mxu0 %v2472
    %2508 = vmatprep.subr.mxu0 0.0
    %2509 = vmatpush1.msra.mxu0 %v2470
    %2510 = vmatprep.subr.mxu0 0.0
    %2511 = vmatpush2.msra.mxu0 0.0
    %2512 = vmatprep.subr.mxu0 0.0
    %2513 = vmatpush2.msra.mxu0 0.0
    %2514 = vmatprep.subr.mxu0 0.0
    %2515 = vmatpush2.msra.mxu0 0.0
    %2516 = vmatprep.subr.mxu0 0.0
    %2517 = vmatpush2.msra.mxu0 0.0
    %2518 = vmatprep.subr.mxu0 0.0
    %2519 = vmatpush2.msra.mxu0 0.0
    %2520 = vmatprep.subr.mxu0 0.0
    %2521 = vmatpush2.msra.mxu0 0.0
    %2522 = vmatprep.subr.mxu0 0.0
    %2523 = vmatpush2.msra.mxu0 0.0
    %2524 = vmatprep.subr.mxu0 0.0
    %2525 = vmatpush2.msra.mxu0 0.0
    %2526 = vmatprep.subr.mxu0 0.0
    %2527 = vmatpush2.msra.mxu0 0.0
    %2528 = vmatprep.subr.mxu0 0.0
    %2529 = vmatpush2.msra.mxu0 0.0
    %2530 = vmatprep.subr.mxu0 0.0
    %2531 = vmatpush2.msra.mxu0 0.0
    %2532 = vmatprep.subr.mxu0 0.0
    %2533 = vmatpush2.msra.mxu0 0.0
    %2534 = vmatprep.subr.mxu0 0.0
    %2535 = vmatpush2.msra.mxu0 0.0
    %2536 = vmatprep.subr.mxu0 0.0
    %2537 = vmatpush2.msra.mxu0 0.0
    %2538 = vmatprep.subr.mxu0 0.0
    %2539 = vmatpush2.msra.mxu0 0.0
    %2540 = vmatprep.subr.mxu0 0.0
    %2541 = vmatpush2.msra.mxu0 0.0
    %2542 = vmatprep.mubr.f32.mxu0 0.0
    %2543 = vmatmul.mubr.f32.gmra.mxu0 %v2476
    %v2544 = vpop.f32.mrf.mxu0
    %v2545 = vadd.f32 0.0, %v2544
    %v2546 = vpop.f32.mrf.mxu0
    %2547 = vdwg.mxu0
    %2548 = vrot.lane.b32.xlu0 %v2049, 120
    %v2549 = vpop.permute.xlu0 %2548
    %2550 = vrot.lane.b32.xlu0 %v2147, 120
    %v2551 = vpop.permute.xlu0 %2550
    %2552 = vrot.lane.b32.xlu0 %v2152, 120
    %v2553 = vpop.permute.xlu0 %2552
    %v2554 = vsel %vm427, %v2549, 0
    %v2556 = vsel %vm427, %v2551, 0
    %v2558 = vsel %vm427, %v2553, 0
    %2560 = vmatprep.subr.mxu0 0.0
    %2561 = vmatpush1.xpose.msra.mxu0 0.0
    %2562 = vmatprep.subr.mxu0 0.0
    %2563 = vmatpush1.xpose.msra.mxu0 0.0
    %2564 = vmatprep.subr.mxu0 0.0
    %2565 = vmatpush1.xpose.msra.mxu0 0.0
    %2566 = vmatprep.subr.mxu0 0.0
    %2567 = vmatpush1.xpose.msra.mxu0 0.0
    %2568 = vmatprep.subr.mxu0 0.0
    %2569 = vmatpush1.xpose.msra.mxu0 0.0
    %2570 = vmatprep.subr.mxu0 0.0
    %2571 = vmatpush1.xpose.msra.mxu0 0.0
    %2572 = vmatprep.subr.mxu0 0.0
    %2573 = vmatpush1.xpose.msra.mxu0 0.0
    %2574 = vmatprep.subr.mxu0 0.0
    %2575 = vmatpush1.xpose.msra.mxu0 0.0
    %2576 = vmatprep.subr.mxu0 0.0
    %2577 = vmatpush1.xpose.msra.mxu0 0.0
    %2578 = vmatprep.subr.mxu0 0.0
    %2579 = vmatpush1.xpose.msra.mxu0 0.0
    %2580 = vmatprep.subr.mxu0 0.0
    %2581 = vmatpush1.xpose.msra.mxu0 0.0
    %2582 = vmatprep.subr.mxu0 0.0
    %2583 = vmatpush1.xpose.msra.mxu0 0.0
    %2584 = vmatprep.subr.mxu0 0.0
    %2585 = vmatpush1.xpose.msra.mxu0 0.0
    %2586 = vmatprep.subr.mxu0 0.0
    %2587 = vmatpush1.xpose.msra.mxu0 0.0
    %2588 = vmatprep.subr.mxu0 0.0
    %2589 = vmatpush1.xpose.msra.mxu0 %v2558
    %2590 = vmatprep.subr.mxu0 0.0
    %2591 = vmatpush1.xpose.msra.mxu0 %v2556
    %2592 = vmatprep.subr.mxu0 0.0
    %2593 = vmatpush2.xpose.msra.mxu0 0.0
    %2594 = vmatprep.subr.mxu0 0.0
    %2595 = vmatpush2.xpose.msra.mxu0 0.0
    %2596 = vmatprep.subr.mxu0 0.0
    %2597 = vmatpush2.xpose.msra.mxu0 0.0
    %2598 = vmatprep.subr.mxu0 0.0
    %2599 = vmatpush2.xpose.msra.mxu0 0.0
    %2600 = vmatprep.subr.mxu0 0.0
    %2601 = vmatpush2.xpose.msra.mxu0 0.0
    %2602 = vmatprep.subr.mxu0 0.0
    %2603 = vmatpush2.xpose.msra.mxu0 0.0
    %2604 = vmatprep.subr.mxu0 0.0
    %2605 = vmatpush2.xpose.msra.mxu0 0.0
    %2606 = vmatprep.subr.mxu0 0.0
    %2607 = vmatpush2.xpose.msra.mxu0 0.0
    %2608 = vmatprep.subr.mxu0 0.0
    %2609 = vmatpush2.xpose.msra.mxu0 0.0
    %2610 = vmatprep.subr.mxu0 0.0
    %2611 = vmatpush2.xpose.msra.mxu0 0.0
    %2612 = vmatprep.subr.mxu0 0.0
    %2613 = vmatpush2.xpose.msra.mxu0 0.0
    %2614 = vmatprep.subr.mxu0 0.0
    %2615 = vmatpush2.xpose.msra.mxu0 0.0
    %2616 = vmatprep.subr.mxu0 0.0
    %2617 = vmatpush2.xpose.msra.mxu0 0.0
    %2618 = vmatprep.subr.mxu0 0.0
    %2619 = vmatpush2.xpose.msra.mxu0 0.0
    %2620 = vmatprep.subr.mxu0 0.0
    %2621 = vmatpush2.xpose.msra.mxu0 0.0
    %2622 = vmatprep.subr.mxu0 0.0
    %2623 = vmatpush2.xpose.msra.mxu0 0.0
    %2624 = vmatprep.mubr.f32.mxu0 0.0
    %2625 = vmatmul.mubr.f32.gmra.mxu0 %v2554
    %v2626 = vpop.f32.mrf.mxu0
    %v2627 = vadd.f32 0.0, %v2626
    %v2628 = vpop.f32.mrf.mxu0
    %2629 = vdwg.mxu0
    %2630 = vrot.lane.b32.xlu0 %v2054, 120
    %v2631 = vpop.permute.xlu0 %2630
    %2632 = vrot.lane.b32.xlu0 %v2157, 120
    %v2633 = vpop.permute.xlu0 %2632
    %2634 = vrot.lane.b32.xlu0 %v2162, 120
    %v2635 = vpop.permute.xlu0 %2634
    %v2636 = vsel %vm427, %v2631, 0
    %v2638 = vsel %vm427, %v2633, 0
    %v2640 = vsel %vm427, %v2635, 0
    %2642 = vmatprep.subr.mxu0 0.0
    %2643 = vmatpush1.xpose.msra.mxu0 0.0
    %2644 = vmatprep.subr.mxu0 0.0
    %2645 = vmatpush1.xpose.msra.mxu0 0.0
    %2646 = vmatprep.subr.mxu0 0.0
    %2647 = vmatpush1.xpose.msra.mxu0 0.0
    %2648 = vmatprep.subr.mxu0 0.0
    %2649 = vmatpush1.xpose.msra.mxu0 0.0
    %2650 = vmatprep.subr.mxu0 0.0
    %2651 = vmatpush1.xpose.msra.mxu0 0.0
    %2652 = vmatprep.subr.mxu0 0.0
    %2653 = vmatpush1.xpose.msra.mxu0 0.0
    %2654 = vmatprep.subr.mxu0 0.0
    %2655 = vmatpush1.xpose.msra.mxu0 0.0
    %2656 = vmatprep.subr.mxu0 0.0
    %2657 = vmatpush1.xpose.msra.mxu0 0.0
    %2658 = vmatprep.subr.mxu0 0.0
    %2659 = vmatpush1.xpose.msra.mxu0 0.0
    %2660 = vmatprep.subr.mxu0 0.0
    %2661 = vmatpush1.xpose.msra.mxu0 0.0
    %2662 = vmatprep.subr.mxu0 0.0
    %2663 = vmatpush1.xpose.msra.mxu0 0.0
    %2664 = vmatprep.subr.mxu0 0.0
    %2665 = vmatpush1.xpose.msra.mxu0 0.0
    %2666 = vmatprep.subr.mxu0 0.0
    %2667 = vmatpush1.xpose.msra.mxu0 0.0
    %2668 = vmatprep.subr.mxu0 0.0
    %2669 = vmatpush1.xpose.msra.mxu0 0.0
    %2670 = vmatprep.subr.mxu0 0.0
    %2671 = vmatpush1.xpose.msra.mxu0 %v2640
    %2672 = vmatprep.subr.mxu0 0.0
    %2673 = vmatpush1.xpose.msra.mxu0 %v2638
    %2674 = vmatprep.subr.mxu0 0.0
    %2675 = vmatpush2.xpose.msra.mxu0 0.0
    %2676 = vmatprep.subr.mxu0 0.0
    %2677 = vmatpush2.xpose.msra.mxu0 0.0
    %2678 = vmatprep.subr.mxu0 0.0
    %2679 = vmatpush2.xpose.msra.mxu0 0.0
    %2680 = vmatprep.subr.mxu0 0.0
    %2681 = vmatpush2.xpose.msra.mxu0 0.0
    %2682 = vmatprep.subr.mxu0 0.0
    %2683 = vmatpush2.xpose.msra.mxu0 0.0
    %2684 = vmatprep.subr.mxu0 0.0
    %2685 = vmatpush2.xpose.msra.mxu0 0.0
    %2686 = vmatprep.subr.mxu0 0.0
    %2687 = vmatpush2.xpose.msra.mxu0 0.0
    %2688 = vmatprep.subr.mxu0 0.0
    %2689 = vmatpush2.xpose.msra.mxu0 0.0
    %2690 = vmatprep.subr.mxu0 0.0
    %2691 = vmatpush2.xpose.msra.mxu0 0.0
    %2692 = vmatprep.subr.mxu0 0.0
    %2693 = vmatpush2.xpose.msra.mxu0 0.0
    %2694 = vmatprep.subr.mxu0 0.0
    %2695 = vmatpush2.xpose.msra.mxu0 0.0
    %2696 = vmatprep.subr.mxu0 0.0
    %2697 = vmatpush2.xpose.msra.mxu0 0.0
    %2698 = vmatprep.subr.mxu0 0.0
    %2699 = vmatpush2.xpose.msra.mxu0 0.0
    %2700 = vmatprep.subr.mxu0 0.0
    %2701 = vmatpush2.xpose.msra.mxu0 0.0
    %2702 = vmatprep.subr.mxu0 0.0
    %2703 = vmatpush2.xpose.msra.mxu0 0.0
    %2704 = vmatprep.subr.mxu0 0.0
    %2705 = vmatpush2.xpose.msra.mxu0 0.0
    %2706 = vmatprep.mubr.f32.mxu0 0.0
    %2707 = vmatmul.mubr.f32.gmra.mxu0 %v2636
    %v2708 = vpop.f32.mrf.mxu0
    %v2709 = vadd.f32 0.0, %v2708
    %v2710 = vpop.f32.mrf.mxu0
    %2711 = vdwg.mxu0
    %v2712 = vmul.f32 %v2627, 0.35355338
    %v2713 = vmul.f32 %v2709, 0.35355338
    %v2714 = vadd.f32 %v2712, %v2199
    %v2715 = vadd.f32 %v2713, %v2203
    %v2716 = vsel %vm1785, %v2714, -inf
    %2717 = vmax.xlane.f32.xlu0 %v2716
    %v2718 = vpop.xlane.xlu0 %2717
    %v2719 = vsel %vm1785, %v2715, -inf
    %2720 = vmax.xlane.f32.xlu0 %v2719
    %v2721 = vpop.xlane.xlu0 %2720
    %v2722 = vsub.f32 %v2714, %v2718
    %v2723 = vsub.f32 %v2715, %v2721
    %v2724 = vmul.f32 %v2722, 1.442695
    %v2725 = vpow.pop %v2724
    %v2726 = vmul.f32 %v2723, 1.442695
    %v2727 = vpow.pop %v2726
    %v2728 = vsel %vm1785, %v2725, 0.0
    %2729 = vadd.xlane.f32.xlu0 %v2728
    %v2730 = vpop.xlane.xlu0 %2729
    %v2731 = vsel %vm1785, %v2727, 0.0
    %2732 = vadd.xlane.f32.xlu0 %v2731
    %v2733 = vpop.xlane.xlu0 %2732
    %v2734 = vrcp.pop %v2730
    %v2735 = vrcp.pop %v2733
    %v2736 = vmul.f32 %v2725, %v2734
    %v2737 = vmul.f32 %v2727, %v2735
    %2738 = vrot.lane.b32.xlu0 %v2147, 88
    %v2739 = vpop.permute.xlu0 %2738
    %2740 = vrot.lane.b32.xlu0 %v2152, 88
    %v2741 = vpop.permute.xlu0 %2740
    %v2745 = vsel %vm1785, %v2736, 0
    %2747 = vmatprep.subr.mxu0 0.0
    %2748 = vmatpush1.msra.mxu0 0.0
    %2749 = vmatprep.subr.mxu0 0.0
    %2750 = vmatpush1.msra.mxu0 0.0
    %2751 = vmatprep.subr.mxu0 0.0
    %2752 = vmatpush1.msra.mxu0 0.0
    %2753 = vmatprep.subr.mxu0 0.0
    %2754 = vmatpush1.msra.mxu0 0.0
    %2755 = vmatprep.subr.mxu0 0.0
    %2756 = vmatpush1.msra.mxu0 0.0
    %2757 = vmatprep.subr.mxu0 0.0
    %2758 = vmatpush1.msra.mxu0 0.0
    %2759 = vmatprep.subr.mxu0 0.0
    %2760 = vmatpush1.msra.mxu0 0.0
    %2761 = vmatprep.subr.mxu0 0.0
    %2762 = vmatpush1.msra.mxu0 0.0
    %2763 = vmatprep.subr.mxu0 0.0
    %2764 = vmatpush1.msra.mxu0 0.0
    %2765 = vmatprep.subr.mxu0 0.0
    %2766 = vmatpush1.msra.mxu0 0.0
    %2767 = vmatprep.subr.mxu0 0.0
    %2768 = vmatpush1.msra.mxu0 0.0
    %2769 = vmatprep.subr.mxu0 0.0
    %2770 = vmatpush1.msra.mxu0 0.0
    %2771 = vmatprep.subr.mxu0 0.0
    %2772 = vmatpush1.msra.mxu0 0.0
    %2773 = vmatprep.subr.mxu0 0.0
    %2774 = vmatpush1.msra.mxu0 0.0
    %2775 = vmatprep.subr.mxu0 0.0
    %2776 = vmatpush1.msra.mxu0 %v2741
    %2777 = vmatprep.subr.mxu0 0.0
    %2778 = vmatpush1.msra.mxu0 %v2739
    %2779 = vmatprep.subr.mxu0 0.0
    %2780 = vmatpush2.msra.mxu0 0.0
    %2781 = vmatprep.subr.mxu0 0.0
    %2782 = vmatpush2.msra.mxu0 0.0
    %2783 = vmatprep.subr.mxu0 0.0
    %2784 = vmatpush2.msra.mxu0 0.0
    %2785 = vmatprep.subr.mxu0 0.0
    %2786 = vmatpush2.msra.mxu0 0.0
    %2787 = vmatprep.subr.mxu0 0.0
    %2788 = vmatpush2.msra.mxu0 0.0
    %2789 = vmatprep.subr.mxu0 0.0
    %2790 = vmatpush2.msra.mxu0 0.0
    %2791 = vmatprep.subr.mxu0 0.0
    %2792 = vmatpush2.msra.mxu0 0.0
    %2793 = vmatprep.subr.mxu0 0.0
    %2794 = vmatpush2.msra.mxu0 0.0
    %2795 = vmatprep.subr.mxu0 0.0
    %2796 = vmatpush2.msra.mxu0 0.0
    %2797 = vmatprep.subr.mxu0 0.0
    %2798 = vmatpush2.msra.mxu0 0.0
    %2799 = vmatprep.subr.mxu0 0.0
    %2800 = vmatpush2.msra.mxu0 0.0
    %2801 = vmatprep.subr.mxu0 0.0
    %2802 = vmatpush2.msra.mxu0 0.0
    %2803 = vmatprep.subr.mxu0 0.0
    %2804 = vmatpush2.msra.mxu0 0.0
    %2805 = vmatprep.subr.mxu0 0.0
    %2806 = vmatpush2.msra.mxu0 0.0
    %2807 = vmatprep.subr.mxu0 0.0
    %2808 = vmatpush2.msra.mxu0 0.0
    %2809 = vmatprep.subr.mxu0 0.0
    %2810 = vmatpush2.msra.mxu0 0.0
    %2811 = vmatprep.mubr.f32.mxu0 0.0
    %2812 = vmatmul.mubr.f32.gmra.mxu0 %v2745
    %v2813 = vpop.f32.mrf.mxu0
    %v2814 = vadd.f32 0.0, %v2813
    %v2815 = vpop.f32.mrf.mxu0
    %2816 = vdwg.mxu0
    %2817 = vrot.lane.b32.xlu0 %v2157, 88
    %v2818 = vpop.permute.xlu0 %2817
    %2819 = vrot.lane.b32.xlu0 %v2162, 88
    %v2820 = vpop.permute.xlu0 %2819
    %v2824 = vsel %vm1785, %v2737, 0
    %2826 = vmatprep.subr.mxu0 0.0
    %2827 = vmatpush1.msra.mxu0 0.0
    %2828 = vmatprep.subr.mxu0 0.0
    %2829 = vmatpush1.msra.mxu0 0.0
    %2830 = vmatprep.subr.mxu0 0.0
    %2831 = vmatpush1.msra.mxu0 0.0
    %2832 = vmatprep.subr.mxu0 0.0
    %2833 = vmatpush1.msra.mxu0 0.0
    %2834 = vmatprep.subr.mxu0 0.0
    %2835 = vmatpush1.msra.mxu0 0.0
    %2836 = vmatprep.subr.mxu0 0.0
    %2837 = vmatpush1.msra.mxu0 0.0
    %2838 = vmatprep.subr.mxu0 0.0
    %2839 = vmatpush1.msra.mxu0 0.0
    %2840 = vmatprep.subr.mxu0 0.0
    %2841 = vmatpush1.msra.mxu0 0.0
    %2842 = vmatprep.subr.mxu0 0.0
    %2843 = vmatpush1.msra.mxu0 0.0
    %2844 = vmatprep.subr.mxu0 0.0
    %2845 = vmatpush1.msra.mxu0 0.0
    %2846 = vmatprep.subr.mxu0 0.0
    %2847 = vmatpush1.msra.mxu0 0.0
    %2848 = vmatprep.subr.mxu0 0.0
    %2849 = vmatpush1.msra.mxu0 0.0
    %2850 = vmatprep.subr.mxu0 0.0
    %2851 = vmatpush1.msra.mxu0 0.0
    %2852 = vmatprep.subr.mxu0 0.0
    %2853 = vmatpush1.msra.mxu0 0.0
    %2854 = vmatprep.subr.mxu0 0.0
    %2855 = vmatpush1.msra.mxu0 %v2820
    %2856 = vmatprep.subr.mxu0 0.0
    %2857 = vmatpush1.msra.mxu0 %v2818
    %2858 = vmatprep.subr.mxu0 0.0
    %2859 = vmatpush2.msra.mxu0 0.0
    %2860 = vmatprep.subr.mxu0 0.0
    %2861 = vmatpush2.msra.mxu0 0.0
    %2862 = vmatprep.subr.mxu0 0.0
    %2863 = vmatpush2.msra.mxu0 0.0
    %2864 = vmatprep.subr.mxu0 0.0
    %2865 = vmatpush2.msra.mxu0 0.0
    %2866 = vmatprep.subr.mxu0 0.0
    %2867 = vmatpush2.msra.mxu0 0.0
    %2868 = vmatprep.subr.mxu0 0.0
    %2869 = vmatpush2.msra.mxu0 0.0
    %2870 = vmatprep.subr.mxu0 0.0
    %2871 = vmatpush2.msra.mxu0 0.0
    %2872 = vmatprep.subr.mxu0 0.0
    %2873 = vmatpush2.msra.mxu0 0.0
    %2874 = vmatprep.subr.mxu0 0.0
    %2875 = vmatpush2.msra.mxu0 0.0
    %2876 = vmatprep.subr.mxu0 0.0
    %2877 = vmatpush2.msra.mxu0 0.0
    %2878 = vmatprep.subr.mxu0 0.0
    %2879 = vmatpush2.msra.mxu0 0.0
    %2880 = vmatprep.subr.mxu0 0.0
    %2881 = vmatpush2.msra.mxu0 0.0
    %2882 = vmatprep.subr.mxu0 0.0
    %2883 = vmatpush2.msra.mxu0 0.0
    %2884 = vmatprep.subr.mxu0 0.0
    %2885 = vmatpush2.msra.mxu0 0.0
    %2886 = vmatprep.subr.mxu0 0.0
    %2887 = vmatpush2.msra.mxu0 0.0
    %2888 = vmatprep.subr.mxu0 0.0
    %2889 = vmatpush2.msra.mxu0 0.0
    %2890 = vmatprep.mubr.f32.mxu0 0.0
    %2891 = vmatmul.mubr.f32.gmra.mxu0 %v2824
    %v2892 = vpop.f32.mrf.mxu0
    %v2893 = vadd.f32 0.0, %v2892
    %v2894 = vpop.f32.mrf.mxu0
    %2895 = vdwg.mxu0
    %2896 = vrot.lane.b32.xlu0 %v2049, 112
    %v2897 = vpop.permute.xlu0 %2896
    %2898 = vrot.lane.b32.xlu0 %v2147, 112
    %v2899 = vpop.permute.xlu0 %2898
    %2900 = vrot.lane.b32.xlu0 %v2152, 112
    %v2901 = vpop.permute.xlu0 %2900
    %v2902 = vsel %vm427, %v2897, 0
    %v2904 = vsel %vm427, %v2899, 0
    %v2906 = vsel %vm427, %v2901, 0
    %2908 = vmatprep.subr.mxu0 0.0
    %2909 = vmatpush1.xpose.msra.mxu0 0.0
    %2910 = vmatprep.subr.mxu0 0.0
    %2911 = vmatpush1.xpose.msra.mxu0 0.0
    %2912 = vmatprep.subr.mxu0 0.0
    %2913 = vmatpush1.xpose.msra.mxu0 0.0
    %2914 = vmatprep.subr.mxu0 0.0
    %2915 = vmatpush1.xpose.msra.mxu0 0.0
    %2916 = vmatprep.subr.mxu0 0.0
    %2917 = vmatpush1.xpose.msra.mxu0 0.0
    %2918 = vmatprep.subr.mxu0 0.0
    %2919 = vmatpush1.xpose.msra.mxu0 0.0
    %2920 = vmatprep.subr.mxu0 0.0
    %2921 = vmatpush1.xpose.msra.mxu0 0.0
    %2922 = vmatprep.subr.mxu0 0.0
    %2923 = vmatpush1.xpose.msra.mxu0 0.0
    %2924 = vmatprep.subr.mxu0 0.0
    %2925 = vmatpush1.xpose.msra.mxu0 0.0
    %2926 = vmatprep.subr.mxu0 0.0
    %2927 = vmatpush1.xpose.msra.mxu0 0.0
    %2928 = vmatprep.subr.mxu0 0.0
    %2929 = vmatpush1.xpose.msra.mxu0 0.0
    %2930 = vmatprep.subr.mxu0 0.0
    %2931 = vmatpush1.xpose.msra.mxu0 0.0
    %2932 = vmatprep.subr.mxu0 0.0
    %2933 = vmatpush1.xpose.msra.mxu0 0.0
    %2934 = vmatprep.subr.mxu0 0.0
    %2935 = vmatpush1.xpose.msra.mxu0 0.0
    %2936 = vmatprep.subr.mxu0 0.0
    %2937 = vmatpush1.xpose.msra.mxu0 %v2906
    %2938 = vmatprep.subr.mxu0 0.0
    %2939 = vmatpush1.xpose.msra.mxu0 %v2904
    %2940 = vmatprep.subr.mxu0 0.0
    %2941 = vmatpush2.xpose.msra.mxu0 0.0
    %2942 = vmatprep.subr.mxu0 0.0
    %2943 = vmatpush2.xpose.msra.mxu0 0.0
    %2944 = vmatprep.subr.mxu0 0.0
    %2945 = vmatpush2.xpose.msra.mxu0 0.0
    %2946 = vmatprep.subr.mxu0 0.0
    %2947 = vmatpush2.xpose.msra.mxu0 0.0
    %2948 = vmatprep.subr.mxu0 0.0
    %2949 = vmatpush2.xpose.msra.mxu0 0.0
    %2950 = vmatprep.subr.mxu0 0.0
    %2951 = vmatpush2.xpose.msra.mxu0 0.0
    %2952 = vmatprep.subr.mxu0 0.0
    %2953 = vmatpush2.xpose.msra.mxu0 0.0
    %2954 = vmatprep.subr.mxu0 0.0
    %2955 = vmatpush2.xpose.msra.mxu0 0.0
    %2956 = vmatprep.subr.mxu0 0.0
    %2957 = vmatpush2.xpose.msra.mxu0 0.0
    %2958 = vmatprep.subr.mxu0 0.0
    %2959 = vmatpush2.xpose.msra.mxu0 0.0
    %2960 = vmatprep.subr.mxu0 0.0
    %2961 = vmatpush2.xpose.msra.mxu0 0.0
    %2962 = vmatprep.subr.mxu0 0.0
    %2963 = vmatpush2.xpose.msra.mxu0 0.0
    %2964 = vmatprep.subr.mxu0 0.0
    %2965 = vmatpush2.xpose.msra.mxu0 0.0
    %2966 = vmatprep.subr.mxu0 0.0
    %2967 = vmatpush2.xpose.msra.mxu0 0.0
    %2968 = vmatprep.subr.mxu0 0.0
    %2969 = vmatpush2.xpose.msra.mxu0 0.0
    %2970 = vmatprep.subr.mxu0 0.0
    %2971 = vmatpush2.xpose.msra.mxu0 0.0
    %2972 = vmatprep.mubr.f32.mxu0 0.0
    %2973 = vmatmul.mubr.f32.gmra.mxu0 %v2902
    %v2974 = vpop.f32.mrf.mxu0
    %v2975 = vadd.f32 0.0, %v2974
    %v2976 = vpop.f32.mrf.mxu0
    %2977 = vdwg.mxu0
    %2978 = vrot.lane.b32.xlu0 %v2054, 112
    %v2979 = vpop.permute.xlu0 %2978
    %2980 = vrot.lane.b32.xlu0 %v2157, 112
    %v2981 = vpop.permute.xlu0 %2980
    %2982 = vrot.lane.b32.xlu0 %v2162, 112
    %v2983 = vpop.permute.xlu0 %2982
    %v2984 = vsel %vm427, %v2979, 0
    %v2986 = vsel %vm427, %v2981, 0
    %v2988 = vsel %vm427, %v2983, 0
    %2990 = vmatprep.subr.mxu0 0.0
    %2991 = vmatpush1.xpose.msra.mxu0 0.0
    %2992 = vmatprep.subr.mxu0 0.0
    %2993 = vmatpush1.xpose.msra.mxu0 0.0
    %2994 = vmatprep.subr.mxu0 0.0
    %2995 = vmatpush1.xpose.msra.mxu0 0.0
    %2996 = vmatprep.subr.mxu0 0.0
    %2997 = vmatpush1.xpose.msra.mxu0 0.0
    %2998 = vmatprep.subr.mxu0 0.0
    %2999 = vmatpush1.xpose.msra.mxu0 0.0
    %3000 = vmatprep.subr.mxu0 0.0
    %3001 = vmatpush1.xpose.msra.mxu0 0.0
    %3002 = vmatprep.subr.mxu0 0.0
    %3003 = vmatpush1.xpose.msra.mxu0 0.0
    %3004 = vmatprep.subr.mxu0 0.0
    %3005 = vmatpush1.xpose.msra.mxu0 0.0
    %3006 = vmatprep.subr.mxu0 0.0
    %3007 = vmatpush1.xpose.msra.mxu0 0.0
    %3008 = vmatprep.subr.mxu0 0.0
    %3009 = vmatpush1.xpose.msra.mxu0 0.0
    %3010 = vmatprep.subr.mxu0 0.0
    %3011 = vmatpush1.xpose.msra.mxu0 0.0
    %3012 = vmatprep.subr.mxu0 0.0
    %3013 = vmatpush1.xpose.msra.mxu0 0.0
    %3014 = vmatprep.subr.mxu0 0.0
    %3015 = vmatpush1.xpose.msra.mxu0 0.0
    %3016 = vmatprep.subr.mxu0 0.0
    %3017 = vmatpush1.xpose.msra.mxu0 0.0
    %3018 = vmatprep.subr.mxu0 0.0
    %3019 = vmatpush1.xpose.msra.mxu0 %v2988
    %3020 = vmatprep.subr.mxu0 0.0
    %3021 = vmatpush1.xpose.msra.mxu0 %v2986
    %3022 = vmatprep.subr.mxu0 0.0
    %3023 = vmatpush2.xpose.msra.mxu0 0.0
    %3024 = vmatprep.subr.mxu0 0.0
    %3025 = vmatpush2.xpose.msra.mxu0 0.0
    %3026 = vmatprep.subr.mxu0 0.0
    %3027 = vmatpush2.xpose.msra.mxu0 0.0
    %3028 = vmatprep.subr.mxu0 0.0
    %3029 = vmatpush2.xpose.msra.mxu0 0.0
    %3030 = vmatprep.subr.mxu0 0.0
    %3031 = vmatpush2.xpose.msra.mxu0 0.0
    %3032 = vmatprep.subr.mxu0 0.0
    %3033 = vmatpush2.xpose.msra.mxu0 0.0
    %3034 = vmatprep.subr.mxu0 0.0
    %3035 = vmatpush2.xpose.msra.mxu0 0.0
    %3036 = vmatprep.subr.mxu0 0.0
    %3037 = vmatpush2.xpose.msra.mxu0 0.0
    %3038 = vmatprep.subr.mxu0 0.0
    %3039 = vmatpush2.xpose.msra.mxu0 0.0
    %3040 = vmatprep.subr.mxu0 0.0
    %3041 = vmatpush2.xpose.msra.mxu0 0.0
    %3042 = vmatprep.subr.mxu0 0.0
    %3043 = vmatpush2.xpose.msra.mxu0 0.0
    %3044 = vmatprep.subr.mxu0 0.0
    %3045 = vmatpush2.xpose.msra.mxu0 0.0
    %3046 = vmatprep.subr.mxu0 0.0
    %3047 = vmatpush2.xpose.msra.mxu0 0.0
    %3048 = vmatprep.subr.mxu0 0.0
    %3049 = vmatpush2.xpose.msra.mxu0 0.0
    %3050 = vmatprep.subr.mxu0 0.0
    %3051 = vmatpush2.xpose.msra.mxu0 0.0
    %3052 = vmatprep.subr.mxu0 0.0
    %3053 = vmatpush2.xpose.msra.mxu0 0.0
    %3054 = vmatprep.mubr.f32.mxu0 0.0
    %3055 = vmatmul.mubr.f32.gmra.mxu0 %v2984
    %v3056 = vpop.f32.mrf.mxu0
    %v3057 = vadd.f32 0.0, %v3056
    %v3058 = vpop.f32.mrf.mxu0
    %3059 = vdwg.mxu0
    %v3060 = vmul.f32 %v2975, 0.35355338
    %v3061 = vmul.f32 %v3057, 0.35355338
    %v3062 = vadd.f32 %v3060, %v2199
    %v3063 = vadd.f32 %v3061, %v2203
    %v3064 = vsel %vm1785, %v3062, -inf
    %3065 = vmax.xlane.f32.xlu0 %v3064
    %v3066 = vpop.xlane.xlu0 %3065
    %v3067 = vsel %vm1785, %v3063, -inf
    %3068 = vmax.xlane.f32.xlu0 %v3067
    %v3069 = vpop.xlane.xlu0 %3068
    %v3070 = vsub.f32 %v3062, %v3066
    %v3071 = vsub.f32 %v3063, %v3069
    %v3072 = vmul.f32 %v3070, 1.442695
    %v3073 = vpow.pop %v3072
    %v3074 = vmul.f32 %v3071, 1.442695
    %v3075 = vpow.pop %v3074
    %v3076 = vsel %vm1785, %v3073, 0.0
    %3077 = vadd.xlane.f32.xlu0 %v3076
    %v3078 = vpop.xlane.xlu0 %3077
    %v3079 = vsel %vm1785, %v3075, 0.0
    %3080 = vadd.xlane.f32.xlu0 %v3079
    %v3081 = vpop.xlane.xlu0 %3080
    %v3082 = vrcp.pop %v3078
    %v3083 = vrcp.pop %v3081
    %v3084 = vmul.f32 %v3073, %v3082
    %v3085 = vmul.f32 %v3075, %v3083
    %3086 = vrot.lane.b32.xlu0 %v2147, 80
    %v3087 = vpop.permute.xlu0 %3086
    %3088 = vrot.lane.b32.xlu0 %v2152, 80
    %v3089 = vpop.permute.xlu0 %3088
    %v3093 = vsel %vm1785, %v3084, 0
    %3095 = vmatprep.subr.mxu0 0.0
    %3096 = vmatpush1.msra.mxu0 0.0
    %3097 = vmatprep.subr.mxu0 0.0
    %3098 = vmatpush1.msra.mxu0 0.0
    %3099 = vmatprep.subr.mxu0 0.0
    %3100 = vmatpush1.msra.mxu0 0.0
    %3101 = vmatprep.subr.mxu0 0.0
    %3102 = vmatpush1.msra.mxu0 0.0
    %3103 = vmatprep.subr.mxu0 0.0
    %3104 = vmatpush1.msra.mxu0 0.0
    %3105 = vmatprep.subr.mxu0 0.0
    %3106 = vmatpush1.msra.mxu0 0.0
    %3107 = vmatprep.subr.mxu0 0.0
    %3108 = vmatpush1.msra.mxu0 0.0
    %3109 = vmatprep.subr.mxu0 0.0
    %3110 = vmatpush1.msra.mxu0 0.0
    %3111 = vmatprep.subr.mxu0 0.0
    %3112 = vmatpush1.msra.mxu0 0.0
    %3113 = vmatprep.subr.mxu0 0.0
    %3114 = vmatpush1.msra.mxu0 0.0
    %3115 = vmatprep.subr.mxu0 0.0
    %3116 = vmatpush1.msra.mxu0 0.0
    %3117 = vmatprep.subr.mxu0 0.0
    %3118 = vmatpush1.msra.mxu0 0.0
    %3119 = vmatprep.subr.mxu0 0.0
    %3120 = vmatpush1.msra.mxu0 0.0
    %3121 = vmatprep.subr.mxu0 0.0
    %3122 = vmatpush1.msra.mxu0 0.0
    %3123 = vmatprep.subr.mxu0 0.0
    %3124 = vmatpush1.msra.mxu0 %v3089
    %3125 = vmatprep.subr.mxu0 0.0
    %3126 = vmatpush1.msra.mxu0 %v3087
    %3127 = vmatprep.subr.mxu0 0.0
    %3128 = vmatpush2.msra.mxu0 0.0
    %3129 = vmatprep.subr.mxu0 0.0
    %3130 = vmatpush2.msra.mxu0 0.0
    %3131 = vmatprep.subr.mxu0 0.0
    %3132 = vmatpush2.msra.mxu0 0.0
    %3133 = vmatprep.subr.mxu0 0.0
    %3134 = vmatpush2.msra.mxu0 0.0
    %3135 = vmatprep.subr.mxu0 0.0
    %3136 = vmatpush2.msra.mxu0 0.0
    %3137 = vmatprep.subr.mxu0 0.0
    %3138 = vmatpush2.msra.mxu0 0.0
    %3139 = vmatprep.subr.mxu0 0.0
    %3140 = vmatpush2.msra.mxu0 0.0
    %3141 = vmatprep.subr.mxu0 0.0
    %3142 = vmatpush2.msra.mxu0 0.0
    %3143 = vmatprep.subr.mxu0 0.0
    %3144 = vmatpush2.msra.mxu0 0.0
    %3145 = vmatprep.subr.mxu0 0.0
    %3146 = vmatpush2.msra.mxu0 0.0
    %3147 = vmatprep.subr.mxu0 0.0
    %3148 = vmatpush2.msra.mxu0 0.0
    %3149 = vmatprep.subr.mxu0 0.0
    %3150 = vmatpush2.msra.mxu0 0.0
    %3151 = vmatprep.subr.mxu0 0.0
    %3152 = vmatpush2.msra.mxu0 0.0
    %3153 = vmatprep.subr.mxu0 0.0
    %3154 = vmatpush2.msra.mxu0 0.0
    %3155 = vmatprep.subr.mxu0 0.0
    %3156 = vmatpush2.msra.mxu0 0.0
    %3157 = vmatprep.subr.mxu0 0.0
    %3158 = vmatpush2.msra.mxu0 0.0
    %3159 = vmatprep.mubr.f32.mxu0 0.0
    %3160 = vmatmul.mubr.f32.gmra.mxu0 %v3093
    %v3161 = vpop.f32.mrf.mxu0
    %v3162 = vadd.f32 0.0, %v3161
    %v3163 = vpop.f32.mrf.mxu0
    %3164 = vdwg.mxu0
    %3165 = vrot.lane.b32.xlu0 %v2157, 80
    %v3166 = vpop.permute.xlu0 %3165
    %3167 = vrot.lane.b32.xlu0 %v2162, 80
    %v3168 = vpop.permute.xlu0 %3167
    %v3172 = vsel %vm1785, %v3085, 0
    %3174 = vmatprep.subr.mxu0 0.0
    %3175 = vmatpush1.msra.mxu0 0.0
    %3176 = vmatprep.subr.mxu0 0.0
    %3177 = vmatpush1.msra.mxu0 0.0
    %3178 = vmatprep.subr.mxu0 0.0
    %3179 = vmatpush1.msra.mxu0 0.0
    %3180 = vmatprep.subr.mxu0 0.0
    %3181 = vmatpush1.msra.mxu0 0.0
    %3182 = vmatprep.subr.mxu0 0.0
    %3183 = vmatpush1.msra.mxu0 0.0
    %3184 = vmatprep.subr.mxu0 0.0
    %3185 = vmatpush1.msra.mxu0 0.0
    %3186 = vmatprep.subr.mxu0 0.0
    %3187 = vmatpush1.msra.mxu0 0.0
    %3188 = vmatprep.subr.mxu0 0.0
    %3189 = vmatpush1.msra.mxu0 0.0
    %3190 = vmatprep.subr.mxu0 0.0
    %3191 = vmatpush1.msra.mxu0 0.0
    %3192 = vmatprep.subr.mxu0 0.0
    %3193 = vmatpush1.msra.mxu0 0.0
    %3194 = vmatprep.subr.mxu0 0.0
    %3195 = vmatpush1.msra.mxu0 0.0
    %3196 = vmatprep.subr.mxu0 0.0
    %3197 = vmatpush1.msra.mxu0 0.0
    %3198 = vmatprep.subr.mxu0 0.0
    %3199 = vmatpush1.msra.mxu0 0.0
    %3200 = vmatprep.subr.mxu0 0.0
    %3201 = vmatpush1.msra.mxu0 0.0
    %3202 = vmatprep.subr.mxu0 0.0
    %3203 = vmatpush1.msra.mxu0 %v3168
    %3204 = vmatprep.subr.mxu0 0.0
    %3205 = vmatpush1.msra.mxu0 %v3166
    %3206 = vmatprep.subr.mxu0 0.0
    %3207 = vmatpush2.msra.mxu0 0.0
    %3208 = vmatprep.subr.mxu0 0.0
    %3209 = vmatpush2.msra.mxu0 0.0
    %3210 = vmatprep.subr.mxu0 0.0
    %3211 = vmatpush2.msra.mxu0 0.0
    %3212 = vmatprep.subr.mxu0 0.0
    %3213 = vmatpush2.msra.mxu0 0.0
    %3214 = vmatprep.subr.mxu0 0.0
    %3215 = vmatpush2.msra.mxu0 0.0
    %3216 = vmatprep.subr.mxu0 0.0
    %3217 = vmatpush2.msra.mxu0 0.0
    %3218 = vmatprep.subr.mxu0 0.0
    %3219 = vmatpush2.msra.mxu0 0.0
    %3220 = vmatprep.subr.mxu0 0.0
    %3221 = vmatpush2.msra.mxu0 0.0
    %3222 = vmatprep.subr.mxu0 0.0
    %3223 = vmatpush2.msra.mxu0 0.0
    %3224 = vmatprep.subr.mxu0 0.0
    %3225 = vmatpush2.msra.mxu0 0.0
    %3226 = vmatprep.subr.mxu0 0.0
    %3227 = vmatpush2.msra.mxu0 0.0
    %3228 = vmatprep.subr.mxu0 0.0
    %3229 = vmatpush2.msra.mxu0 0.0
    %3230 = vmatprep.subr.mxu0 0.0
    %3231 = vmatpush2.msra.mxu0 0.0
    %3232 = vmatprep.subr.mxu0 0.0
    %3233 = vmatpush2.msra.mxu0 0.0
    %3234 = vmatprep.subr.mxu0 0.0
    %3235 = vmatpush2.msra.mxu0 0.0
    %3236 = vmatprep.subr.mxu0 0.0
    %3237 = vmatpush2.msra.mxu0 0.0
    %3238 = vmatprep.mubr.f32.mxu0 0.0
    %3239 = vmatmul.mubr.f32.gmra.mxu0 %v3172
    %v3240 = vpop.f32.mrf.mxu0
    %v3241 = vadd.f32 0.0, %v3240
    %v3242 = vpop.f32.mrf.mxu0
    %3243 = vdwg.mxu0
    %3244 = vrot.lane.b32.xlu0 %v2049, 104
    %v3245 = vpop.permute.xlu0 %3244
    %3246 = vrot.lane.b32.xlu0 %v2147, 104
    %v3247 = vpop.permute.xlu0 %3246
    %3248 = vrot.lane.b32.xlu0 %v2152, 104
    %v3249 = vpop.permute.xlu0 %3248
    %v3250 = vsel %vm427, %v3245, 0
    %v3252 = vsel %vm427, %v3247, 0
    %v3254 = vsel %vm427, %v3249, 0
    %3256 = vmatprep.subr.mxu0 0.0
    %3257 = vmatpush1.xpose.msra.mxu0 0.0
    %3258 = vmatprep.subr.mxu0 0.0
    %3259 = vmatpush1.xpose.msra.mxu0 0.0
    %3260 = vmatprep.subr.mxu0 0.0
    %3261 = vmatpush1.xpose.msra.mxu0 0.0
    %3262 = vmatprep.subr.mxu0 0.0
    %3263 = vmatpush1.xpose.msra.mxu0 0.0
    %3264 = vmatprep.subr.mxu0 0.0
    %3265 = vmatpush1.xpose.msra.mxu0 0.0
    %3266 = vmatprep.subr.mxu0 0.0
    %3267 = vmatpush1.xpose.msra.mxu0 0.0
    %3268 = vmatprep.subr.mxu0 0.0
    %3269 = vmatpush1.xpose.msra.mxu0 0.0
    %3270 = vmatprep.subr.mxu0 0.0
    %3271 = vmatpush1.xpose.msra.mxu0 0.0
    %3272 = vmatprep.subr.mxu0 0.0
    %3273 = vmatpush1.xpose.msra.mxu0 0.0
    %3274 = vmatprep.subr.mxu0 0.0
    %3275 = vmatpush1.xpose.msra.mxu0 0.0
    %3276 = vmatprep.subr.mxu0 0.0
    %3277 = vmatpush1.xpose.msra.mxu0 0.0
    %3278 = vmatprep.subr.mxu0 0.0
    %3279 = vmatpush1.xpose.msra.mxu0 0.0
    %3280 = vmatprep.subr.mxu0 0.0
    %3281 = vmatpush1.xpose.msra.mxu0 0.0
    %3282 = vmatprep.subr.mxu0 0.0
    %3283 = vmatpush1.xpose.msra.mxu0 0.0
    %3284 = vmatprep.subr.mxu0 0.0
    %3285 = vmatpush1.xpose.msra.mxu0 %v3254
    %3286 = vmatprep.subr.mxu0 0.0
    %3287 = vmatpush1.xpose.msra.mxu0 %v3252
    %3288 = vmatprep.subr.mxu0 0.0
    %3289 = vmatpush2.xpose.msra.mxu0 0.0
    %3290 = vmatprep.subr.mxu0 0.0
    %3291 = vmatpush2.xpose.msra.mxu0 0.0
    %3292 = vmatprep.subr.mxu0 0.0
    %3293 = vmatpush2.xpose.msra.mxu0 0.0
    %3294 = vmatprep.subr.mxu0 0.0
    %3295 = vmatpush2.xpose.msra.mxu0 0.0
    %3296 = vmatprep.subr.mxu0 0.0
    %3297 = vmatpush2.xpose.msra.mxu0 0.0
    %3298 = vmatprep.subr.mxu0 0.0
    %3299 = vmatpush2.xpose.msra.mxu0 0.0
    %3300 = vmatprep.subr.mxu0 0.0
    %3301 = vmatpush2.xpose.msra.mxu0 0.0
    %3302 = vmatprep.subr.mxu0 0.0
    %3303 = vmatpush2.xpose.msra.mxu0 0.0
    %3304 = vmatprep.subr.mxu0 0.0
    %3305 = vmatpush2.xpose.msra.mxu0 0.0
    %3306 = vmatprep.subr.mxu0 0.0
    %3307 = vmatpush2.xpose.msra.mxu0 0.0
    %3308 = vmatprep.subr.mxu0 0.0
    %3309 = vmatpush2.xpose.msra.mxu0 0.0
    %3310 = vmatprep.subr.mxu0 0.0
    %3311 = vmatpush2.xpose.msra.mxu0 0.0
    %3312 = vmatprep.subr.mxu0 0.0
    %3313 = vmatpush2.xpose.msra.mxu0 0.0
    %3314 = vmatprep.subr.mxu0 0.0
    %3315 = vmatpush2.xpose.msra.mxu0 0.0
    %3316 = vmatprep.subr.mxu0 0.0
    %3317 = vmatpush2.xpose.msra.mxu0 0.0
    %3318 = vmatprep.subr.mxu0 0.0
    %3319 = vmatpush2.xpose.msra.mxu0 0.0
    %3320 = vmatprep.mubr.f32.mxu0 0.0
    %3321 = vmatmul.mubr.f32.gmra.mxu0 %v3250
    %v3322 = vpop.f32.mrf.mxu0
    %v3323 = vadd.f32 0.0, %v3322
    %v3324 = vpop.f32.mrf.mxu0
    %3325 = vdwg.mxu0
    %3326 = vrot.lane.b32.xlu0 %v2054, 104
    %v3327 = vpop.permute.xlu0 %3326
    %3328 = vrot.lane.b32.xlu0 %v2157, 104
    %v3329 = vpop.permute.xlu0 %3328
    %3330 = vrot.lane.b32.xlu0 %v2162, 104
    %v3331 = vpop.permute.xlu0 %3330
    %v3332 = vsel %vm427, %v3327, 0
    %v3334 = vsel %vm427, %v3329, 0
    %v3336 = vsel %vm427, %v3331, 0
    %3338 = vmatprep.subr.mxu0 0.0
    %3339 = vmatpush1.xpose.msra.mxu0 0.0
    %3340 = vmatprep.subr.mxu0 0.0
    %3341 = vmatpush1.xpose.msra.mxu0 0.0
    %3342 = vmatprep.subr.mxu0 0.0
    %3343 = vmatpush1.xpose.msra.mxu0 0.0
    %3344 = vmatprep.subr.mxu0 0.0
    %3345 = vmatpush1.xpose.msra.mxu0 0.0
    %3346 = vmatprep.subr.mxu0 0.0
    %3347 = vmatpush1.xpose.msra.mxu0 0.0
    %3348 = vmatprep.subr.mxu0 0.0
    %3349 = vmatpush1.xpose.msra.mxu0 0.0
    %3350 = vmatprep.subr.mxu0 0.0
    %3351 = vmatpush1.xpose.msra.mxu0 0.0
    %3352 = vmatprep.subr.mxu0 0.0
    %3353 = vmatpush1.xpose.msra.mxu0 0.0
    %3354 = vmatprep.subr.mxu0 0.0
    %3355 = vmatpush1.xpose.msra.mxu0 0.0
    %3356 = vmatprep.subr.mxu0 0.0
    %3357 = vmatpush1.xpose.msra.mxu0 0.0
    %3358 = vmatprep.subr.mxu0 0.0
    %3359 = vmatpush1.xpose.msra.mxu0 0.0
    %3360 = vmatprep.subr.mxu0 0.0
    %3361 = vmatpush1.xpose.msra.mxu0 0.0
    %3362 = vmatprep.subr.mxu0 0.0
    %3363 = vmatpush1.xpose.msra.mxu0 0.0
    %3364 = vmatprep.subr.mxu0 0.0
    %3365 = vmatpush1.xpose.msra.mxu0 0.0
    %3366 = vmatprep.subr.mxu0 0.0
    %3367 = vmatpush1.xpose.msra.mxu0 %v3336
    %3368 = vmatprep.subr.mxu0 0.0
    %3369 = vmatpush1.xpose.msra.mxu0 %v3334
    %3370 = vmatprep.subr.mxu0 0.0
    %3371 = vmatpush2.xpose.msra.mxu0 0.0
    %3372 = vmatprep.subr.mxu0 0.0
    %3373 = vmatpush2.xpose.msra.mxu0 0.0
    %3374 = vmatprep.subr.mxu0 0.0
    %3375 = vmatpush2.xpose.msra.mxu0 0.0
    %3376 = vmatprep.subr.mxu0 0.0
    %3377 = vmatpush2.xpose.msra.mxu0 0.0
    %3378 = vmatprep.subr.mxu0 0.0
    %3379 = vmatpush2.xpose.msra.mxu0 0.0
    %3380 = vmatprep.subr.mxu0 0.0
    %3381 = vmatpush2.xpose.msra.mxu0 0.0
    %3382 = vmatprep.subr.mxu0 0.0
    %3383 = vmatpush2.xpose.msra.mxu0 0.0
    %3384 = vmatprep.subr.mxu0 0.0
    %3385 = vmatpush2.xpose.msra.mxu0 0.0
    %3386 = vmatprep.subr.mxu0 0.0
    %3387 = vmatpush2.xpose.msra.mxu0 0.0
    %3388 = vmatprep.subr.mxu0 0.0
    %3389 = vmatpush2.xpose.msra.mxu0 0.0
    %3390 = vmatprep.subr.mxu0 0.0
    %3391 = vmatpush2.xpose.msra.mxu0 0.0
    %3392 = vmatprep.subr.mxu0 0.0
    %3393 = vmatpush2.xpose.msra.mxu0 0.0
    %3394 = vmatprep.subr.mxu0 0.0
    %3395 = vmatpush2.xpose.msra.mxu0 0.0
    %3396 = vmatprep.subr.mxu0 0.0
    %3397 = vmatpush2.xpose.msra.mxu0 0.0
    %3398 = vmatprep.subr.mxu0 0.0
    %3399 = vmatpush2.xpose.msra.mxu0 0.0
    %3400 = vmatprep.subr.mxu0 0.0
    %3401 = vmatpush2.xpose.msra.mxu0 0.0
    %3402 = vmatprep.mubr.f32.mxu0 0.0
    %3403 = vmatmul.mubr.f32.gmra.mxu0 %v3332
    %v3404 = vpop.f32.mrf.mxu0
    %v3405 = vadd.f32 0.0, %v3404
    %v3406 = vpop.f32.mrf.mxu0
    %3407 = vdwg.mxu0
    %v3408 = vmul.f32 %v3323, 0.35355338
    %v3409 = vmul.f32 %v3405, 0.35355338
    %v3410 = vadd.f32 %v3408, %v2199
    %v3411 = vadd.f32 %v3409, %v2203
    %v3412 = vsel %vm1785, %v3410, -inf
    %3413 = vmax.xlane.f32.xlu0 %v3412
    %v3414 = vpop.xlane.xlu0 %3413
    %v3415 = vsel %vm1785, %v3411, -inf
    %3416 = vmax.xlane.f32.xlu0 %v3415
    %v3417 = vpop.xlane.xlu0 %3416
    %v3418 = vsub.f32 %v3410, %v3414
    %v3419 = vsub.f32 %v3411, %v3417
    %v3420 = vmul.f32 %v3418, 1.442695
    %v3421 = vpow.pop %v3420
    %v3422 = vmul.f32 %v3419, 1.442695
    %v3423 = vpow.pop %v3422
    %v3424 = vsel %vm1785, %v3421, 0.0
    %3425 = vadd.xlane.f32.xlu0 %v3424
    %v3426 = vpop.xlane.xlu0 %3425
    %v3427 = vsel %vm1785, %v3423, 0.0
    %3428 = vadd.xlane.f32.xlu0 %v3427
    %v3429 = vpop.xlane.xlu0 %3428
    %v3430 = vrcp.pop %v3426
    %v3431 = vrcp.pop %v3429
    %v3432 = vmul.f32 %v3421, %v3430
    %v3433 = vmul.f32 %v3423, %v3431
    %3434 = vrot.lane.b32.xlu0 %v2147, 72
    %v3435 = vpop.permute.xlu0 %3434
    %3436 = vrot.lane.b32.xlu0 %v2152, 72
    %v3437 = vpop.permute.xlu0 %3436
    %v3441 = vsel %vm1785, %v3432, 0
    %3443 = vmatprep.subr.mxu0 0.0
    %3444 = vmatpush1.msra.mxu0 0.0
    %3445 = vmatprep.subr.mxu0 0.0
    %3446 = vmatpush1.msra.mxu0 0.0
    %3447 = vmatprep.subr.mxu0 0.0
    %3448 = vmatpush1.msra.mxu0 0.0
    %3449 = vmatprep.subr.mxu0 0.0
    %3450 = vmatpush1.msra.mxu0 0.0
    %3451 = vmatprep.subr.mxu0 0.0
    %3452 = vmatpush1.msra.mxu0 0.0
    %3453 = vmatprep.subr.mxu0 0.0
    %3454 = vmatpush1.msra.mxu0 0.0
    %3455 = vmatprep.subr.mxu0 0.0
    %3456 = vmatpush1.msra.mxu0 0.0
    %3457 = vmatprep.subr.mxu0 0.0
    %3458 = vmatpush1.msra.mxu0 0.0
    %3459 = vmatprep.subr.mxu0 0.0
    %3460 = vmatpush1.msra.mxu0 0.0
    %3461 = vmatprep.subr.mxu0 0.0
    %3462 = vmatpush1.msra.mxu0 0.0
    %3463 = vmatprep.subr.mxu0 0.0
    %3464 = vmatpush1.msra.mxu0 0.0
    %3465 = vmatprep.subr.mxu0 0.0
    %3466 = vmatpush1.msra.mxu0 0.0
    %3467 = vmatprep.subr.mxu0 0.0
    %3468 = vmatpush1.msra.mxu0 0.0
    %3469 = vmatprep.subr.mxu0 0.0
    %3470 = vmatpush1.msra.mxu0 0.0
    %3471 = vmatprep.subr.mxu0 0.0
    %3472 = vmatpush1.msra.mxu0 %v3437
    %3473 = vmatprep.subr.mxu0 0.0
    %3474 = vmatpush1.msra.mxu0 %v3435
    %3475 = vmatprep.subr.mxu0 0.0
    %3476 = vmatpush2.msra.mxu0 0.0
    %3477 = vmatprep.subr.mxu0 0.0
    %3478 = vmatpush2.msra.mxu0 0.0
    %3479 = vmatprep.subr.mxu0 0.0
    %3480 = vmatpush2.msra.mxu0 0.0
    %3481 = vmatprep.subr.mxu0 0.0
    %3482 = vmatpush2.msra.mxu0 0.0
    %3483 = vmatprep.subr.mxu0 0.0
    %3484 = vmatpush2.msra.mxu0 0.0
    %3485 = vmatprep.subr.mxu0 0.0
    %3486 = vmatpush2.msra.mxu0 0.0
    %3487 = vmatprep.subr.mxu0 0.0
    %3488 = vmatpush2.msra.mxu0 0.0
    %3489 = vmatprep.subr.mxu0 0.0
    %3490 = vmatpush2.msra.mxu0 0.0
    %3491 = vmatprep.subr.mxu0 0.0
    %3492 = vmatpush2.msra.mxu0 0.0
    %3493 = vmatprep.subr.mxu0 0.0
    %3494 = vmatpush2.msra.mxu0 0.0
    %3495 = vmatprep.subr.mxu0 0.0
    %3496 = vmatpush2.msra.mxu0 0.0
    %3497 = vmatprep.subr.mxu0 0.0
    %3498 = vmatpush2.msra.mxu0 0.0
    %3499 = vmatprep.subr.mxu0 0.0
    %3500 = vmatpush2.msra.mxu0 0.0
    %3501 = vmatprep.subr.mxu0 0.0
    %3502 = vmatpush2.msra.mxu0 0.0
    %3503 = vmatprep.subr.mxu0 0.0
    %3504 = vmatpush2.msra.mxu0 0.0
    %3505 = vmatprep.subr.mxu0 0.0
    %3506 = vmatpush2.msra.mxu0 0.0
    %3507 = vmatprep.mubr.f32.mxu0 0.0
    %3508 = vmatmul.mubr.f32.gmra.mxu0 %v3441
    %v3509 = vpop.f32.mrf.mxu0
    %v3510 = vadd.f32 0.0, %v3509
    %v3511 = vpop.f32.mrf.mxu0
    %3512 = vdwg.mxu0
    %3513 = vrot.lane.b32.xlu0 %v2157, 72
    %v3514 = vpop.permute.xlu0 %3513
    %3515 = vrot.lane.b32.xlu0 %v2162, 72
    %v3516 = vpop.permute.xlu0 %3515
    %v3520 = vsel %vm1785, %v3433, 0
    %3522 = vmatprep.subr.mxu0 0.0
    %3523 = vmatpush1.msra.mxu0 0.0
    %3524 = vmatprep.subr.mxu0 0.0
    %3525 = vmatpush1.msra.mxu0 0.0
    %3526 = vmatprep.subr.mxu0 0.0
    %3527 = vmatpush1.msra.mxu0 0.0
    %3528 = vmatprep.subr.mxu0 0.0
    %3529 = vmatpush1.msra.mxu0 0.0
    %3530 = vmatprep.subr.mxu0 0.0
    %3531 = vmatpush1.msra.mxu0 0.0
    %3532 = vmatprep.subr.mxu0 0.0
    %3533 = vmatpush1.msra.mxu0 0.0
    %3534 = vmatprep.subr.mxu0 0.0
    %3535 = vmatpush1.msra.mxu0 0.0
    %3536 = vmatprep.subr.mxu0 0.0
    %3537 = vmatpush1.msra.mxu0 0.0
    %3538 = vmatprep.subr.mxu0 0.0
    %3539 = vmatpush1.msra.mxu0 0.0
    %3540 = vmatprep.subr.mxu0 0.0
    %3541 = vmatpush1.msra.mxu0 0.0
    %3542 = vmatprep.subr.mxu0 0.0
    %3543 = vmatpush1.msra.mxu0 0.0
    %3544 = vmatprep.subr.mxu0 0.0
    %3545 = vmatpush1.msra.mxu0 0.0
    %3546 = vmatprep.subr.mxu0 0.0
    %3547 = vmatpush1.msra.mxu0 0.0
    %3548 = vmatprep.subr.mxu0 0.0
    %3549 = vmatpush1.msra.mxu0 0.0
    %3550 = vmatprep.subr.mxu0 0.0
    %3551 = vmatpush1.msra.mxu0 %v3516
    %3552 = vmatprep.subr.mxu0 0.0
    %3553 = vmatpush1.msra.mxu0 %v3514
    %3554 = vmatprep.subr.mxu0 0.0
    %3555 = vmatpush2.msra.mxu0 0.0
    %3556 = vmatprep.subr.mxu0 0.0
    %3557 = vmatpush2.msra.mxu0 0.0
    %3558 = vmatprep.subr.mxu0 0.0
    %3559 = vmatpush2.msra.mxu0 0.0
    %3560 = vmatprep.subr.mxu0 0.0
    %3561 = vmatpush2.msra.mxu0 0.0
    %3562 = vmatprep.subr.mxu0 0.0
    %3563 = vmatpush2.msra.mxu0 0.0
    %3564 = vmatprep.subr.mxu0 0.0
    %3565 = vmatpush2.msra.mxu0 0.0
    %3566 = vmatprep.subr.mxu0 0.0
    %3567 = vmatpush2.msra.mxu0 0.0
    %3568 = vmatprep.subr.mxu0 0.0
    %3569 = vmatpush2.msra.mxu0 0.0
    %3570 = vmatprep.subr.mxu0 0.0
    %3571 = vmatpush2.msra.mxu0 0.0
    %3572 = vmatprep.subr.mxu0 0.0
    %3573 = vmatpush2.msra.mxu0 0.0
    %3574 = vmatprep.subr.mxu0 0.0
    %3575 = vmatpush2.msra.mxu0 0.0
    %3576 = vmatprep.subr.mxu0 0.0
    %3577 = vmatpush2.msra.mxu0 0.0
    %3578 = vmatprep.subr.mxu0 0.0
    %3579 = vmatpush2.msra.mxu0 0.0
    %3580 = vmatprep.subr.mxu0 0.0
    %3581 = vmatpush2.msra.mxu0 0.0
    %3582 = vmatprep.subr.mxu0 0.0
    %3583 = vmatpush2.msra.mxu0 0.0
    %3584 = vmatprep.subr.mxu0 0.0
    %3585 = vmatpush2.msra.mxu0 0.0
    %3586 = vmatprep.mubr.f32.mxu0 0.0
    %3587 = vmatmul.mubr.f32.gmra.mxu0 %v3520
    %v3588 = vpop.f32.mrf.mxu0
    %v3589 = vadd.f32 0.0, %v3588
    %v3590 = vpop.f32.mrf.mxu0
    %3591 = vdwg.mxu0
    %3594 = vrot.lane.b32.xlu0 %v2814, 8
    %v3595 = vpop.permute.xlu0 %3594
    %3596 = vrot.lane.b32.xlu0 %v2893, 8
    %v3597 = vpop.permute.xlu0 %3596
    %3602 = vrot.lane.b32.xlu0 %v3162, 16
    %v3603 = vpop.permute.xlu0 %3602
    %3604 = vrot.lane.b32.xlu0 %v3241, 16
    %v3605 = vpop.permute.xlu0 %3604
    %3610 = vrot.lane.b32.xlu0 %v3510, 24
    %v3611 = vpop.permute.xlu0 %3610
    %3612 = vrot.lane.b32.xlu0 %v3589, 24
    %v3613 = vpop.permute.xlu0 %3612
    %v3616 = vsel %vm427, %v2466, %v3595
    %v3617 = vsel %vm427, %v2545, %v3597
    %v3618 = vsel %vm1785, %v3616, %v3603
    %v3619 = vsel %vm1785, %v3617, %v3605
    %v3620 = vsel %vm1788, %v3618, %v3611
    %v3621 = vsel %vm1788, %v3619, %v3613
    %v3623 = vlaneseq
    %v3624 = vshrl.u32 %v3623, 7
    %v3625 = vsub.s32 0, %v3624
    %v3626 = vrot.slane %v2170, %v3625
    %v3629 = vsel %vm301, %v3620, 0
    %v3632 = vsel %vm301, %v3621, 0
    %3634 = vmatprep.subr.mxu0 0.0
    %3635 = vmatpush1.msra.mxu0 0.0
    %3636 = vmatprep.subr.mxu0 0.0
    %3637 = vmatpush1.msra.mxu0 0.0
    %3638 = vmatprep.subr.mxu0 0.0
    %3639 = vmatpush1.msra.mxu0 0.0
    %3640 = vmatprep.subr.mxu0 0.0
    %3641 = vmatpush1.msra.mxu0 0.0
    %3642 = vmatprep.subr.mxu0 0.0
    %3643 = vmatpush1.msra.mxu0 0.0
    %3644 = vmatprep.subr.mxu0 0.0
    %3645 = vmatpush1.msra.mxu0 0.0
    %3646 = vmatprep.subr.mxu0 0.0
    %3647 = vmatpush1.msra.mxu0 0.0
    %3648 = vmatprep.subr.mxu0 0.0
    %3649 = vmatpush1.msra.mxu0 0.0
    %3650 = vmatprep.subr.mxu0 0.0
    %3651 = vmatpush1.msra.mxu0 0.0
    %3652 = vmatprep.subr.mxu0 0.0
    %3653 = vmatpush1.msra.mxu0 0.0
    %3654 = vmatprep.subr.mxu0 0.0
    %3655 = vmatpush1.msra.mxu0 0.0
    %3656 = vmatprep.subr.mxu0 0.0
    %3657 = vmatpush1.msra.mxu0 0.0
    %3658 = vmatprep.subr.mxu0 0.0
    %3659 = vmatpush1.msra.mxu0 %v2169
    %3660 = vmatprep.subr.mxu0 0.0
    %3661 = vmatpush1.msra.mxu0 %v2168
    %3662 = vmatprep.subr.mxu0 0.0
    %3663 = vmatpush1.msra.mxu0 %v2167
    %3664 = vmatprep.subr.mxu0 0.0
    %3665 = vmatpush1.msra.mxu0 %v2166
    %3666 = vmatprep.subr.mxu0 0.0
    %3667 = vmatpush2.msra.mxu0 0.0
    %3668 = vmatprep.subr.mxu0 0.0
    %3669 = vmatpush2.msra.mxu0 0.0
    %3670 = vmatprep.subr.mxu0 0.0
    %3671 = vmatpush2.msra.mxu0 0.0
    %3672 = vmatprep.subr.mxu0 0.0
    %3673 = vmatpush2.msra.mxu0 0.0
    %3674 = vmatprep.subr.mxu0 0.0
    %3675 = vmatpush2.msra.mxu0 0.0
    %3676 = vmatprep.subr.mxu0 0.0
    %3677 = vmatpush2.msra.mxu0 0.0
    %3678 = vmatprep.subr.mxu0 0.0
    %3679 = vmatpush2.msra.mxu0 0.0
    %3680 = vmatprep.subr.mxu0 0.0
    %3681 = vmatpush2.msra.mxu0 0.0
    %3682 = vmatprep.subr.mxu0 0.0
    %3683 = vmatpush2.msra.mxu0 0.0
    %3684 = vmatprep.subr.mxu0 0.0
    %3685 = vmatpush2.msra.mxu0 0.0
    %3686 = vmatprep.subr.mxu0 0.0
    %3687 = vmatpush2.msra.mxu0 0.0
    %3688 = vmatprep.subr.mxu0 0.0
    %3689 = vmatpush2.msra.mxu0 0.0
    %3690 = vmatprep.subr.mxu0 0.0
    %3691 = vmatpush2.msra.mxu0 0.0
    %3692 = vmatprep.subr.mxu0 0.0
    %3693 = vmatpush2.msra.mxu0 0.0
    %3694 = vmatprep.subr.mxu0 0.0
    %3695 = vmatpush2.msra.mxu0 0.0
    %3696 = vmatprep.subr.mxu0 0.0
    %3697 = vmatpush2.msra.mxu0 0.0
    %3698 = vmatprep.mubr.f32.mxu0 0.0
    %3699 = vmatmul.mubr.f32.gmra.mxu0 %v3629
    %v3700 = vpop.f32.mrf.mxu0
    %v3701 = vadd.f32 %v3626, %v3700
    %v3702 = vpop.f32.mrf.mxu0
    %3703 = vmatprep.mubr.f32.mxu0 0.0
    %3704 = vmatmul.mubr.f32.gmra.mxu0 %v3632
    %v3705 = vpop.f32.mrf.mxu0
    %v3706 = vadd.f32 %v3626, %v3705
    %v3707 = vpop.f32.mrf.mxu0
    %3708 = vdwg.mxu0
    %v3709 = vadd.f32 %v1963, %v3701
    %v3710 = vadd.f32 %v1964, %v3706
    %v3711 = vld [vmem:[#allocation23] sm:$0x1]
    %v3712 = vld [vmem:[#allocation25] sm:$0x1]
    %v3713 = vsel %vm301, %v3709, 0.0
    %3714 = vadd.xlane.f32.xlu0 %v3713
    %v3715 = vpop.xlane.xlu0 %3714
    %v3716 = vsel %vm301, %v3710, 0.0
    %3717 = vadd.xlane.f32.xlu0 %v3716
    %v3718 = vpop.xlane.xlu0 %3717
    %v3719 = vmul.f32 %v3715, %v1914
    %v3720 = vmul.f32 %v3718, %v1914
    %v3721 = vsub.f32 %v3709, %v3719
    %v3722 = vsub.f32 %v3710, %v3720
    %v3723 = vmul.f32 %v3721, %v3721
    %v3724 = vmul.f32 %v3722, %v3722
    %v3725 = vsel %vm301, %v3723, 0.0
    %3726 = vadd.xlane.f32.xlu0 %v3725
    %v3727 = vpop.xlane.xlu0 %3726
    %v3728 = vsel %vm301, %v3724, 0.0
    %3729 = vadd.xlane.f32.xlu0 %v3728
    %v3730 = vpop.xlane.xlu0 %3729
    %v3731 = vmul.f32 %v3727, 0.032258064
    %v3732 = vmul.f32 %v3730, 0.032258064
    %v3733 = vrsqrt.pop %v3731
    %v3734 = vmul.f32 %v3731, %v3733
    %vm3735 = vcmp.eq.f32.partialorder %v3731, inf
    %v3736 = vsel %vm3735, %v3731, %v3734
    %vm3737 = vcmp.eq.f32.partialorder %v3731, 0.0
    %v3738 = vand.u32 %v3731, 2147483648
    %v3739 = vsel %vm3737, %v3738, %v3736
    %v3740 = vrsqrt.pop %v3732
    %v3741 = vmul.f32 %v3732, %v3740
    %vm3742 = vcmp.eq.f32.partialorder %v3732, inf
    %v3743 = vsel %vm3742, %v3732, %v3741
    %vm3744 = vcmp.eq.f32.partialorder %v3732, 0.0
    %v3745 = vand.u32 %v3732, 2147483648
    %v3746 = vsel %vm3744, %v3745, %v3743
    %v3747 = vadd.f32 %v3739, 1e-06
    %v3748 = vadd.f32 %v3746, 1e-06
    %v3749 = vrcp.pop %v3747
    %v3750 = vrcp.pop %v3748
    %v3752 = vlaneseq
    %v3753 = vshrl.u32 %v3752, 7
    %v3754 = vsub.s32 0, %v3753
    %v3755 = vrot.slane %v3711, %v3754
    %v3757 = vmul.f32 %v3755, %v3721
    %v3758 = vmul.f32 %v3755, %v3722
    %v3759 = vmul.f32 %v3757, %v3749
    %v3760 = vmul.f32 %v3758, %v3750
    %v3762 = vlaneseq
    %v3763 = vshrl.u32 %v3762, 7
    %v3764 = vsub.s32 0, %v3763
    %v3765 = vrot.slane %v3712, %v3764
    %v3767 = vadd.f32 %v3759, %v3765
    %v3768 = vadd.f32 %v3760, %v3765
    %v3769 = vld [vmem:[#allocation16] sm:$0xff]
    %v3770 = vld [vmem:[#allocation16 + $0x8] sm:$0xff]
    %v3771 = vld [vmem:[#allocation16 + $0x10] sm:$0xff]
    %v3772 = vld [vmem:[#allocation16 + $0x18] sm:$0xff]
    %v3773 = vld [vmem:[#allocation17] sm:$0x1]
    %v3775 = vlaneseq
    %v3776 = vshrl.u32 %v3775, 7
    %v3777 = vsub.s32 0, %v3776
    %v3778 = vrot.slane %v3773, %v3777
    %v3781 = vsel %vm301, %v3767, 0
    %v3784 = vsel %vm301, %v3768, 0
    %3786 = vmatprep.subr.mxu0 0.0
    %3787 = vmatpush1.msra.mxu0 0.0
    %3788 = vmatprep.subr.mxu0 0.0
    %3789 = vmatpush1.msra.mxu0 0.0
    %3790 = vmatprep.subr.mxu0 0.0
    %3791 = vmatpush1.msra.mxu0 0.0
    %3792 = vmatprep.subr.mxu0 0.0
    %3793 = vmatpush1.msra.mxu0 0.0
    %3794 = vmatprep.subr.mxu0 0.0
    %3795 = vmatpush1.msra.mxu0 0.0
    %3796 = vmatprep.subr.mxu0 0.0
    %3797 = vmatpush1.msra.mxu0 0.0
    %3798 = vmatprep.subr.mxu0 0.0
    %3799 = vmatpush1.msra.mxu0 0.0
    %3800 = vmatprep.subr.mxu0 0.0
    %3801 = vmatpush1.msra.mxu0 0.0
    %3802 = vmatprep.subr.mxu0 0.0
    %3803 = vmatpush1.msra.mxu0 0.0
    %3804 = vmatprep.subr.mxu0 0.0
    %3805 = vmatpush1.msra.mxu0 0.0
    %3806 = vmatprep.subr.mxu0 0.0
    %3807 = vmatpush1.msra.mxu0 0.0
    %3808 = vmatprep.subr.mxu0 0.0
    %3809 = vmatpush1.msra.mxu0 0.0
    %3810 = vmatprep.subr.mxu0 0.0
    %3811 = vmatpush1.msra.mxu0 %v3772
    %3812 = vmatprep.subr.mxu0 0.0
    %3813 = vmatpush1.msra.mxu0 %v3771
    %3814 = vmatprep.subr.mxu0 0.0
    %3815 = vmatpush1.msra.mxu0 %v3770
    %3816 = vmatprep.subr.mxu0 0.0
    %3817 = vmatpush1.msra.mxu0 %v3769
    %3818 = vmatprep.subr.mxu0 0.0
    %3819 = vmatpush2.msra.mxu0 0.0
    %3820 = vmatprep.subr.mxu0 0.0
    %3821 = vmatpush2.msra.mxu0 0.0
    %3822 = vmatprep.subr.mxu0 0.0
    %3823 = vmatpush2.msra.mxu0 0.0
    %3824 = vmatprep.subr.mxu0 0.0
    %3825 = vmatpush2.msra.mxu0 0.0
    %3826 = vmatprep.subr.mxu0 0.0
    %3827 = vmatpush2.msra.mxu0 0.0
    %3828 = vmatprep.subr.mxu0 0.0
    %3829 = vmatpush2.msra.mxu0 0.0
    %3830 = vmatprep.subr.mxu0 0.0
    %3831 = vmatpush2.msra.mxu0 0.0
    %3832 = vmatprep.subr.mxu0 0.0
    %3833 = vmatpush2.msra.mxu0 0.0
    %3834 = vmatprep.subr.mxu0 0.0
    %3835 = vmatpush2.msra.mxu0 0.0
    %3836 = vmatprep.subr.mxu0 0.0
    %3837 = vmatpush2.msra.mxu0 0.0
    %3838 = vmatprep.subr.mxu0 0.0
    %3839 = vmatpush2.msra.mxu0 0.0
    %3840 = vmatprep.subr.mxu0 0.0
    %3841 = vmatpush2.msra.mxu0 0.0
    %3842 = vmatprep.subr.mxu0 0.0
    %3843 = vmatpush2.msra.mxu0 0.0
    %3844 = vmatprep.subr.mxu0 0.0
    %3845 = vmatpush2.msra.mxu0 0.0
    %3846 = vmatprep.subr.mxu0 0.0
    %3847 = vmatpush2.msra.mxu0 0.0
    %3848 = vmatprep.subr.mxu0 0.0
    %3849 = vmatpush2.msra.mxu0 0.0
    %3850 = vmatprep.mubr.f32.mxu0 0.0
    %3851 = vmatmul.mubr.f32.gmra.mxu0 %v3781
    %v3852 = vpop.f32.mrf.mxu0
    %v3853 = vadd.f32 %v3778, %v3852
    %v3854 = vpop.f32.mrf.mxu0
    %3855 = vmatprep.mubr.f32.mxu0 0.0
    %3856 = vmatmul.mubr.f32.gmra.mxu0 %v3784
    %v3857 = vpop.f32.mrf.mxu0
    %v3858 = vadd.f32 %v3778, %v3857
    %v3859 = vpop.f32.mrf.mxu0
    %3860 = vdwg.mxu0
    %v3861 = vmax.f32 %v3853, 0.0
    %v3862 = vmax.f32 %v3858, 0.0
    %v3863 = vld [vmem:[%s16] sm:$0xff]
    %v3864 = vld [vmem:[%s16 + $0x8] sm:$0xff]
    %v3865 = vld [vmem:[%s16 + $0x10] sm:$0xff]
    %v3866 = vld [vmem:[%s16 + $0x18] sm:$0xff]
    %v3867 = vld [vmem:[%s16 + $0x20] sm:$0xff]
    %v3868 = vld [vmem:[%s16 + $0x28] sm:$0xff]
    %v3869 = vld [vmem:[%s16 + $0x30] sm:$0xff]
    %v3870 = vld [vmem:[%s16 + $0x38] sm:$0xff]
    %v3871 = vld [vmem:[#allocation19] sm:$0x1]
    %v3873 = vlaneseq
    %v3874 = vshrl.u32 %v3873, 7
    %v3875 = vsub.s32 0, %v3874
    %v3876 = vrot.slane %v3871, %v3875
    %vm3878 = vcmask 523264
    %v3880 = vsel %vm3878, %v3861, 0
    %v3883 = vsel %vm3878, %v3862, 0
    %3885 = vmatprep.subr.mxu0 0.0
    %3886 = vmatpush1.msra.mxu0 0.0
    %3887 = vmatprep.subr.mxu0 0.0
    %3888 = vmatpush1.msra.mxu0 0.0
    %3889 = vmatprep.subr.mxu0 0.0
    %3890 = vmatpush1.msra.mxu0 0.0
    %3891 = vmatprep.subr.mxu0 0.0
    %3892 = vmatpush1.msra.mxu0 0.0
    %3893 = vmatprep.subr.mxu0 0.0
    %3894 = vmatpush1.msra.mxu0 0.0
    %3895 = vmatprep.subr.mxu0 0.0
    %3896 = vmatpush1.msra.mxu0 0.0
    %3897 = vmatprep.subr.mxu0 0.0
    %3898 = vmatpush1.msra.mxu0 0.0
    %3899 = vmatprep.subr.mxu0 0.0
    %3900 = vmatpush1.msra.mxu0 0.0
    %3901 = vmatprep.subr.mxu0 0.0
    %3902 = vmatpush1.msra.mxu0 %v3870
    %3903 = vmatprep.subr.mxu0 0.0
    %3904 = vmatpush1.msra.mxu0 %v3869
    %3905 = vmatprep.subr.mxu0 0.0
    %3906 = vmatpush1.msra.mxu0 %v3868
    %3907 = vmatprep.subr.mxu0 0.0
    %3908 = vmatpush1.msra.mxu0 %v3867
    %3909 = vmatprep.subr.mxu0 0.0
    %3910 = vmatpush1.msra.mxu0 %v3866
    %3911 = vmatprep.subr.mxu0 0.0
    %3912 = vmatpush1.msra.mxu0 %v3865
    %3913 = vmatprep.subr.mxu0 0.0
    %3914 = vmatpush1.msra.mxu0 %v3864
    %3915 = vmatprep.subr.mxu0 0.0
    %3916 = vmatpush1.msra.mxu0 %v3863
    %3917 = vmatprep.subr.mxu0 0.0
    %3918 = vmatpush2.msra.mxu0 0.0
    %3919 = vmatprep.subr.mxu0 0.0
    %3920 = vmatpush2.msra.mxu0 0.0
    %3921 = vmatprep.subr.mxu0 0.0
    %3922 = vmatpush2.msra.mxu0 0.0
    %3923 = vmatprep.subr.mxu0 0.0
    %3924 = vmatpush2.msra.mxu0 0.0
    %3925 = vmatprep.subr.mxu0 0.0
    %3926 = vmatpush2.msra.mxu0 0.0
    %3927 = vmatprep.subr.mxu0 0.0
    %3928 = vmatpush2.msra.mxu0 0.0
    %3929 = vmatprep.subr.mxu0 0.0
    %3930 = vmatpush2.msra.mxu0 0.0
    %3931 = vmatprep.subr.mxu0 0.0
    %3932 = vmatpush2.msra.mxu0 0.0
    %3933 = vmatprep.subr.mxu0 0.0
    %3934 = vmatpush2.msra.mxu0 0.0
    %3935 = vmatprep.subr.mxu0 0.0
    %3936 = vmatpush2.msra.mxu0 0.0
    %3937 = vmatprep.subr.mxu0 0.0
    %3938 = vmatpush2.msra.mxu0 0.0
    %3939 = vmatprep.subr.mxu0 0.0
    %3940 = vmatpush2.msra.mxu0 0.0
    %3941 = vmatprep.subr.mxu0 0.0
    %3942 = vmatpush2.msra.mxu0 0.0
    %3943 = vmatprep.subr.mxu0 0.0
    %3944 = vmatpush2.msra.mxu0 0.0
    %3945 = vmatprep.subr.mxu0 0.0
    %3946 = vmatpush2.msra.mxu0 0.0
    %3947 = vmatprep.subr.mxu0 0.0
    %3948 = vmatpush2.msra.mxu0 0.0
    %3949 = vmatprep.mubr.f32.mxu0 0.0
    %3950 = vmatmul.mubr.f32.gmra.mxu0 %v3880
    %v3951 = vpop.f32.mrf.mxu0
    %v3952 = vadd.f32 %v3876, %v3951
    %v3953 = vpop.f32.mrf.mxu0
    %3954 = vmatprep.mubr.f32.mxu0 0.0
    %3955 = vmatmul.mubr.f32.gmra.mxu0 %v3883
    %v3956 = vpop.f32.mrf.mxu0
    %v3957 = vadd.f32 %v3876, %v3956
    %v3958 = vpop.f32.mrf.mxu0
    %3959 = vdwg.mxu0
    %v3960 = vadd.f32 %v3767, %v3952
    %v3961 = vadd.f32 %v3768, %v3957
    %v3962 = vld [vmem:[#allocation26] sm:$0x1]
    %v3963 = vld [vmem:[#allocation28] sm:$0x1]
    %v3964 = vsel %vm301, %v3960, 0.0
    %3965 = vadd.xlane.f32.xlu0 %v3964
    %v3966 = vpop.xlane.xlu0 %3965
    %v3967 = vsel %vm301, %v3961, 0.0
    %3968 = vadd.xlane.f32.xlu0 %v3967
    %v3969 = vpop.xlane.xlu0 %3968
    %v3970 = vmul.f32 %v3966, %v1914
    %v3971 = vmul.f32 %v3969, %v1914
    %v3972 = vsub.f32 %v3960, %v3970
    %v3973 = vsub.f32 %v3961, %v3971
    %v3974 = vmul.f32 %v3972, %v3972
    %v3975 = vmul.f32 %v3973, %v3973
    %v3976 = vsel %vm301, %v3974, 0.0
    %3977 = vadd.xlane.f32.xlu0 %v3976
    %v3978 = vpop.xlane.xlu0 %3977
    %v3979 = vsel %vm301, %v3975, 0.0
    %3980 = vadd.xlane.f32.xlu0 %v3979
    %v3981 = vpop.xlane.xlu0 %3980
    %v3982 = vmul.f32 %v3978, 0.032258064
    %v3983 = vmul.f32 %v3981, 0.032258064
    %v3984 = vrsqrt.pop %v3982
    %v3985 = vmul.f32 %v3982, %v3984
    %vm3986 = vcmp.eq.f32.partialorder %v3982, inf
    %v3987 = vsel %vm3986, %v3982, %v3985
    %vm3988 = vcmp.eq.f32.partialorder %v3982, 0.0
    %v3989 = vand.u32 %v3982, 2147483648
    %v3990 = vsel %vm3988, %v3989, %v3987
    %v3991 = vrsqrt.pop %v3983
    %v3992 = vmul.f32 %v3983, %v3991
    %vm3993 = vcmp.eq.f32.partialorder %v3983, inf
    %v3994 = vsel %vm3993, %v3983, %v3992
    %vm3995 = vcmp.eq.f32.partialorder %v3983, 0.0
    %v3996 = vand.u32 %v3983, 2147483648
    %v3997 = vsel %vm3995, %v3996, %v3994
    %v3998 = vadd.f32 %v3990, 1e-06
    %v3999 = vadd.f32 %v3997, 1e-06
    %v4000 = vrcp.pop %v3998
    %v4001 = vrcp.pop %v3999
    %v4003 = vlaneseq
    %v4004 = vshrl.u32 %v4003, 7
    %v4005 = vsub.s32 0, %v4004
    %v4006 = vrot.slane %v3962, %v4005
    %v4008 = vmul.f32 %v4006, %v3972
    %v4009 = vmul.f32 %v4006, %v3973
    %v4010 = vmul.f32 %v4008, %v4000
    %v4011 = vmul.f32 %v4009, %v4001
    %v4013 = vlaneseq
    %v4014 = vshrl.u32 %v4013, 7
    %v4015 = vsub.s32 0, %v4014
    %v4016 = vrot.slane %v3963, %v4015
    %v4018 = vadd.f32 %v4010, %v4016
    %v4019 = vadd.f32 %v4011, %v4016
    %4020 = vst.msk [vmem:[#allocation29] sm:$0xff] %vm301, %v4018
    %4021 = vst.msk [vmem:[#allocation29 + $0x8] sm:$0xff] %vm301, %v4019
    // Predicated region
    $region166: #{sga_forward.1} parent=1 // pred_check
      _
    $region167: #{sga_forward.1} parent=1 // pred_check_branch
      %4023 = sbr.rel (0) target = $region169
    $region168: #{sga_forward.1} parent=1 // pred_region
      %s4025 = ssub.s32 256, 256
      %4026 = vsyncadd [#allocation4], %s4025
      %s4027 = sshll.u32 [#allocation29], 4
      %s4028 = int_to_ptr.vmem [resolvable:$true] %s4027
      %4033 = dma.vmem_to_hbm [thread:$0]  %s4028, 256, %s24, [#allocation4], 128, 128, 8
    $region169: #{sga_forward.1} parent=1 // pred_fallthru
      _
    // Predicated region
    $region170: #{sga_forward.1} parent=1 // pred_check
      _
    $region171: #{sga_forward.1} parent=1 // pred_check_branch
      %4035 = sbr.rel (0) target = $region173
    $region172: #{sga_forward.1} parent=1 // pred_region
      _
    $region173: #{sga_forward.1} parent=1 // pred_fallthru
      _
    // Predicated region
    $region174: #{sga_forward.1} parent=1 // pred_check
      _
    $region175: #{sga_forward.1} parent=1 // pred_check_branch
      %4037 = sbr.rel (0) target = $region177
    $region176: #{sga_forward.1} parent=1 // pred_region
      %4038 = dma.done [#allocation4], 256
    $region177: #{sga_forward.1} parent=1 // pred_fallthru
      _
    // Predicated region
    $region178: #{sga_forward.1} parent=1 // pred_check
      _
    $region179: #{sga_forward.1} parent=1 // pred_check_branch
      %4040 = sbr.rel (0) target = $region181
    $region180: #{sga_forward.1} parent=1 // pred_region
      _
    $region181: #{sga_forward.1} parent=1 // pred_fallthru
      _
    %4041 = vsyncpa [#allocation3], 1
    %4042 = vsyncpa [#allocation6], 1
    %4043 = vsyncpa [#allocation9], 1
    %4044 = vsyncpa [#allocation12], 1
    %4045 = vsyncpa [#allocation15], 1
    %4046 = vsyncpa [#allocation18], 1
    %4047 = vsyncpa [#allocation21], 1
    %4048 = vsyncpa [#allocation24], 1
    %4049 = vsyncpa [#allocation27], 1
    %4050 = vsyncpa [#allocation4], 1

</llo_original>
